<compile_context>
chip_gen: v6e
topology: v6e:2x2x1
jax: 0.10.0
libtpu: 0.0.40
codegen_flags: <defaults>
</compile_context>

<pallas_src>
import functools

import jax
import jax.numpy as jnp
from jax.experimental import pallas as pl
from jax.experimental.pallas import tpu as pltpu


# ----------------------------- fused kernel --------------------------------

def _mrrd_kernel(r_ref, h_ref, g_ref, s_ref,          # inputs
                 cw_ref, dist_ref, compl_ref,         # outputs (accumulators)
                 done_sc,                             # VMEM scratch
                 *, length, d_min):
    i = pl.program_id(0)

    @pl.when(i == 0)
    def _init():
        cw_ref[...] = jnp.zeros_like(cw_ref)
        dist_ref[...] = jnp.full_like(dist_ref, jnp.inf)
        compl_ref[...] = jnp.zeros_like(compl_ref)
        done_sc[...] = jnp.zeros_like(done_sc)

    r = r_ref[...]                                    # (B, n) LLRs, resident
    h = h_ref[...]                                    # (m, n) parity checks, resident
    abs_r = jnp.abs(r)
    y = (r < 0.0).astype(jnp.float32)                 # hard decision of r

    B = r.shape[0]
    n = r.shape[1]

    not_done = done_sc[...] == 0.0                    # (1,1) width-level "early return" freeze

    # -------- inner `length` loop: permute -> decode -> inverse-permute -----
    rr = r
    Y = jnp.zeros_like(r)
    succ = jnp.zeros((B, 1), jnp.float32)
    inner_done = jnp.zeros((1, 1), jnp.bool_)         # batch-global `break` flag
    for j in range(length):                           # static, fully unrolled
        G = g_ref[j]                                  # (B, n, n) gather one-hots
        S = s_ref[j]                                  # (B, n, n) scatter (inverse) one-hots
        # rr_p[b, i] = rr[b, perm[b, i]]   (VPU broadcast-mul + lane reduce)
        rr_p = jnp.sum(G * rr[:, None, :], axis=2)
        # Stand-in inner decoder: sign decision + parity (syndrome) check.
        # TODO(synk): the real inner decoder (BP / min-sum) is supplied
        # externally to mRRD; this keeps its (rr, Y, success) contract.
        Y_p = (rr_p < 0.0).astype(jnp.float32)
        syn = jnp.sum(h[None, :, :] * Y_p[:, None, :], axis=2)    # (B, m)
        syn = syn - 2.0 * jnp.floor(syn * 0.5)                    # mod 2
        success = (jnp.sum(syn, axis=1, keepdims=True) == 0.0)
        success = success.astype(jnp.float32)                     # (B, 1)
        # Inverse permutation (scatter back).
        Y_u = jnp.sum(S * Y_p[:, None, :], axis=2)
        rr_u = jnp.sum(S * rr_p[:, None, :], axis=2)
        # Freeze state once every row succeeded (== the reference `break`).
        rr = jnp.where(inner_done, rr, rr_u)
        Y = jnp.where(inner_done, Y, Y_u)
        succ = jnp.where(inner_done, succ, success)
        inner_done = jnp.logical_or(
            inner_done, jnp.min(succ, axis=0, keepdims=True) >= 1.0)
    # Zero the rows whose decode failed (identity when all succeeded),
    # exactly as the reference `Y *= success_flags`.
    Y = Y * succ

    # -------- Lambda (correlation discrepancy) + running min codeword -------
    d1 = (y != Y).astype(jnp.float32)
    dist = jnp.sum(d1 * abs_r, axis=1, keepdims=True)              # (B, 1)
    take = jnp.logical_and(dist <= dist_ref[...], not_done)
    new_dist = jnp.where(take, dist, dist_ref[...])
    new_cw = jnp.where(take, Y, cw_ref[...])
    dist_ref[...] = new_dist
    cw_ref[...] = new_cw

    # -------- ML (early-quit) criterion, sort-free ---------------------------
    d1m = (y != new_cw)
    n_v = jnp.sum(d1m.astype(jnp.float32), axis=1, keepdims=True)
    delta = jnp.maximum(float(d_min) - n_v, 0.0)                   # (B, 1)
    prod = r * jnp.logical_not(d1m).astype(jnp.float32)
    work = jnp.where(prod == 0.0, jnp.inf, jnp.abs(prod))          # (B, n)
    lane = jax.lax.broadcasted_iota(jnp.int32, (B, n), 1).astype(jnp.float32)
    # GT = cumsum(sort(work))[delta] == sum of the (delta + 1) smallest
    # retained reliabilities; computed with d_min+1 min-extractions instead
    # of a sort (no TPU sort primitive needed).
    # TODO(synk): the reference's `sums[arange, delta]` indexing (delta + 1
    # terms) is reproduced verbatim even though it looks off-by-one.
    gt = jnp.zeros((B, 1), jnp.float32)
    for t in range(d_min + 1):                         # static, unrolled
        cur = jnp.min(work, axis=1, keepdims=True)                 # (B, 1)
        gt = gt + jnp.where(float(t) <= delta, cur, 0.0)
        hit = work == cur
        first = jnp.min(jnp.where(hit, lane, float(n)), axis=1, keepdims=True)
        work = jnp.where(lane == first, jnp.inf, work)             # drop one occurrence
    # Batch-global `if delta.sum() == 0` of the reference, without host sync.
    all_delta_zero = jnp.sum(delta, axis=0, keepdims=True) == 0.0  # (1, 1)
    GT = jnp.where(all_delta_zero, 0.0, gt)                        # (B, 1)
    ml_flags = (new_dist <= GT).astype(jnp.float32)                # (B, 1)

    compl_ref[...] = compl_ref[...] + jnp.where(not_done, ml_flags, 0.0)
    all_ml = jnp.min(ml_flags, axis=0, keepdims=True) >= 1.0       # (1, 1)
    done_sc[...] = jnp.maximum(done_sc[...], jnp.where(all_ml, 1.0, 0.0))


# ----------------------------- Pallas wrapper -------------------------------

def mrrd_forward(r, H, shifts, *, width, length, d_min):
    """Fused mRRD forward. Returns (minCodeword, minDist, complexity)."""
    B, n = r.shape
    m = H.shape[0]
    # One-hot gather / scatter matrices for the per-row cyclic-shift
    # permutations, built once per call (fused under jit, tiny).
    base = jnp.arange(n, dtype=jnp.int32)
    s_flat = shifts.reshape(width * length, B)                     # (T, B)
    perm = (base[None, None, :] + s_flat[:, :, None]) % n          # perm[t,b,i]
    G = (perm[:, :, :, None] == base[None, None, None, :]).astype(jnp.float32)
    S = jnp.swapaxes(G, -1, -2)

    kernel = functools.partial(_mrrd_kernel, length=length, d_min=d_min)
    out_shape = (
        jax.ShapeDtypeStruct((B, n), jnp.float32),   # minCodeword
        jax.ShapeDtypeStruct((B, 1), jnp.float32),   # minDist
        jax.ShapeDtypeStruct((B, 1), jnp.float32),   # complexity
    )
    grid_spec = pltpu.PrefetchScalarGridSpec(
        num_scalar_prefetch=0,
        grid=(width,),
        in_specs=[
            pl.BlockSpec((B, n), lambda i: (0, 0)),                   # r (resident)
            pl.BlockSpec((m, n), lambda i: (0, 0)),                   # H (resident)
            pl.BlockSpec((length, B, n, n), lambda i: (i, 0, 0, 0)),  # gather mats
            pl.BlockSpec((length, B, n, n), lambda i: (i, 0, 0, 0)),  # scatter mats
        ],
        out_specs=(
            pl.BlockSpec((B, n), lambda i: (0, 0)),
            pl.BlockSpec((B, 1), lambda i: (0, 0)),
            pl.BlockSpec((B, 1), lambda i: (0, 0)),
        ),
        scratch_shapes=[pltpu.VMEM((1, 1), jnp.float32)],             # done flag
    )
    return pl.pallas_call(
        kernel,
        out_shape=out_shape,
        grid_spec=grid_spec,
        compiler_params=pltpu.CompilerParams(
            dimension_semantics=("arbitrary",)),
    )(r, H, G, S)


# ------------------------- pure-JAX reference (test) ------------------------

def mrrd_reference(r, H, shifts, *, width, length, d_min):
    """Direct port of the PyTorch mRRD.forward (host-level early exits)."""
    B, n = r.shape
    y = (r < 0.0).astype(jnp.float32)
    min_dist = jnp.full((B,), jnp.inf, jnp.float32)
    min_cw = jnp.zeros_like(r)
    complexity = jnp.zeros((B,), jnp.float32)
    rows = jnp.arange(B)[:, None]
    base = jnp.arange(n)
    for i in range(width):
        rr = r
        Y = jnp.zeros_like(r)
        succ = jnp.zeros((B,), jnp.float32)
        for j in range(length):
            s = shifts[i, j]
            perm = (base[None, :] + s[:, None]) % n
            rr = jnp.take_along_axis(rr, perm, axis=1)
            Yp = (rr < 0.0).astype(jnp.float32)                 # stand-in decoder
            syn = jnp.mod(Yp @ H.T, 2.0)
            succ = (jnp.sum(syn, axis=1) == 0.0).astype(jnp.float32)
            Y = jnp.zeros_like(rr).at[rows, perm].set(Yp)
            rr = jnp.zeros_like(rr).at[rows, perm].set(rr)
            if float(jnp.sum(succ)) == float(B):
                break
        Y = Y * succ[:, None]
        dist = jnp.sum((y != Y) * jnp.abs(r), axis=1)
        new_min = dist <= min_dist
        min_dist = jnp.where(new_min, dist, min_dist)
        min_cw = jnp.where(new_min[:, None], Y, min_cw)
        d1 = (y != min_cw)
        n_v = jnp.sum(d1, axis=1)
        delta = jnp.maximum(d_min - n_v, 0).astype(jnp.int32)
        prod = r * jnp.logical_not(d1)
        masked = jnp.where(prod == 0.0, jnp.inf, jnp.abs(prod))
        if float(jnp.sum(delta)) == 0.0:
            GT = jnp.zeros((B,), jnp.float32)
        else:
            sums = jnp.cumsum(jnp.sort(masked, axis=1), axis=1)
            GT = sums[jnp.arange(B), delta]
        ml_flags = min_dist <= GT
        complexity = complexity + ml_flags.astype(jnp.float32)
        if float(jnp.sum(ml_flags)) == float(B):
            return min_cw, min_dist, complexity
    return min_cw, min_dist, complexity


# ------------------------------- mRRD module ---------------------------------

class MRRDPallas:
    """JAX/Pallas port of the PyTorch mRRD forward pass (single fused kernel)."""

    def __init__(self, n, k, d_min, b_size, width, length, seed=0):
        self.codeLen = n
        self.k = k
        self.d_min = d_min
        self.batchSize = b_size
        self.width = width
        self.length = length
        self.checks = list(range(n))
        # Permutation group of a cyclic code == cyclic shifts (parameterized
        # by a per-row shift, so no index tables are materialized).
        # TODO(synk): the original loads a pickled permutation list from disk.
        # Deterministic synthetic parity-check matrix for the stand-in decoder.
        self.H = jax.random.bernoulli(
            jax.random.PRNGKey(1), 0.5, (n - k, n)).astype(jnp.float32)
        self.complexity = jnp.zeros((b_size,), jnp.float32)
        self.minDist = jnp.full((b_size,), jnp.inf, jnp.float32)
        self.key = jax.random.PRNGKey(seed)
        self._calls = 0
        self._last_shifts = None
        self._fwd = jax.jit(functools.partial(
            mrrd_forward, width=width, length=length, d_min=d_min))

    def _draw_shifts(self):
        key = jax.random.fold_in(self.key, self._calls)
        self._calls += 1
        return jax.random.randint(
            key, (self.width, self.length, self.batchSize), 0, self.codeLen,
            dtype=jnp.int32)

    def forward(self, r):
        shifts = self._draw_shifts()
        self._last_shifts = shifts
        cw, min_dist, complexity = self._fwd(r, self.H, shifts)
        self.minDist = min_dist[:, 0]
        self.complexity = complexity[:, 0]
        # (original prints a complexity statistic here; omitted)
        return cw


# ---------------------------------- main -------------------------------------

if __name__ == "__main__":
    B, n, k, d_min = 8, 32, 16, 4
    width, length = 2, 3

    mod = MRRDPallas(n, k, d_min, B, width, length, seed=0)

    key = jax.random.PRNGKey(0)
    r = jax.random.normal(key, (B, n), dtype=jnp.float32)
    # Make row 0 decode successfully (all-positive -> all-zero codeword) so
    # both the success and failure paths of the stand-in decoder are hit.
    r = r.at[0].set(jnp.abs(r[0]))

    cw = jax.block_until_ready(mod.forward(r))
    ref_cw, ref_dist, ref_cx = mrrd_reference(
        r, mod.H, mod._last_shifts, width=width, length=length, d_min=d_min)
    assert cw.shape == r.shape and cw.dtype == jnp.float32
    assert jnp.allclose(cw, ref_cw, atol=1e-5), "codeword mismatch"
    assert jnp.allclose(mod.minDist, ref_dist, rtol=1e-4, atol=1e-4), "dist mismatch"
    assert jnp.allclose(mod.complexity, ref_cx), "complexity mismatch"

    # All-positive batch: exercises BOTH batch-global early exits (inner-loop
    # break and width-loop early return) via the masked/frozen in-kernel state.
    r2 = jnp.abs(r)
    cw2 = jax.block_until_ready(mod.forward(r2))
    ref_cw2, ref_dist2, ref_cx2 = mrrd_reference(
        r2, mod.H, mod._last_shifts, width=width, length=length, d_min=d_min)
    assert jnp.allclose(cw2, ref_cw2, atol=1e-5), "codeword mismatch (early-exit case)"
    assert jnp.allclose(mod.minDist, ref_dist2, rtol=1e-4, atol=1e-4)
    assert jnp.allclose(mod.complexity, ref_cx2)

    print("KERNEL_OK")
</pallas_src>

<mosaic_0001>
module attributes {stable_mosaic.version = 11 : i64} {
  func.func @_mrrd_kernel(%arg0: i32, %arg1: memref<8x32xf32, #tpu.memory_space<vmem>>, %arg2: memref<16x32xf32, #tpu.memory_space<vmem>>, %arg3: memref<3x8x32x32xf32, #tpu.memory_space<vmem>>, %arg4: memref<3x8x32x32xf32, #tpu.memory_space<vmem>>, %arg5: memref<8x32xf32, #tpu.memory_space<vmem>>, %arg6: memref<8x1xf32, #tpu.memory_space<vmem>>, %arg7: memref<8x1xf32, #tpu.memory_space<vmem>>, %arg8: memref<1x1xf32, #tpu.memory_space<vmem>>) attributes {dimension_semantics = [#tpu.dimension_semantics<arbitrary>], iteration_bounds = array<i64: 2>, scalar_prefetch = 0 : i64, scratch_operands = 1 : i64, tpu.core_type = #tpu.core_type<tc>, window_params = [{pipeline_mode = #tpu.pipeline_mode<synchronous>, transform_indices = @transform_0, window_bounds = array<i64: 8, 32>}, {pipeline_mode = #tpu.pipeline_mode<synchronous>, transform_indices = @transform_1, window_bounds = array<i64: 16, 32>}, {transform_indices = @transform_2, window_bounds = array<i64: 3, 8, 32, 32>}, {transform_indices = @transform_3, window_bounds = array<i64: 3, 8, 32, 32>}, {pipeline_mode = #tpu.pipeline_mode<synchronous>, transform_indices = @transform_4, window_bounds = array<i64: 8, 32>}, {pipeline_mode = #tpu.pipeline_mode<synchronous>, transform_indices = @transform_5, window_bounds = array<i64: 8, 1>}, {pipeline_mode = #tpu.pipeline_mode<synchronous>, transform_indices = @transform_6, window_bounds = array<i64: 8, 1>}]} {
    %c0_i32 = arith.constant 0 : i32
    %0 = arith.cmpi eq, %arg0, %c0_i32 : i32
    %1 = arith.extui %0 : i1 to i32
    %c0_i32_0 = arith.constant 0 : i32
    %2 = arith.cmpi ne, %1, %c0_i32_0 : i32
    scf.if %2 {
      %cst_122 = arith.constant 0.000000e+00 : f32
      %304 = vector.broadcast %cst_122 : f32 to vector<8x32xf32>
      %c0_123 = arith.constant 0 : index
      %c0_124 = arith.constant 0 : index
      %305 = vector.load %arg5[%c0_123, %c0_124] : memref<8x32xf32, #tpu.memory_space<vmem>>, vector<8x32xf32>
      tpu.vector_store %arg5[%c0_123, %c0_124], %304 {strides = array<i32>} : memref<8x32xf32, #tpu.memory_space<vmem>>, vector<8x32xf32>,
      %cst_125 = arith.constant 0x7F800000 : f32
      %306 = vector.broadcast %cst_125 : f32 to vector<8x1xf32>
      %c0_126 = arith.constant 0 : index
      %c0_127 = arith.constant 0 : index
      %307 = vector.load %arg6[%c0_126, %c0_127] : memref<8x1xf32, #tpu.memory_space<vmem>>, vector<8x1xf32>
      tpu.vector_store %arg6[%c0_126, %c0_127], %306 {strides = array<i32>} : memref<8x1xf32, #tpu.memory_space<vmem>>, vector<8x1xf32>,
      %cst_128 = arith.constant 0.000000e+00 : f32
      %308 = vector.broadcast %cst_128 : f32 to vector<8x1xf32>
      %c0_129 = arith.constant 0 : index
      %c0_130 = arith.constant 0 : index
      %309 = vector.load %arg7[%c0_129, %c0_130] : memref<8x1xf32, #tpu.memory_space<vmem>>, vector<8x1xf32>
      tpu.vector_store %arg7[%c0_129, %c0_130], %308 {strides = array<i32>} : memref<8x1xf32, #tpu.memory_space<vmem>>, vector<8x1xf32>,
      %cst_131 = arith.constant 0.000000e+00 : f32
      %310 = vector.broadcast %cst_131 : f32 to vector<1x1xf32>
      %c0_132 = arith.constant 0 : index
      %c0_133 = arith.constant 0 : index
      %311 = vector.load %arg8[%c0_132, %c0_133] : memref<1x1xf32, #tpu.memory_space<vmem>>, vector<1x1xf32>
      tpu.vector_store %arg8[%c0_132, %c0_133], %310 {strides = array<i32>} : memref<1x1xf32, #tpu.memory_space<vmem>>, vector<1x1xf32>,
    } else {
    }
    %c0 = arith.constant 0 : index
    %c0_1 = arith.constant 0 : index
    %3 = vector.load %arg1[%c0, %c0_1] : memref<8x32xf32, #tpu.memory_space<vmem>>, vector<8x32xf32>
    %c0_2 = arith.constant 0 : index
    %c0_3 = arith.constant 0 : index
    %4 = vector.load %arg2[%c0_2, %c0_3] : memref<16x32xf32, #tpu.memory_space<vmem>>, vector<16x32xf32>
    %5 = math.absf %3 : vector<8x32xf32>
    %cst = arith.constant 0.000000e+00 : f32
    %6 = vector.broadcast %cst : f32 to vector<8x32xf32>
    %7 = arith.cmpf olt, %3, %6 : vector<8x32xf32>
    %8 = arith.extui %7 : vector<8x32xi1> to vector<8x32xi32>
    %9 = arith.sitofp %8 : vector<8x32xi32> to vector<8x32xf32>
    %c0_4 = arith.constant 0 : index
    %c0_5 = arith.constant 0 : index
    %10 = vector.load %arg8[%c0_4, %c0_5] : memref<1x1xf32, #tpu.memory_space<vmem>>, vector<1x1xf32>
    %cst_6 = arith.constant 0.000000e+00 : f32
    %11 = vector.broadcast %cst_6 : f32 to vector<1x1xf32>
    %12 = arith.cmpf oeq, %10, %11 : vector<1x1xf32>
    %cst_7 = arith.constant 0.000000e+00 : f32
    %13 = vector.broadcast %cst_7 : f32 to vector<8x32xf32>
    %cst_8 = arith.constant 0.000000e+00 : f32
    %14 = vector.broadcast %cst_8 : f32 to vector<8x1xf32>
    %false = arith.constant false
    %15 = vector.broadcast %false : i1 to vector<1x1xi1>
    %c0_9 = arith.constant 0 : index
    %c0_10 = arith.constant 0 : index
    %c0_11 = arith.constant 0 : index
    %c0_12 = arith.constant 0 : index
    %16 = vector.load %arg3[%c0_9, %c0_10, %c0_11, %c0_12] : memref<3x8x32x32xf32, #tpu.memory_space<vmem>>, vector<1x8x32x32xf32>
    %17 = vector.shape_cast %16 : vector<1x8x32x32xf32> to vector<8x32x32xf32>
    %c0_13 = arith.constant 0 : index
    %c0_14 = arith.constant 0 : index
    %c0_15 = arith.constant 0 : index
    %c0_16 = arith.constant 0 : index
    %18 = vector.load %arg4[%c0_13, %c0_14, %c0_15, %c0_16] : memref<3x8x32x32xf32, #tpu.memory_space<vmem>>, vector<1x8x32x32xf32>
    %19 = vector.shape_cast %18 : vector<1x8x32x32xf32> to vector<8x32x32xf32>
    %20 = vector.shape_cast %3 : vector<8x32xf32> to vector<8x1x32xf32>
    %21 = vector.broadcast %20 : vector<8x1x32xf32> to vector<8x32x32xf32>
    %22 = arith.mulf %17, %21 : vector<8x32x32xf32>
    %cst_17 = arith.constant dense<0.000000e+00> : vector<8x32xf32>
    %23 = vector.multi_reduction <add>, %22, %cst_17 [2] : vector<8x32x32xf32> to vector<8x32xf32>
    %cst_18 = arith.constant 0.000000e+00 : f32
    %24 = vector.broadcast %cst_18 : f32 to vector<8x32xf32>
    %25 = arith.cmpf olt, %23, %24 : vector<8x32xf32>
    %26 = arith.extui %25 : vector<8x32xi1> to vector<8x32xi32>
    %27 = arith.sitofp %26 : vector<8x32xi32> to vector<8x32xf32>
    %28 = vector.shape_cast %4 : vector<16x32xf32> to vector<1x16x32xf32>
    %29 = vector.shape_cast %27 : vector<8x32xf32> to vector<8x1x32xf32>
    %30 = vector.broadcast %28 : vector<1x16x32xf32> to vector<8x16x32xf32>
    %31 = vector.broadcast %29 : vector<8x1x32xf32> to vector<8x16x32xf32>
    %32 = arith.mulf %30, %31 : vector<8x16x32xf32>
    %cst_19 = arith.constant dense<0.000000e+00> : vector<8x16xf32>
    %33 = vector.multi_reduction <add>, %32, %cst_19 [2] : vector<8x16x32xf32> to vector<8x16xf32>
    %cst_20 = arith.constant 5.000000e-01 : f32
    %34 = vector.broadcast %cst_20 : f32 to vector<8x16xf32>
    %35 = arith.mulf %33, %34 : vector<8x16xf32>
    %36 = math.floor %35 : vector<8x16xf32>
    %cst_21 = arith.constant 2.000000e+00 : f32
    %37 = vector.broadcast %cst_21 : f32 to vector<8x16xf32>
    %38 = arith.mulf %37, %36 : vector<8x16xf32>
    %39 = arith.subf %33, %38 : vector<8x16xf32>
    %cst_22 = arith.constant dense<0.000000e+00> : vector<8xf32>
    %40 = vector.multi_reduction <add>, %39, %cst_22 [1] : vector<8x16xf32> to vector<8xf32>
    %41 = vector.shape_cast %40 : vector<8xf32> to vector<8x1xf32>
    %cst_23 = arith.constant 0.000000e+00 : f32
    %42 = vector.broadcast %cst_23 : f32 to vector<8x1xf32>
    %43 = arith.cmpf oeq, %41, %42 : vector<8x1xf32>
    %44 = arith.extui %43 : vector<8x1xi1> to vector<8x1xi32>
    %45 = arith.sitofp %44 : vector<8x1xi32> to vector<8x1xf32>
    %46 = vector.shape_cast %27 : vector<8x32xf32> to vector<8x1x32xf32>
    %47 = vector.broadcast %46 : vector<8x1x32xf32> to vector<8x32x32xf32>
    %48 = arith.mulf %19, %47 : vector<8x32x32xf32>
    %cst_24 = arith.constant dense<0.000000e+00> : vector<8x32xf32>
    %49 = vector.multi_reduction <add>, %48, %cst_24 [2] : vector<8x32x32xf32> to vector<8x32xf32>
    %50 = vector.shape_cast %23 : vector<8x32xf32> to vector<8x1x32xf32>
    %51 = vector.broadcast %50 : vector<8x1x32xf32> to vector<8x32x32xf32>
    %52 = arith.mulf %19, %51 : vector<8x32x32xf32>
    %cst_25 = arith.constant dense<0.000000e+00> : vector<8x32xf32>
    %53 = vector.multi_reduction <add>, %52, %cst_25 [2] : vector<8x32x32xf32> to vector<8x32xf32>
    %54 = vector.shape_cast %15 : vector<1x1xi1> to vector<1x1xi1>
    %55 = vector.broadcast %54 : vector<1x1xi1> to vector<8x32xi1>
    %56 = arith.select %55, %3, %53 : vector<8x32xi1>, vector<8x32xf32>
    %57 = vector.shape_cast %15 : vector<1x1xi1> to vector<1x1xi1>
    %58 = vector.broadcast %57 : vector<1x1xi1> to vector<8x32xi1>
    %59 = arith.select %58, %13, %49 : vector<8x32xi1>, vector<8x32xf32>
    %60 = vector.shape_cast %15 : vector<1x1xi1> to vector<1x1xi1>
    %61 = vector.broadcast %60 : vector<1x1xi1> to vector<8x1xi1>
    %62 = arith.select %61, %14, %45 : vector<8x1xi1>, vector<8x1xf32>
    %cst_26 = arith.constant dense<0x7F800000> : vector<1xf32>
    %63 = vector.multi_reduction <minimumf>, %62, %cst_26 [0] : vector<8x1xf32> to vector<1xf32>
    %64 = vector.shape_cast %63 : vector<1xf32> to vector<1x1xf32>
    %cst_27 = arith.constant 1.000000e+00 : f32
    %65 = vector.broadcast %cst_27 : f32 to vector<1x1xf32>
    %66 = arith.cmpf oge, %64, %65 : vector<1x1xf32>
    %67 = arith.ori %15, %66 : vector<1x1xi1>
    %c1 = arith.constant 1 : index
    %c0_28 = arith.constant 0 : index
    %c0_29 = arith.constant 0 : index
    %c0_30 = arith.constant 0 : index
    %68 = vector.load %arg3[%c1, %c0_28, %c0_29, %c0_30] : memref<3x8x32x32xf32, #tpu.memory_space<vmem>>, vector<1x8x32x32xf32>
    %69 = vector.shape_cast %68 : vector<1x8x32x32xf32> to vector<8x32x32xf32>
    %c1_31 = arith.constant 1 : index
    %c0_32 = arith.constant 0 : index
    %c0_33 = arith.constant 0 : index
    %c0_34 = arith.constant 0 : index
    %70 = vector.load %arg4[%c1_31, %c0_32, %c0_33, %c0_34] : memref<3x8x32x32xf32, #tpu.memory_space<vmem>>, vector<1x8x32x32xf32>
    %71 = vector.shape_cast %70 : vector<1x8x32x32xf32> to vector<8x32x32xf32>
    %72 = vector.shape_cast %56 : vector<8x32xf32> to vector<8x1x32xf32>
    %73 = vector.broadcast %72 : vector<8x1x32xf32> to vector<8x32x32xf32>
    %74 = arith.mulf %69, %73 : vector<8x32x32xf32>
    %cst_35 = arith.constant dense<0.000000e+00> : vector<8x32xf32>
    %75 = vector.multi_reduction <add>, %74, %cst_35 [2] : vector<8x32x32xf32> to vector<8x32xf32>
    %cst_36 = arith.constant 0.000000e+00 : f32
    %76 = vector.broadcast %cst_36 : f32 to vector<8x32xf32>
    %77 = arith.cmpf olt, %75, %76 : vector<8x32xf32>
    %78 = arith.extui %77 : vector<8x32xi1> to vector<8x32xi32>
    %79 = arith.sitofp %78 : vector<8x32xi32> to vector<8x32xf32>
    %80 = vector.shape_cast %4 : vector<16x32xf32> to vector<1x16x32xf32>
    %81 = vector.shape_cast %79 : vector<8x32xf32> to vector<8x1x32xf32>
    %82 = vector.broadcast %80 : vector<1x16x32xf32> to vector<8x16x32xf32>
    %83 = vector.broadcast %81 : vector<8x1x32xf32> to vector<8x16x32xf32>
    %84 = arith.mulf %82, %83 : vector<8x16x32xf32>
    %cst_37 = arith.constant dense<0.000000e+00> : vector<8x16xf32>
    %85 = vector.multi_reduction <add>, %84, %cst_37 [2] : vector<8x16x32xf32> to vector<8x16xf32>
    %cst_38 = arith.constant 5.000000e-01 : f32
    %86 = vector.broadcast %cst_38 : f32 to vector<8x16xf32>
    %87 = arith.mulf %85, %86 : vector<8x16xf32>
    %88 = math.floor %87 : vector<8x16xf32>
    %cst_39 = arith.constant 2.000000e+00 : f32
    %89 = vector.broadcast %cst_39 : f32 to vector<8x16xf32>
    %90 = arith.mulf %89, %88 : vector<8x16xf32>
    %91 = arith.subf %85, %90 : vector<8x16xf32>
    %cst_40 = arith.constant dense<0.000000e+00> : vector<8xf32>
    %92 = vector.multi_reduction <add>, %91, %cst_40 [1] : vector<8x16xf32> to vector<8xf32>
    %93 = vector.shape_cast %92 : vector<8xf32> to vector<8x1xf32>
    %cst_41 = arith.constant 0.000000e+00 : f32
    %94 = vector.broadcast %cst_41 : f32 to vector<8x1xf32>
    %95 = arith.cmpf oeq, %93, %94 : vector<8x1xf32>
    %96 = arith.extui %95 : vector<8x1xi1> to vector<8x1xi32>
    %97 = arith.sitofp %96 : vector<8x1xi32> to vector<8x1xf32>
    %98 = vector.shape_cast %79 : vector<8x32xf32> to vector<8x1x32xf32>
    %99 = vector.broadcast %98 : vector<8x1x32xf32> to vector<8x32x32xf32>
    %100 = arith.mulf %71, %99 : vector<8x32x32xf32>
    %cst_42 = arith.constant dense<0.000000e+00> : vector<8x32xf32>
    %101 = vector.multi_reduction <add>, %100, %cst_42 [2] : vector<8x32x32xf32> to vector<8x32xf32>
    %102 = vector.shape_cast %75 : vector<8x32xf32> to vector<8x1x32xf32>
    %103 = vector.broadcast %102 : vector<8x1x32xf32> to vector<8x32x32xf32>
    %104 = arith.mulf %71, %103 : vector<8x32x32xf32>
    %cst_43 = arith.constant dense<0.000000e+00> : vector<8x32xf32>
    %105 = vector.multi_reduction <add>, %104, %cst_43 [2] : vector<8x32x32xf32> to vector<8x32xf32>
    %106 = vector.shape_cast %67 : vector<1x1xi1> to vector<1x1xi1>
    %107 = vector.broadcast %106 : vector<1x1xi1> to vector<8x32xi1>
    %108 = arith.select %107, %56, %105 : vector<8x32xi1>, vector<8x32xf32>
    %109 = vector.shape_cast %67 : vector<1x1xi1> to vector<1x1xi1>
    %110 = vector.broadcast %109 : vector<1x1xi1> to vector<8x32xi1>
    %111 = arith.select %110, %59, %101 : vector<8x32xi1>, vector<8x32xf32>
    %112 = vector.shape_cast %67 : vector<1x1xi1> to vector<1x1xi1>
    %113 = vector.broadcast %112 : vector<1x1xi1> to vector<8x1xi1>
    %114 = arith.select %113, %62, %97 : vector<8x1xi1>, vector<8x1xf32>
    %cst_44 = arith.constant dense<0x7F800000> : vector<1xf32>
    %115 = vector.multi_reduction <minimumf>, %114, %cst_44 [0] : vector<8x1xf32> to vector<1xf32>
    %116 = vector.shape_cast %115 : vector<1xf32> to vector<1x1xf32>
    %cst_45 = arith.constant 1.000000e+00 : f32
    %117 = vector.broadcast %cst_45 : f32 to vector<1x1xf32>
    %118 = arith.cmpf oge, %116, %117 : vector<1x1xf32>
    %119 = arith.ori %67, %118 : vector<1x1xi1>
    %c2 = arith.constant 2 : index
    %c0_46 = arith.constant 0 : index
    %c0_47 = arith.constant 0 : index
    %c0_48 = arith.constant 0 : index
    %120 = vector.load %arg3[%c2, %c0_46, %c0_47, %c0_48] : memref<3x8x32x32xf32, #tpu.memory_space<vmem>>, vector<1x8x32x32xf32>
    %121 = vector.shape_cast %120 : vector<1x8x32x32xf32> to vector<8x32x32xf32>
    %c2_49 = arith.constant 2 : index
    %c0_50 = arith.constant 0 : index
    %c0_51 = arith.constant 0 : index
    %c0_52 = arith.constant 0 : index
    %122 = vector.load %arg4[%c2_49, %c0_50, %c0_51, %c0_52] : memref<3x8x32x32xf32, #tpu.memory_space<vmem>>, vector<1x8x32x32xf32>
    %123 = vector.shape_cast %122 : vector<1x8x32x32xf32> to vector<8x32x32xf32>
    %124 = vector.shape_cast %108 : vector<8x32xf32> to vector<8x1x32xf32>
    %125 = vector.broadcast %124 : vector<8x1x32xf32> to vector<8x32x32xf32>
    %126 = arith.mulf %121, %125 : vector<8x32x32xf32>
    %cst_53 = arith.constant dense<0.000000e+00> : vector<8x32xf32>
    %127 = vector.multi_reduction <add>, %126, %cst_53 [2] : vector<8x32x32xf32> to vector<8x32xf32>
    %cst_54 = arith.constant 0.000000e+00 : f32
    %128 = vector.broadcast %cst_54 : f32 to vector<8x32xf32>
    %129 = arith.cmpf olt, %127, %128 : vector<8x32xf32>
    %130 = arith.extui %129 : vector<8x32xi1> to vector<8x32xi32>
    %131 = arith.sitofp %130 : vector<8x32xi32> to vector<8x32xf32>
    %132 = vector.shape_cast %4 : vector<16x32xf32> to vector<1x16x32xf32>
    %133 = vector.shape_cast %131 : vector<8x32xf32> to vector<8x1x32xf32>
    %134 = vector.broadcast %132 : vector<1x16x32xf32> to vector<8x16x32xf32>
    %135 = vector.broadcast %133 : vector<8x1x32xf32> to vector<8x16x32xf32>
    %136 = arith.mulf %134, %135 : vector<8x16x32xf32>
    %cst_55 = arith.constant dense<0.000000e+00> : vector<8x16xf32>
    %137 = vector.multi_reduction <add>, %136, %cst_55 [2] : vector<8x16x32xf32> to vector<8x16xf32>
    %cst_56 = arith.constant 5.000000e-01 : f32
    %138 = vector.broadcast %cst_56 : f32 to vector<8x16xf32>
    %139 = arith.mulf %137, %138 : vector<8x16xf32>
    %140 = math.floor %139 : vector<8x16xf32>
    %cst_57 = arith.constant 2.000000e+00 : f32
    %141 = vector.broadcast %cst_57 : f32 to vector<8x16xf32>
    %142 = arith.mulf %141, %140 : vector<8x16xf32>
    %143 = arith.subf %137, %142 : vector<8x16xf32>
    %cst_58 = arith.constant dense<0.000000e+00> : vector<8xf32>
    %144 = vector.multi_reduction <add>, %143, %cst_58 [1] : vector<8x16xf32> to vector<8xf32>
    %145 = vector.shape_cast %144 : vector<8xf32> to vector<8x1xf32>
    %cst_59 = arith.constant 0.000000e+00 : f32
    %146 = vector.broadcast %cst_59 : f32 to vector<8x1xf32>
    %147 = arith.cmpf oeq, %145, %146 : vector<8x1xf32>
    %148 = arith.extui %147 : vector<8x1xi1> to vector<8x1xi32>
    %149 = arith.sitofp %148 : vector<8x1xi32> to vector<8x1xf32>
    %150 = vector.shape_cast %131 : vector<8x32xf32> to vector<8x1x32xf32>
    %151 = vector.broadcast %150 : vector<8x1x32xf32> to vector<8x32x32xf32>
    %152 = arith.mulf %123, %151 : vector<8x32x32xf32>
    %cst_60 = arith.constant dense<0.000000e+00> : vector<8x32xf32>
    %153 = vector.multi_reduction <add>, %152, %cst_60 [2] : vector<8x32x32xf32> to vector<8x32xf32>
    %154 = vector.shape_cast %119 : vector<1x1xi1> to vector<1x1xi1>
    %155 = vector.broadcast %154 : vector<1x1xi1> to vector<8x32xi1>
    %156 = arith.select %155, %111, %153 : vector<8x32xi1>, vector<8x32xf32>
    %157 = vector.shape_cast %119 : vector<1x1xi1> to vector<1x1xi1>
    %158 = vector.broadcast %157 : vector<1x1xi1> to vector<8x1xi1>
    %159 = arith.select %158, %114, %149 : vector<8x1xi1>, vector<8x1xf32>
    %160 = vector.broadcast %159 : vector<8x1xf32> to vector<8x32xf32>
    %161 = arith.mulf %156, %160 : vector<8x32xf32>
    %162 = arith.cmpf one, %9, %161 : vector<8x32xf32>
    %163 = arith.extui %162 : vector<8x32xi1> to vector<8x32xi32>
    %164 = arith.sitofp %163 : vector<8x32xi32> to vector<8x32xf32>
    %165 = arith.mulf %164, %5 : vector<8x32xf32>
    %cst_61 = arith.constant dense<0.000000e+00> : vector<8xf32>
    %166 = vector.multi_reduction <add>, %165, %cst_61 [1] : vector<8x32xf32> to vector<8xf32>
    %167 = vector.shape_cast %166 : vector<8xf32> to vector<8x1xf32>
    %c0_62 = arith.constant 0 : index
    %c0_63 = arith.constant 0 : index
    %168 = vector.load %arg6[%c0_62, %c0_63] : memref<8x1xf32, #tpu.memory_space<vmem>>, vector<8x1xf32>
    %169 = arith.cmpf ole, %167, %168 : vector<8x1xf32>
    %170 = vector.broadcast %12 : vector<1x1xi1> to vector<8x1xi1>
    %171 = arith.andi %169, %170 : vector<8x1xi1>
    %c0_64 = arith.constant 0 : index
    %c0_65 = arith.constant 0 : index
    %172 = vector.load %arg6[%c0_64, %c0_65] : memref<8x1xf32, #tpu.memory_space<vmem>>, vector<8x1xf32>
    %173 = arith.select %171, %167, %172 : vector<8x1xi1>, vector<8x1xf32>
    %c0_66 = arith.constant 0 : index
    %c0_67 = arith.constant 0 : index
    %174 = vector.load %arg5[%c0_66, %c0_67] : memref<8x32xf32, #tpu.memory_space<vmem>>, vector<8x32xf32>
    %175 = vector.shape_cast %171 : vector<8x1xi1> to vector<8x1xi1>
    %176 = vector.broadcast %175 : vector<8x1xi1> to vector<8x32xi1>
    %177 = arith.select %176, %161, %174 : vector<8x32xi1>, vector<8x32xf32>
    %c0_68 = arith.constant 0 : index
    %c0_69 = arith.constant 0 : index
    %178 = vector.load %arg6[%c0_68, %c0_69] : memref<8x1xf32, #tpu.memory_space<vmem>>, vector<8x1xf32>
    tpu.vector_store %arg6[%c0_68, %c0_69], %173 {strides = array<i32>} : memref<8x1xf32, #tpu.memory_space<vmem>>, vector<8x1xf32>,
    %c0_70 = arith.constant 0 : index
    %c0_71 = arith.constant 0 : index
    %179 = vector.load %arg5[%c0_70, %c0_71] : memref<8x32xf32, #tpu.memory_space<vmem>>, vector<8x32xf32>
    tpu.vector_store %arg5[%c0_70, %c0_71], %177 {strides = array<i32>} : memref<8x32xf32, #tpu.memory_space<vmem>>, vector<8x32xf32>,
    %180 = arith.cmpf one, %9, %177 : vector<8x32xf32>
    %181 = arith.extui %180 : vector<8x32xi1> to vector<8x32xi32>
    %182 = arith.sitofp %181 : vector<8x32xi32> to vector<8x32xf32>
    %cst_72 = arith.constant dense<0.000000e+00> : vector<8xf32>
    %183 = vector.multi_reduction <add>, %182, %cst_72 [1] : vector<8x32xf32> to vector<8xf32>
    %184 = vector.shape_cast %183 : vector<8xf32> to vector<8x1xf32>
    %cst_73 = arith.constant 4.000000e+00 : f32
    %185 = vector.broadcast %cst_73 : f32 to vector<8x1xf32>
    %186 = arith.subf %185, %184 : vector<8x1xf32>
    %cst_74 = arith.constant 0.000000e+00 : f32
    %187 = vector.broadcast %cst_74 : f32 to vector<8x1xf32>
    %188 = arith.maximumf %186, %187 : vector<8x1xf32>
    %cst_75 = arith.constant dense<true> : vector<8x32xi1>
    %189 = arith.xori %180, %cst_75 : vector<8x32xi1>
    %190 = arith.extui %189 : vector<8x32xi1> to vector<8x32xi32>
    %191 = arith.sitofp %190 : vector<8x32xi32> to vector<8x32xf32>
    %192 = arith.mulf %3, %191 : vector<8x32xf32>
    %cst_76 = arith.constant 0.000000e+00 : f32
    %193 = vector.broadcast %cst_76 : f32 to vector<8x32xf32>
    %194 = arith.cmpf oeq, %192, %193 : vector<8x32xf32>
    %195 = math.absf %192 : vector<8x32xf32>
    %cst_77 = arith.constant 0x7F800000 : f32
    %196 = vector.broadcast %cst_77 : f32 to vector<8x32xf32>
    %197 = arith.select %194, %196, %195 : vector<8x32xi1>, vector<8x32xf32>
    %198 = tpu.iota {dimensions = array<i32: 1>} : vector<8x32xi32>
    %199 = arith.sitofp %198 : vector<8x32xi32> to vector<8x32xf32>
    %cst_78 = arith.constant 0.000000e+00 : f32
    %200 = vector.broadcast %cst_78 : f32 to vector<8x1xf32>
    %cst_79 = arith.constant dense<0x7F800000> : vector<8xf32>
    %201 = vector.multi_reduction <minimumf>, %197, %cst_79 [1] : vector<8x32xf32> to vector<8xf32>
    %202 = vector.shape_cast %201 : vector<8xf32> to vector<8x1xf32>
    %cst_80 = arith.constant 0.000000e+00 : f32
    %203 = vector.broadcast %cst_80 : f32 to vector<8x1xf32>
    %204 = arith.cmpf oge, %188, %203 : vector<8x1xf32>
    %cst_81 = arith.constant 0.000000e+00 : f32
    %205 = vector.broadcast %cst_81 : f32 to vector<8x1xf32>
    %206 = arith.select %204, %202, %205 : vector<8x1xi1>, vector<8x1xf32>
    %207 = arith.addf %200, %206 : vector<8x1xf32>
    %208 = vector.broadcast %202 : vector<8x1xf32> to vector<8x32xf32>
    %209 = arith.cmpf oeq, %197, %208 : vector<8x32xf32>
    %cst_82 = arith.constant 3.200000e+01 : f32
    %210 = vector.broadcast %cst_82 : f32 to vector<8x32xf32>
    %211 = arith.select %209, %199, %210 : vector<8x32xi1>, vector<8x32xf32>
    %cst_83 = arith.constant dense<0x7F800000> : vector<8xf32>
    %212 = vector.multi_reduction <minimumf>, %211, %cst_83 [1] : vector<8x32xf32> to vector<8xf32>
    %213 = vector.shape_cast %212 : vector<8xf32> to vector<8x1xf32>
    %214 = vector.broadcast %213 : vector<8x1xf32> to vector<8x32xf32>
    %215 = arith.cmpf oeq, %199, %214 : vector<8x32xf32>
    %cst_84 = arith.constant 0x7F800000 : f32
    %216 = vector.broadcast %cst_84 : f32 to vector<8x32xf32>
    %217 = arith.select %215, %216, %197 : vector<8x32xi1>, vector<8x32xf32>
    %cst_85 = arith.constant dense<0x7F800000> : vector<8xf32>
    %218 = vector.multi_reduction <minimumf>, %217, %cst_85 [1] : vector<8x32xf32> to vector<8xf32>
    %219 = vector.shape_cast %218 : vector<8xf32> to vector<8x1xf32>
    %cst_86 = arith.constant 1.000000e+00 : f32
    %220 = vector.broadcast %cst_86 : f32 to vector<8x1xf32>
    %221 = arith.cmpf oge, %188, %220 : vector<8x1xf32>
    %cst_87 = arith.constant 0.000000e+00 : f32
    %222 = vector.broadcast %cst_87 : f32 to vector<8x1xf32>
    %223 = arith.select %221, %219, %222 : vector<8x1xi1>, vector<8x1xf32>
    %224 = arith.addf %207, %223 : vector<8x1xf32>
    %225 = vector.broadcast %219 : vector<8x1xf32> to vector<8x32xf32>
    %226 = arith.cmpf oeq, %217, %225 : vector<8x32xf32>
    %cst_88 = arith.constant 3.200000e+01 : f32
    %227 = vector.broadcast %cst_88 : f32 to vector<8x32xf32>
    %228 = arith.select %226, %199, %227 : vector<8x32xi1>, vector<8x32xf32>
    %cst_89 = arith.constant dense<0x7F800000> : vector<8xf32>
    %229 = vector.multi_reduction <minimumf>, %228, %cst_89 [1] : vector<8x32xf32> to vector<8xf32>
    %230 = vector.shape_cast %229 : vector<8xf32> to vector<8x1xf32>
    %231 = vector.broadcast %230 : vector<8x1xf32> to vector<8x32xf32>
    %232 = arith.cmpf oeq, %199, %231 : vector<8x32xf32>
    %cst_90 = arith.constant 0x7F800000 : f32
    %233 = vector.broadcast %cst_90 : f32 to vector<8x32xf32>
    %234 = arith.select %232, %233, %217 : vector<8x32xi1>, vector<8x32xf32>
    %cst_91 = arith.constant dense<0x7F800000> : vector<8xf32>
    %235 = vector.multi_reduction <minimumf>, %234, %cst_91 [1] : vector<8x32xf32> to vector<8xf32>
    %236 = vector.shape_cast %235 : vector<8xf32> to vector<8x1xf32>
    %cst_92 = arith.constant 2.000000e+00 : f32
    %237 = vector.broadcast %cst_92 : f32 to vector<8x1xf32>
    %238 = arith.cmpf oge, %188, %237 : vector<8x1xf32>
    %cst_93 = arith.constant 0.000000e+00 : f32
    %239 = vector.broadcast %cst_93 : f32 to vector<8x1xf32>
    %240 = arith.select %238, %236, %239 : vector<8x1xi1>, vector<8x1xf32>
    %241 = arith.addf %224, %240 : vector<8x1xf32>
    %242 = vector.broadcast %236 : vector<8x1xf32> to vector<8x32xf32>
    %243 = arith.cmpf oeq, %234, %242 : vector<8x32xf32>
    %cst_94 = arith.constant 3.200000e+01 : f32
    %244 = vector.broadcast %cst_94 : f32 to vector<8x32xf32>
    %245 = arith.select %243, %199, %244 : vector<8x32xi1>, vector<8x32xf32>
    %cst_95 = arith.constant dense<0x7F800000> : vector<8xf32>
    %246 = vector.multi_reduction <minimumf>, %245, %cst_95 [1] : vector<8x32xf32> to vector<8xf32>
    %247 = vector.shape_cast %246 : vector<8xf32> to vector<8x1xf32>
    %248 = vector.broadcast %247 : vector<8x1xf32> to vector<8x32xf32>
    %249 = arith.cmpf oeq, %199, %248 : vector<8x32xf32>
    %cst_96 = arith.constant 0x7F800000 : f32
    %250 = vector.broadcast %cst_96 : f32 to vector<8x32xf32>
    %251 = arith.select %249, %250, %234 : vector<8x32xi1>, vector<8x32xf32>
    %cst_97 = arith.constant dense<0x7F800000> : vector<8xf32>
    %252 = vector.multi_reduction <minimumf>, %251, %cst_97 [1] : vector<8x32xf32> to vector<8xf32>
    %253 = vector.shape_cast %252 : vector<8xf32> to vector<8x1xf32>
    %cst_98 = arith.constant 3.000000e+00 : f32
    %254 = vector.broadcast %cst_98 : f32 to vector<8x1xf32>
    %255 = arith.cmpf oge, %188, %254 : vector<8x1xf32>
    %cst_99 = arith.constant 0.000000e+00 : f32
    %256 = vector.broadcast %cst_99 : f32 to vector<8x1xf32>
    %257 = arith.select %255, %253, %256 : vector<8x1xi1>, vector<8x1xf32>
    %258 = arith.addf %241, %257 : vector<8x1xf32>
    %259 = vector.broadcast %253 : vector<8x1xf32> to vector<8x32xf32>
    %260 = arith.cmpf oeq, %251, %259 : vector<8x32xf32>
    %cst_100 = arith.constant 3.200000e+01 : f32
    %261 = vector.broadcast %cst_100 : f32 to vector<8x32xf32>
    %262 = arith.select %260, %199, %261 : vector<8x32xi1>, vector<8x32xf32>
    %cst_101 = arith.constant dense<0x7F800000> : vector<8xf32>
    %263 = vector.multi_reduction <minimumf>, %262, %cst_101 [1] : vector<8x32xf32> to vector<8xf32>
    %264 = vector.shape_cast %263 : vector<8xf32> to vector<8x1xf32>
    %265 = vector.broadcast %264 : vector<8x1xf32> to vector<8x32xf32>
    %266 = arith.cmpf oeq, %199, %265 : vector<8x32xf32>
    %cst_102 = arith.constant 0x7F800000 : f32
    %267 = vector.broadcast %cst_102 : f32 to vector<8x32xf32>
    %268 = arith.select %266, %267, %251 : vector<8x32xi1>, vector<8x32xf32>
    %cst_103 = arith.constant dense<0x7F800000> : vector<8xf32>
    %269 = vector.multi_reduction <minimumf>, %268, %cst_103 [1] : vector<8x32xf32> to vector<8xf32>
    %270 = vector.shape_cast %269 : vector<8xf32> to vector<8x1xf32>
    %cst_104 = arith.constant 4.000000e+00 : f32
    %271 = vector.broadcast %cst_104 : f32 to vector<8x1xf32>
    %272 = arith.cmpf oge, %188, %271 : vector<8x1xf32>
    %cst_105 = arith.constant 0.000000e+00 : f32
    %273 = vector.broadcast %cst_105 : f32 to vector<8x1xf32>
    %274 = arith.select %272, %270, %273 : vector<8x1xi1>, vector<8x1xf32>
    %275 = arith.addf %258, %274 : vector<8x1xf32>
    %cst_106 = arith.constant dense<0.000000e+00> : vector<1xf32>
    %276 = vector.multi_reduction <add>, %188, %cst_106 [0] : vector<8x1xf32> to vector<1xf32>
    %277 = vector.shape_cast %276 : vector<1xf32> to vector<1x1xf32>
    %cst_107 = arith.constant 0.000000e+00 : f32
    %278 = vector.broadcast %cst_107 : f32 to vector<1x1xf32>
    %279 = arith.cmpf oeq, %277, %278 : vector<1x1xf32>
    %cst_108 = arith.constant 0.000000e+00 : f32
    %280 = vector.shape_cast %279 : vector<1x1xi1> to vector<1x1xi1>
    %281 = vector.broadcast %280 : vector<1x1xi1> to vector<8x1xi1>
    %282 = vector.broadcast %cst_108 : f32 to vector<8x1xf32>
    %283 = arith.select %281, %282, %275 : vector<8x1xi1>, vector<8x1xf32>
    %284 = arith.cmpf ole, %173, %283 : vector<8x1xf32>
    %285 = arith.extui %284 : vector<8x1xi1> to vector<8x1xi32>
    %286 = arith.sitofp %285 : vector<8x1xi32> to vector<8x1xf32>
    %c0_109 = arith.constant 0 : index
    %c0_110 = arith.constant 0 : index
    %287 = vector.load %arg7[%c0_109, %c0_110] : memref<8x1xf32, #tpu.memory_space<vmem>>, vector<8x1xf32>
    %cst_111 = arith.constant 0.000000e+00 : f32
    %288 = vector.shape_cast %12 : vector<1x1xi1> to vector<1x1xi1>
    %289 = vector.broadcast %288 : vector<1x1xi1> to vector<8x1xi1>
    %290 = vector.broadcast %cst_111 : f32 to vector<8x1xf32>
    %291 = arith.select %289, %286, %290 : vector<8x1xi1>, vector<8x1xf32>
    %292 = arith.addf %287, %291 : vector<8x1xf32>
    %c0_112 = arith.constant 0 : index
    %c0_113 = arith.constant 0 : index
    %293 = vector.load %arg7[%c0_112, %c0_113] : memref<8x1xf32, #tpu.memory_space<vmem>>, vector<8x1xf32>
    tpu.vector_store %arg7[%c0_112, %c0_113], %292 {strides = array<i32>} : memref<8x1xf32, #tpu.memory_space<vmem>>, vector<8x1xf32>,
    %cst_114 = arith.constant dense<0x7F800000> : vector<1xf32>
    %294 = vector.multi_reduction <minimumf>, %286, %cst_114 [0] : vector<8x1xf32> to vector<1xf32>
    %295 = vector.shape_cast %294 : vector<1xf32> to vector<1x1xf32>
    %cst_115 = arith.constant 1.000000e+00 : f32
    %296 = vector.broadcast %cst_115 : f32 to vector<1x1xf32>
    %297 = arith.cmpf oge, %295, %296 : vector<1x1xf32>
    %c0_116 = arith.constant 0 : index
    %c0_117 = arith.constant 0 : index
    %298 = vector.load %arg8[%c0_116, %c0_117] : memref<1x1xf32, #tpu.memory_space<vmem>>, vector<1x1xf32>
    %cst_118 = arith.constant 1.000000e+00 : f32
    %cst_119 = arith.constant 0.000000e+00 : f32
    %299 = vector.broadcast %cst_118 : f32 to vector<1x1xf32>
    %300 = vector.broadcast %cst_119 : f32 to vector<1x1xf32>
    %301 = arith.select %297, %299, %300 : vector<1x1xi1>, vector<1x1xf32>
    %302 = arith.maximumf %298, %301 : vector<1x1xf32>
    %c0_120 = arith.constant 0 : index
    %c0_121 = arith.constant 0 : index
    %303 = vector.load %arg8[%c0_120, %c0_121] : memref<1x1xf32, #tpu.memory_space<vmem>>, vector<1x1xf32>
    tpu.vector_store %arg8[%c0_120, %c0_121], %302 {strides = array<i32>} : memref<1x1xf32, #tpu.memory_space<vmem>>, vector<1x1xf32>,
    return
  }
  func.func @transform_0(%arg0: i32) -> (i32, i32) {
    %c0_i32 = arith.constant 0 : i32
    %c0_i32_0 = arith.constant 0 : i32
    %c0_i32_1 = arith.constant 0 : i32
    return %c0_i32, %c0_i32_0 : i32, i32
  }
  func.func @transform_1(%arg0: i32) -> (i32, i32) {
    %c0_i32 = arith.constant 0 : i32
    %c0_i32_0 = arith.constant 0 : i32
    %c0_i32_1 = arith.constant 0 : i32
    return %c0_i32, %c0_i32_0 : i32, i32
  }
  func.func @transform_2(%arg0: i32) -> (i32, i32, i32, i32) {
    %c0_i32 = arith.constant 0 : i32
    %c0_i32_0 = arith.constant 0 : i32
    %c0_i32_1 = arith.constant 0 : i32
    %c0_i32_2 = arith.constant 0 : i32
    return %arg0, %c0_i32, %c0_i32_0, %c0_i32_1 : i32, i32, i32, i32
  }
  func.func @transform_3(%arg0: i32) -> (i32, i32, i32, i32) {
    %c0_i32 = arith.constant 0 : i32
    %c0_i32_0 = arith.constant 0 : i32
    %c0_i32_1 = arith.constant 0 : i32
    %c0_i32_2 = arith.constant 0 : i32
    return %arg0, %c0_i32, %c0_i32_0, %c0_i32_1 : i32, i32, i32, i32
  }
  func.func @transform_4(%arg0: i32) -> (i32, i32) {
    %c0_i32 = arith.constant 0 : i32
    %c0_i32_0 = arith.constant 0 : i32
    %c0_i32_1 = arith.constant 0 : i32
    return %c0_i32, %c0_i32_0 : i32, i32
  }
  func.func @transform_5(%arg0: i32) -> (i32, i32) {
    %c0_i32 = arith.constant 0 : i32
    %c0_i32_0 = arith.constant 0 : i32
    %c0_i32_1 = arith.constant 0 : i32
    return %c0_i32, %c0_i32_0 : i32, i32
  }
  func.func @transform_6(%arg0: i32) -> (i32, i32) {
    %c0_i32 = arith.constant 0 : i32
    %c0_i32_0 = arith.constant 0 : i32
    %c0_i32_1 = arith.constant 0 : i32
    return %c0_i32, %c0_i32_0 : i32, i32
  }
}

</mosaic_0001>

<llo_original>
// kernel: mrrd_forward.1
$region0: #{mrrd_forward.1}
  #allocation0 [shape = 'u32[]', space=smem, size = 0x4, offset = 0x4, fixed_abs, tag = 'smem constant byte address 0x4 - core index']
  #allocation1 [shape = 'u32[144,128]{1,0:T(1,128)}', space=vmem, size = 0x12000, scoped, tag = 'internal scratch']
  #allocation2 [shape = 'f32[1,1]{1,0:T(1,128)}', space=vmem, size = 0x200, scoped, tag = 'scratch operand']
  %s0 = inlined_call_operand.vmem [shape: f32[8,32], index: 0, kind: input, shape index: {}]
  %s1 = inlined_call_operand.vmem [shape: f32[16,32], index: 1, kind: input, shape index: {}]
  %s2 = inlined_call_operand.vmem [shape: f32[6,8,32,32], index: 2, kind: input, shape index: {}]
  %s3 = inlined_call_operand.vmem [shape: f32[6,8,32,32], index: 3, kind: input, shape index: {}]
  %s4 = inlined_call_operand.hbm [shape: f32[8,32], index: 4, kind: output, shape index: {0}]
  %s5 = inlined_call_operand.vmem [shape: f32[8,1], index: 5, kind: output, shape index: {1}]
  %s6 = inlined_call_operand.vmem [shape: f32[8,1], index: 6, kind: output, shape index: {2}]
  %7 = xla_tuple %s4, %s5, %s6
  %s8 = sld [smem:[#allocation0]]
  $region69: #{mrrd_forward.1} parent=0
    _
  %s10 = ssub.s32 1, %s8
  %s11 = scalar_select 0, %s10, %s8
  $region1: #{mrrd_forward.1} parent=0
    #allocation3 [shape = 'u8[4096]{0}', space=vmem, size = 0x1000, scoped, tag = 'output window, operand 0, single buffered']
    #allocation4 [shape = 's32[2]{0}', space=sflag, size = 0x8, scoped, tag = 'scoped memory for mrrd_forward.1']
    %12 = vsyncpa [#allocation4], 0
    loop: start=0, step=1, limit=4
    $region2: #{mrrd_forward.1} parent=1 // loop_pre_header
      _
    $region3: #{mrrd_forward.1} parent=1 // loop_header
      %s14 = sphi 0, %s18
      %p15 = scmp.ge.s32.totalorder %s14, 4
      %s22 = sphi 0, %s22
      %s24 = sphi 0, %s22
      %s25 = sphi 0, %s24
      %s39 = sphi 0, %s25
      %s43 = sphi 0, %s43
      %s45 = sphi 0, %s43
      %s46 = sphi 0, %s45
      %s60 = sphi 0, %s46
      %s66 = sphi 0, %s68
      %s69 = sphi 0, %s66
      %s70 = sphi 0, %s69
      %s86 = sphi 0, %s70
      %s92 = sphi 0, %s94
      %s95 = sphi 0, %s92
      %s96 = sphi 0, %s95
      %s112 = sphi 0, %s96
      %s116 = sphi 0, %s116
      %s118 = sphi 0, %s116
      %s119 = sphi 0, %s118
      %s133 = sphi 0, %s119
      %s137 = sphi 0, %s137
      %s139 = sphi 0, %s137
      %s140 = sphi 0, %s139
      %s154 = sphi 0, %s140
      %s158 = sphi 0, %s158
      %s160 = sphi 0, %s158
      %s161 = sphi 0, %s160
      %s175 = sphi 0, %s161
    $region4: #{mrrd_forward.1} parent=1 // loop_header_branch
      %17 = sbr.rel (%p15) target = $region8
    $region5: #{mrrd_forward.1} parent=1 // loop_body
      %s19 = ssub.s32 %s14, 1
      %s20 = ssub.s32 %s14, 2
      %s21 = sadd.s32 %s14, 1
      %s23 = sadd.s32 %s22, 1
      %p26 = scmp.eq.s32.totalorder %s14, 1
      %p27 = scmp.ne.s32.totalorder %s22, %s24
      %p28 = scmp.eq.s32.totalorder %s14, 0
      %p29 = por %p27, %p28
      %p30 = scmp.ne.s32.totalorder %s22, %s24
      %p31 = scmp.eq.s32.totalorder %s19, 1
      %p32 = por %p30, %p31
      %p33 = scmp.ne.s32.totalorder %s24, %s25
      %p34 = scmp.eq.s32.totalorder %s19, 0
      %p35 = por %p33, %p34
      %p36 = scmp.ne.s32.totalorder %s24, %s25
      %p37 = scmp.eq.s32.totalorder %s20, 1
      %p38 = por %p36, %p37
      %p40 = scmp.ne.s32.totalorder %s25, %s39
      %p41 = scmp.eq.s32.totalorder %s20, 0
      %p42 = por %p40, %p41
      %s44 = sadd.s32 %s43, 1
      %p47 = scmp.eq.s32.totalorder %s14, 1
      %p48 = scmp.ne.s32.totalorder %s43, %s45
      %p49 = scmp.eq.s32.totalorder %s14, 0
      %p50 = por %p48, %p49
      %p51 = scmp.ne.s32.totalorder %s43, %s45
      %p52 = scmp.eq.s32.totalorder %s19, 1
      %p53 = por %p51, %p52
      %p54 = scmp.ne.s32.totalorder %s45, %s46
      %p55 = scmp.eq.s32.totalorder %s19, 0
      %p56 = por %p54, %p55
      %p57 = scmp.ne.s32.totalorder %s45, %s46
      %p58 = scmp.eq.s32.totalorder %s20, 1
      %p59 = por %p57, %p58
      %p61 = scmp.ne.s32.totalorder %s46, %s60
      %p62 = scmp.eq.s32.totalorder %s20, 0
      %p63 = por %p61, %p62
      %s64 = ssub.s32 %s14, %s21
      %p65 = scmp.eq.s32.totalorder %s64, 0
      %s67 = sadd.s32 %s66, 1
      %s68 = scalar_select %p65, %s66, %s67
      %p71 = pneg %p65
      %p72 = scmp.eq.s32.totalorder %s14, 1
      %p73 = por %p71, %p72
      %p74 = scmp.ne.s32.totalorder %s66, %s69
      %p75 = scmp.eq.s32.totalorder %s14, 0
      %p76 = por %p74, %p75
      %p77 = scmp.ne.s32.totalorder %s66, %s69
      %p78 = scmp.eq.s32.totalorder %s19, 1
      %p79 = por %p77, %p78
      %p80 = scmp.ne.s32.totalorder %s69, %s70
      %p81 = scmp.eq.s32.totalorder %s19, 0
      %p82 = por %p80, %p81
      %p83 = scmp.ne.s32.totalorder %s69, %s70
      %p84 = scmp.eq.s32.totalorder %s20, 1
      %p85 = por %p83, %p84
      %p87 = scmp.ne.s32.totalorder %s70, %s86
      %p88 = scmp.eq.s32.totalorder %s20, 0
      %p89 = por %p87, %p88
      %s90 = ssub.s32 %s14, %s21
      %p91 = scmp.eq.s32.totalorder %s90, 0
      %s93 = sadd.s32 %s92, 1
      %s94 = scalar_select %p91, %s92, %s93
      %p97 = pneg %p91
      %p98 = scmp.eq.s32.totalorder %s14, 1
      %p99 = por %p97, %p98
      %p100 = scmp.ne.s32.totalorder %s92, %s95
      %p101 = scmp.eq.s32.totalorder %s14, 0
      %p102 = por %p100, %p101
      %p103 = scmp.ne.s32.totalorder %s92, %s95
      %p104 = scmp.eq.s32.totalorder %s19, 1
      %p105 = por %p103, %p104
      %p106 = scmp.ne.s32.totalorder %s95, %s96
      %p107 = scmp.eq.s32.totalorder %s19, 0
      %p108 = por %p106, %p107
      %p109 = scmp.ne.s32.totalorder %s95, %s96
      %p110 = scmp.eq.s32.totalorder %s20, 1
      %p111 = por %p109, %p110
      %p113 = scmp.ne.s32.totalorder %s96, %s112
      %p114 = scmp.eq.s32.totalorder %s20, 0
      %p115 = por %p113, %p114
      %s117 = sadd.s32 %s116, 1
      %p120 = scmp.eq.s32.totalorder %s14, 1
      %p121 = scmp.ne.s32.totalorder %s116, %s118
      %p122 = scmp.eq.s32.totalorder %s14, 0
      %p123 = por %p121, %p122
      %p124 = scmp.ne.s32.totalorder %s116, %s118
      %p125 = scmp.eq.s32.totalorder %s19, 1
      %p126 = por %p124, %p125
      %p127 = scmp.ne.s32.totalorder %s118, %s119
      %p128 = scmp.eq.s32.totalorder %s19, 0
      %p129 = por %p127, %p128
      %p130 = scmp.ne.s32.totalorder %s118, %s119
      %p131 = scmp.eq.s32.totalorder %s20, 1
      %p132 = por %p130, %p131
      %p134 = scmp.ne.s32.totalorder %s119, %s133
      %p135 = scmp.eq.s32.totalorder %s20, 0
      %p136 = por %p134, %p135
      %s138 = sadd.s32 %s137, 1
      %p141 = scmp.eq.s32.totalorder %s14, 1
      %p142 = scmp.ne.s32.totalorder %s137, %s139
      %p143 = scmp.eq.s32.totalorder %s14, 0
      %p144 = por %p142, %p143
      %p145 = scmp.ne.s32.totalorder %s137, %s139
      %p146 = scmp.eq.s32.totalorder %s19, 1
      %p147 = por %p145, %p146
      %p148 = scmp.ne.s32.totalorder %s139, %s140
      %p149 = scmp.eq.s32.totalorder %s19, 0
      %p150 = por %p148, %p149
      %p151 = scmp.ne.s32.totalorder %s139, %s140
      %p152 = scmp.eq.s32.totalorder %s20, 1
      %p153 = por %p151, %p152
      %p155 = scmp.ne.s32.totalorder %s140, %s154
      %p156 = scmp.eq.s32.totalorder %s20, 0
      %p157 = por %p155, %p156
      %s159 = sadd.s32 %s158, 1
      %p162 = scmp.eq.s32.totalorder %s14, 1
      %p163 = scmp.ne.s32.totalorder %s158, %s160
      %p164 = scmp.eq.s32.totalorder %s14, 0
      %p165 = por %p163, %p164
      %p166 = scmp.ne.s32.totalorder %s158, %s160
      %p167 = scmp.eq.s32.totalorder %s19, 1
      %p168 = por %p166, %p167
      %p169 = scmp.ne.s32.totalorder %s160, %s161
      %p170 = scmp.eq.s32.totalorder %s19, 0
      %p171 = por %p169, %p170
      %p172 = scmp.ne.s32.totalorder %s160, %s161
      %p173 = scmp.eq.s32.totalorder %s20, 1
      %p174 = por %p172, %p173
      %p176 = scmp.ne.s32.totalorder %s161, %s175
      %p177 = scmp.eq.s32.totalorder %s20, 0
      %p178 = por %p176, %p177
      %p179 = scmp.le.s32.totalorder 1, %s14
      %p180 = scmp.lt.s32.totalorder %s14, 3
      %p181 = pnand %p179, %p180
      %p182 = pneg %p181
      // Predicated region
      $region9: #{mrrd_forward.1} parent=5 // pred_check
        _
      $region10: #{mrrd_forward.1} parent=5 // pred_check_branch
        %184 = sbr.rel (%p181) target = $region12
      $region11: #{mrrd_forward.1} parent=5 // pred_region
        %s185 = ssub.s32 %s14, 1
        // Predicated region
        $region13: #{mrrd_forward.1} parent=11 // pred_check
          %p186 = pneg %p35
        $region14: #{mrrd_forward.1} parent=11 // pred_check_branch
          %188 = sbr.rel (%p186) target = $region16
        $region15: #{mrrd_forward.1} parent=11 // pred_region
          _
        $region16: #{mrrd_forward.1} parent=11 // pred_fallthru
          _
        // Predicated region
        $region17: #{mrrd_forward.1} parent=11 // pred_check
          %p189 = pneg %p56
        $region18: #{mrrd_forward.1} parent=11 // pred_check_branch
          %191 = sbr.rel (%p189) target = $region20
        $region19: #{mrrd_forward.1} parent=11 // pred_region
          _
        $region20: #{mrrd_forward.1} parent=11 // pred_fallthru
          _
      $region12: #{mrrd_forward.1} parent=5 // pred_fallthru
        _
      %p192 = scmp.lt.s32.totalorder %s14, 2
      // Predicated region
      $region21: #{mrrd_forward.1} parent=5 // pred_check
        %p193 = pneg %p192
      $region22: #{mrrd_forward.1} parent=5 // pred_check_branch
        %195 = sbr.rel (%p193) target = $region24
      $region23: #{mrrd_forward.1} parent=5 // pred_region
        // Predicated region
        $region25: #{mrrd_forward.1} parent=23 // pred_check
          %p196 = pneg %p76
        $region26: #{mrrd_forward.1} parent=23 // pred_check_branch
          %198 = sbr.rel (%p196) target = $region28
        $region27: #{mrrd_forward.1} parent=23 // pred_region
          %s199 = smul.u32 3, %s14
          %p200 = scmp.lt.s32.totalorder %s199, 5
          %s201 = scalar_select %p200, %s199, 5
          %s202 = smul.addr %s201, 32
          %s203 = smul.addr %s202, 8
          %s204 = scalar_lea.vmem %s2, %s203
          %s205 = smul.u32 3, %s14
        $region28: #{mrrd_forward.1} parent=23 // pred_fallthru
          _
        // Predicated region
        $region29: #{mrrd_forward.1} parent=23 // pred_check
          %p206 = pneg %p102
        $region30: #{mrrd_forward.1} parent=23 // pred_check_branch
          %208 = sbr.rel (%p206) target = $region32
        $region31: #{mrrd_forward.1} parent=23 // pred_region
          %s209 = smul.u32 3, %s14
          %p210 = scmp.lt.s32.totalorder %s209, 5
          %s211 = scalar_select %p210, %s209, 5
          %s212 = smul.addr %s211, 32
          %s213 = smul.addr %s212, 8
          %s214 = scalar_lea.vmem %s3, %s213
          %s215 = smul.u32 3, %s14
        $region32: #{mrrd_forward.1} parent=23 // pred_fallthru
          _
      $region24: #{mrrd_forward.1} parent=5 // pred_fallthru
        _
      %p216 = scmp.le.s32.totalorder 1, %s14
      %p217 = scmp.lt.s32.totalorder %s14, 3
      %p218 = pnand %p216, %p217
      %p219 = pneg %p218
      // Predicated region
      $region33: #{mrrd_forward.1} parent=5 // pred_check
        _
      $region34: #{mrrd_forward.1} parent=5 // pred_check_branch
        %221 = sbr.rel (%p218) target = $region36
      $region35: #{mrrd_forward.1} parent=5 // pred_region
        %s222 = ssub.s32 %s14, 1
        %p223 = pneg %p35
        %p224 = pneg %p32
        %p225 = pneg %p56
        %p226 = pneg %p53
        %s227 = smul.u32 3, %s19
        %p228 = scmp.lt.s32.totalorder %s227, 5
        %s229 = scalar_select %p228, %s227, 5
        %s230 = smul.addr %s229, 32
        %s231 = smul.addr %s230, 8
        %s232 = scalar_lea.vmem %s2, %s231
        %p233 = pneg %p82
        %p234 = pneg %p79
        %s235 = smul.u32 3, %s19
        %p236 = scmp.lt.s32.totalorder %s235, 5
        %s237 = scalar_select %p236, %s235, 5
        %s238 = smul.addr %s237, 32
        %s239 = smul.addr %s238, 8
        %s240 = scalar_lea.vmem %s3, %s239
        %p241 = pneg %p108
        %p242 = pneg %p105
        %p243 = pneg %p129
        %p244 = pneg %p126
        %p245 = pneg %p150
        %p246 = pneg %p147
        %p247 = pneg %p171
        %p248 = pneg %p168
        %s249 = smul.u32 3, %s19
        %p250 = scmp.lt.s32.totalorder %s249, 5
        %s251 = scalar_select %p250, %s249, 5
        %s252 = smul.addr %s251, 32
        %s253 = smul.addr %s252, 8
        %s254 = scalar_lea.vmem %s2, %s253
        %s255 = smul.u32 3, %s19
        %s256 = smul.u32 3, %s19
        %p257 = scmp.lt.s32.totalorder %s256, 5
        %s258 = scalar_select %p257, %s256, 5
        %s259 = smul.addr %s258, 32
        %s260 = smul.addr %s259, 8
        %s261 = scalar_lea.vmem %s3, %s260
        %s262 = smul.u32 3, %s19
        %p263 = scmp.eq.s32.totalorder %s19, 0
        // Predicated region
        $region37: #{mrrd_forward.1} parent=35 // pred_check
          %p264 = pneg %p263
        $region38: #{mrrd_forward.1} parent=35 // pred_check_branch
          %266 = sbr.rel (%p264) target = $region40
        $region39: #{mrrd_forward.1} parent=35 // pred_region
          %vm267 = vcmask 261120
          %268 = vst.msk [vmem:[#allocation3] sm:$0xff] %vm267, 0.0
          %vm269 = vcmask 7168
          %270 = vst.msk [vmem:[%s5] sm:$0xff] %vm269, inf
          %271 = vst.msk [vmem:[%s6] sm:$0xff] %vm269, 0.0
          %vm272 = vcmask 0
          %273 = vst.msk [vmem:[#allocation2] sm:$0x1] %vm272, 0.0
        $region40: #{mrrd_forward.1} parent=35 // pred_fallthru
          _
        %v274 = vld [vmem:[%s0] sm:$0xff]
        %v275 = vld [vmem:[%s1] sm:$0xff]
        %v276 = vld [vmem:[%s1 + $0x8] sm:$0xff]
        %v277 = vand.u32 2147483647, %v274
        %vm278 = vcmp.lt.f32.partialorder %v274, 0.0
        %v279 = vsel %vm278, 1, 0
        %v280 = vcvt.s32.f32 %v279
        %v281 = vld [vmem:[#allocation2] sm:$0x1]
        %vm282 = vcmp.eq.f32.partialorder %v281, 0.0
        %v283 = vld [vmem:[%s254] sm:$0xff]
        %v284 = vld [vmem:[%s254 + $0x8] sm:$0xff]
        %v285 = vld [vmem:[%s254 + $0x10] sm:$0xff]
        %v286 = vld [vmem:[%s254 + $0x18] sm:$0xff]
        %v287 = vld [vmem:[%s254 + $0x20] sm:$0xff]
        %v288 = vld [vmem:[%s254 + $0x28] sm:$0xff]
        %v289 = vld [vmem:[%s254 + $0x30] sm:$0xff]
        %v290 = vld [vmem:[%s254 + $0x38] sm:$0xff]
        %v291 = vld [vmem:[%s254 + $0x40] sm:$0xff]
        %v292 = vld [vmem:[%s254 + $0x48] sm:$0xff]
        %v293 = vld [vmem:[%s254 + $0x50] sm:$0xff]
        %v294 = vld [vmem:[%s254 + $0x58] sm:$0xff]
        %v295 = vld [vmem:[%s254 + $0x60] sm:$0xff]
        %v296 = vld [vmem:[%s254 + $0x68] sm:$0xff]
        %v297 = vld [vmem:[%s254 + $0x70] sm:$0xff]
        %v298 = vld [vmem:[%s254 + $0x78] sm:$0xff]
        %v299 = vld [vmem:[%s254 + $0x80] sm:$0xff]
        %v300 = vld [vmem:[%s254 + $0x88] sm:$0xff]
        %v301 = vld [vmem:[%s254 + $0x90] sm:$0xff]
        %v302 = vld [vmem:[%s254 + $0x98] sm:$0xff]
        %v303 = vld [vmem:[%s254 + $0xa0] sm:$0xff]
        %v304 = vld [vmem:[%s254 + $0xa8] sm:$0xff]
        %v305 = vld [vmem:[%s254 + $0xb0] sm:$0xff]
        %v306 = vld [vmem:[%s254 + $0xb8] sm:$0xff]
        %v307 = vld [vmem:[%s254 + $0xc0] sm:$0xff]
        %v308 = vld [vmem:[%s254 + $0xc8] sm:$0xff]
        %v309 = vld [vmem:[%s254 + $0xd0] sm:$0xff]
        %v310 = vld [vmem:[%s254 + $0xd8] sm:$0xff]
        %v311 = vld [vmem:[%s254 + $0xe0] sm:$0xff]
        %v312 = vld [vmem:[%s254 + $0xe8] sm:$0xff]
        %v313 = vld [vmem:[%s254 + $0xf0] sm:$0xff]
        %v314 = vld [vmem:[%s254 + $0xf8] sm:$0xff]
        %v315 = vld [vmem:[%s261] sm:$0xff]
        %v316 = vld [vmem:[%s261 + $0x8] sm:$0xff]
        %v317 = vld [vmem:[%s261 + $0x10] sm:$0xff]
        %v318 = vld [vmem:[%s261 + $0x18] sm:$0xff]
        %v319 = vld [vmem:[%s261 + $0x20] sm:$0xff]
        %v320 = vld [vmem:[%s261 + $0x28] sm:$0xff]
        %v321 = vld [vmem:[%s261 + $0x30] sm:$0xff]
        %v322 = vld [vmem:[%s261 + $0x38] sm:$0xff]
        %v323 = vld [vmem:[%s261 + $0x40] sm:$0xff]
        %v324 = vld [vmem:[%s261 + $0x48] sm:$0xff]
        %v325 = vld [vmem:[%s261 + $0x50] sm:$0xff]
        %v326 = vld [vmem:[%s261 + $0x58] sm:$0xff]
        %v327 = vld [vmem:[%s261 + $0x60] sm:$0xff]
        %v328 = vld [vmem:[%s261 + $0x68] sm:$0xff]
        %v329 = vld [vmem:[%s261 + $0x70] sm:$0xff]
        %v330 = vld [vmem:[%s261 + $0x78] sm:$0xff]
        %v331 = vld [vmem:[%s261 + $0x80] sm:$0xff]
        %v332 = vld [vmem:[%s261 + $0x88] sm:$0xff]
        %v333 = vld [vmem:[%s261 + $0x90] sm:$0xff]
        %v334 = vld [vmem:[%s261 + $0x98] sm:$0xff]
        %v335 = vld [vmem:[%s261 + $0xa0] sm:$0xff]
        %v336 = vld [vmem:[%s261 + $0xa8] sm:$0xff]
        %v337 = vld [vmem:[%s261 + $0xb0] sm:$0xff]
        %v338 = vld [vmem:[%s261 + $0xb8] sm:$0xff]
        %v339 = vld [vmem:[%s261 + $0xc0] sm:$0xff]
        %v340 = vld [vmem:[%s261 + $0xc8] sm:$0xff]
        %v341 = vld [vmem:[%s261 + $0xd0] sm:$0xff]
        %v342 = vld [vmem:[%s261 + $0xd8] sm:$0xff]
        %v343 = vld [vmem:[%s261 + $0xe0] sm:$0xff]
        %v344 = vld [vmem:[%s261 + $0xe8] sm:$0xff]
        %v345 = vld [vmem:[%s261 + $0xf0] sm:$0xff]
        %v346 = vld [vmem:[%s261 + $0xf8] sm:$0xff]
        %v348 = vcombine.high %v274, %v274
        %v350 = vunpack.c.l.s4 1966171168
        %v351 = vunpack.c.0.s8 %v350
        %v352 = vlaneseq
        %v353 = vshrl.u32 %v352, 7
        %v354 = vsub.s32 %v351, %v353
        %v355 = vrot.slane %v274, %v354
        %v357 = vunpack.c.l.s4 1966171168
        %v358 = vunpack.c.0.s8 %v357
        %v359 = vlaneseq
        %v360 = vshrl.u32 %v359, 7
        %v361 = vsub.s32 %v358, %v360
        %v362 = vrot.slane %v348, %v361
        %v363 = vcombine.high %v355, %v355
        %v364 = vcombine.high %v362, %v362
        %v366 = vunpack.c.l.s4 1966171168
        %v367 = vunpack.c.0.s8 %v366
        %v368 = vlaneseq
        %v369 = vshrl.u32 %v368, 7
        %v370 = vsub.s32 %v367, %v369
        %v371 = vrot.slane %v355, %v370
        %v373 = vunpack.c.l.s4 1966171168
        %v374 = vunpack.c.0.s8 %v373
        %v375 = vlaneseq
        %v376 = vshrl.u32 %v375, 7
        %v377 = vsub.s32 %v374, %v376
        %v378 = vrot.slane %v362, %v377
        %v380 = vunpack.c.l.s4 1966171168
        %v381 = vunpack.c.0.s8 %v380
        %v382 = vlaneseq
        %v383 = vshrl.u32 %v382, 7
        %v384 = vsub.s32 %v381, %v383
        %v385 = vrot.slane %v363, %v384
        %v387 = vunpack.c.l.s4 1966171168
        %v388 = vunpack.c.0.s8 %v387
        %v389 = vlaneseq
        %v390 = vshrl.u32 %v389, 7
        %v391 = vsub.s32 %v388, %v390
        %v392 = vrot.slane %v364, %v391
        %v393 = vcombine.high %v371, %v371
        %v394 = vcombine.high %v378, %v378
        %v395 = vcombine.high %v385, %v385
        %v396 = vcombine.high %v392, %v392
        %v397 = vlaneseq
        %v398 = vshrl.u32 %v397, 7
        %v399 = vsub.s32 0, %v398
        %v400 = vrot.slane %v371, %v399
        %v401 = vlaneseq
        %v402 = vshrl.u32 %v401, 7
        %v403 = vsub.s32 0, %v402
        %v404 = vrot.slane %v385, %v403
        %v405 = vlaneseq
        %v406 = vshrl.u32 %v405, 7
        %v407 = vsub.s32 0, %v406
        %v408 = vrot.slane %v393, %v407
        %v409 = vlaneseq
        %v410 = vshrl.u32 %v409, 7
        %v411 = vsub.s32 0, %v410
        %v412 = vrot.slane %v395, %v411
        %v413 = vlaneseq
        %v414 = vshrl.u32 %v413, 7
        %v415 = vsub.s32 0, %v414
        %v416 = vrot.slane %v378, %v415
        %v417 = vlaneseq
        %v418 = vshrl.u32 %v417, 7
        %v419 = vsub.s32 0, %v418
        %v420 = vrot.slane %v392, %v419
        %v421 = vlaneseq
        %v422 = vshrl.u32 %v421, 7
        %v423 = vsub.s32 0, %v422
        %v424 = vrot.slane %v394, %v423
        %v425 = vlaneseq
        %v426 = vshrl.u32 %v425, 7
        %v427 = vsub.s32 0, %v426
        %v428 = vrot.slane %v396, %v427
        %v437 = vmul.f32 %v283, %v400
        %v438 = vmul.f32 %v284, %v400
        %v439 = vmul.f32 %v285, %v400
        %v440 = vmul.f32 %v286, %v400
        %v441 = vmul.f32 %v287, %v404
        %v442 = vmul.f32 %v288, %v404
        %v443 = vmul.f32 %v289, %v404
        %v444 = vmul.f32 %v290, %v404
        %v445 = vmul.f32 %v291, %v408
        %v446 = vmul.f32 %v292, %v408
        %v447 = vmul.f32 %v293, %v408
        %v448 = vmul.f32 %v294, %v408
        %v449 = vmul.f32 %v295, %v412
        %v450 = vmul.f32 %v296, %v412
        %v451 = vmul.f32 %v297, %v412
        %v452 = vmul.f32 %v298, %v412
        %v453 = vmul.f32 %v299, %v416
        %v454 = vmul.f32 %v300, %v416
        %v455 = vmul.f32 %v301, %v416
        %v456 = vmul.f32 %v302, %v416
        %v457 = vmul.f32 %v303, %v420
        %v458 = vmul.f32 %v304, %v420
        %v459 = vmul.f32 %v305, %v420
        %v460 = vmul.f32 %v306, %v420
        %v461 = vmul.f32 %v307, %v424
        %v462 = vmul.f32 %v308, %v424
        %v463 = vmul.f32 %v309, %v424
        %v464 = vmul.f32 %v310, %v424
        %v465 = vmul.f32 %v311, %v428
        %v466 = vmul.f32 %v312, %v428
        %v467 = vmul.f32 %v313, %v428
        %v468 = vmul.f32 %v314, %v428
        %vm469 = vcmask 261120
        %v470 = vsel %vm469, %v437, 0.0
        %471 = vadd.xlane.f32.xlu0 %v470
        %v472 = vpop.xlane.xlu0 %471
        %v473 = vsel %vm469, %v438, 0.0
        %474 = vadd.xlane.f32.xlu0 %v473
        %v475 = vpop.xlane.xlu0 %474
        %v476 = vsel %vm469, %v439, 0.0
        %477 = vadd.xlane.f32.xlu0 %v476
        %v478 = vpop.xlane.xlu0 %477
        %v479 = vsel %vm469, %v440, 0.0
        %480 = vadd.xlane.f32.xlu0 %v479
        %v481 = vpop.xlane.xlu0 %480
        %v482 = vsel %vm469, %v441, 0.0
        %483 = vadd.xlane.f32.xlu0 %v482
        %v484 = vpop.xlane.xlu0 %483
        %v485 = vsel %vm469, %v442, 0.0
        %486 = vadd.xlane.f32.xlu0 %v485
        %v487 = vpop.xlane.xlu0 %486
        %v488 = vsel %vm469, %v443, 0.0
        %489 = vadd.xlane.f32.xlu0 %v488
        %v490 = vpop.xlane.xlu0 %489
        %v491 = vsel %vm469, %v444, 0.0
        %492 = vadd.xlane.f32.xlu0 %v491
        %v493 = vpop.xlane.xlu0 %492
        %v494 = vsel %vm469, %v445, 0.0
        %495 = vadd.xlane.f32.xlu0 %v494
        %v496 = vpop.xlane.xlu0 %495
        %v497 = vsel %vm469, %v446, 0.0
        %498 = vadd.xlane.f32.xlu0 %v497
        %v499 = vpop.xlane.xlu0 %498
        %v500 = vsel %vm469, %v447, 0.0
        %501 = vadd.xlane.f32.xlu0 %v500
        %v502 = vpop.xlane.xlu0 %501
        %v503 = vsel %vm469, %v448, 0.0
        %504 = vadd.xlane.f32.xlu0 %v503
        %v505 = vpop.xlane.xlu0 %504
        %v506 = vsel %vm469, %v449, 0.0
        %507 = vadd.xlane.f32.xlu0 %v506
        %v508 = vpop.xlane.xlu0 %507
        %v509 = vsel %vm469, %v450, 0.0
        %510 = vadd.xlane.f32.xlu0 %v509
        %v511 = vpop.xlane.xlu0 %510
        %v512 = vsel %vm469, %v451, 0.0
        %513 = vadd.xlane.f32.xlu0 %v512
        %v514 = vpop.xlane.xlu0 %513
        %v515 = vsel %vm469, %v452, 0.0
        %516 = vadd.xlane.f32.xlu0 %v515
        %v517 = vpop.xlane.xlu0 %516
        %v518 = vsel %vm469, %v453, 0.0
        %519 = vadd.xlane.f32.xlu0 %v518
        %v520 = vpop.xlane.xlu0 %519
        %v521 = vsel %vm469, %v454, 0.0
        %522 = vadd.xlane.f32.xlu0 %v521
        %v523 = vpop.xlane.xlu0 %522
        %v524 = vsel %vm469, %v455, 0.0
        %525 = vadd.xlane.f32.xlu0 %v524
        %v526 = vpop.xlane.xlu0 %525
        %v527 = vsel %vm469, %v456, 0.0
        %528 = vadd.xlane.f32.xlu0 %v527
        %v529 = vpop.xlane.xlu0 %528
        %v530 = vsel %vm469, %v457, 0.0
        %531 = vadd.xlane.f32.xlu0 %v530
        %v532 = vpop.xlane.xlu0 %531
        %v533 = vsel %vm469, %v458, 0.0
        %534 = vadd.xlane.f32.xlu0 %v533
        %v535 = vpop.xlane.xlu0 %534
        %v536 = vsel %vm469, %v459, 0.0
        %537 = vadd.xlane.f32.xlu0 %v536
        %v538 = vpop.xlane.xlu0 %537
        %v539 = vsel %vm469, %v460, 0.0
        %540 = vadd.xlane.f32.xlu0 %v539
        %v541 = vpop.xlane.xlu0 %540
        %v542 = vsel %vm469, %v461, 0.0
        %543 = vadd.xlane.f32.xlu0 %v542
        %v544 = vpop.xlane.xlu0 %543
        %v545 = vsel %vm469, %v462, 0.0
        %546 = vadd.xlane.f32.xlu0 %v545
        %v547 = vpop.xlane.xlu0 %546
        %v548 = vsel %vm469, %v463, 0.0
        %549 = vadd.xlane.f32.xlu0 %v548
        %v550 = vpop.xlane.xlu0 %549
        %v551 = vsel %vm469, %v464, 0.0
        %552 = vadd.xlane.f32.xlu0 %v551
        %v553 = vpop.xlane.xlu0 %552
        %v554 = vsel %vm469, %v465, 0.0
        %555 = vadd.xlane.f32.xlu0 %v554
        %v556 = vpop.xlane.xlu0 %555
        %v557 = vsel %vm469, %v466, 0.0
        %558 = vadd.xlane.f32.xlu0 %v557
        %v559 = vpop.xlane.xlu0 %558
        %v560 = vsel %vm469, %v467, 0.0
        %561 = vadd.xlane.f32.xlu0 %v560
        %v562 = vpop.xlane.xlu0 %561
        %v563 = vsel %vm469, %v468, 0.0
        %564 = vadd.xlane.f32.xlu0 %v563
        %v565 = vpop.xlane.xlu0 %564
        %vm566 = vcmp.lt.f32.partialorder %v472, 0.0
        %vm567 = vcmp.lt.f32.partialorder %v475, 0.0
        %vm568 = vcmp.lt.f32.partialorder %v478, 0.0
        %vm569 = vcmp.lt.f32.partialorder %v481, 0.0
        %vm570 = vcmp.lt.f32.partialorder %v484, 0.0
        %vm571 = vcmp.lt.f32.partialorder %v487, 0.0
        %vm572 = vcmp.lt.f32.partialorder %v490, 0.0
        %vm573 = vcmp.lt.f32.partialorder %v493, 0.0
        %vm574 = vcmp.lt.f32.partialorder %v496, 0.0
        %vm575 = vcmp.lt.f32.partialorder %v499, 0.0
        %vm576 = vcmp.lt.f32.partialorder %v502, 0.0
        %vm577 = vcmp.lt.f32.partialorder %v505, 0.0
        %vm578 = vcmp.lt.f32.partialorder %v508, 0.0
        %vm579 = vcmp.lt.f32.partialorder %v511, 0.0
        %vm580 = vcmp.lt.f32.partialorder %v514, 0.0
        %vm581 = vcmp.lt.f32.partialorder %v517, 0.0
        %vm582 = vcmp.lt.f32.partialorder %v520, 0.0
        %vm583 = vcmp.lt.f32.partialorder %v523, 0.0
        %vm584 = vcmp.lt.f32.partialorder %v526, 0.0
        %vm585 = vcmp.lt.f32.partialorder %v529, 0.0
        %vm586 = vcmp.lt.f32.partialorder %v532, 0.0
        %vm587 = vcmp.lt.f32.partialorder %v535, 0.0
        %vm588 = vcmp.lt.f32.partialorder %v538, 0.0
        %vm589 = vcmp.lt.f32.partialorder %v541, 0.0
        %vm590 = vcmp.lt.f32.partialorder %v544, 0.0
        %vm591 = vcmp.lt.f32.partialorder %v547, 0.0
        %vm592 = vcmp.lt.f32.partialorder %v550, 0.0
        %vm593 = vcmp.lt.f32.partialorder %v553, 0.0
        %vm594 = vcmp.lt.f32.partialorder %v556, 0.0
        %vm595 = vcmp.lt.f32.partialorder %v559, 0.0
        %vm596 = vcmp.lt.f32.partialorder %v562, 0.0
        %vm597 = vcmp.lt.f32.partialorder %v565, 0.0
        %v598 = vsel %vm566, 1, 0
        %v599 = vsel %vm567, 1, 0
        %v600 = vsel %vm568, 1, 0
        %v601 = vsel %vm569, 1, 0
        %v602 = vsel %vm570, 1, 0
        %v603 = vsel %vm571, 1, 0
        %v604 = vsel %vm572, 1, 0
        %v605 = vsel %vm573, 1, 0
        %v606 = vsel %vm574, 1, 0
        %v607 = vsel %vm575, 1, 0
        %v608 = vsel %vm576, 1, 0
        %v609 = vsel %vm577, 1, 0
        %v610 = vsel %vm578, 1, 0
        %v611 = vsel %vm579, 1, 0
        %v612 = vsel %vm580, 1, 0
        %v613 = vsel %vm581, 1, 0
        %v614 = vsel %vm582, 1, 0
        %v615 = vsel %vm583, 1, 0
        %v616 = vsel %vm584, 1, 0
        %v617 = vsel %vm585, 1, 0
        %v618 = vsel %vm586, 1, 0
        %v619 = vsel %vm587, 1, 0
        %v620 = vsel %vm588, 1, 0
        %v621 = vsel %vm589, 1, 0
        %v622 = vsel %vm590, 1, 0
        %v623 = vsel %vm591, 1, 0
        %v624 = vsel %vm592, 1, 0
        %v625 = vsel %vm593, 1, 0
        %v626 = vsel %vm594, 1, 0
        %v627 = vsel %vm595, 1, 0
        %v628 = vsel %vm596, 1, 0
        %v629 = vsel %vm597, 1, 0
        %v630 = vcvt.s32.f32 %v598
        %v631 = vcvt.s32.f32 %v599
        %v632 = vcvt.s32.f32 %v600
        %v633 = vcvt.s32.f32 %v601
        %v634 = vcvt.s32.f32 %v602
        %v635 = vcvt.s32.f32 %v603
        %v636 = vcvt.s32.f32 %v604
        %v637 = vcvt.s32.f32 %v605
        %v638 = vcvt.s32.f32 %v606
        %v639 = vcvt.s32.f32 %v607
        %v640 = vcvt.s32.f32 %v608
        %v641 = vcvt.s32.f32 %v609
        %v642 = vcvt.s32.f32 %v610
        %v643 = vcvt.s32.f32 %v611
        %v644 = vcvt.s32.f32 %v612
        %v645 = vcvt.s32.f32 %v613
        %v646 = vcvt.s32.f32 %v614
        %v647 = vcvt.s32.f32 %v615
        %v648 = vcvt.s32.f32 %v616
        %v649 = vcvt.s32.f32 %v617
        %v650 = vcvt.s32.f32 %v618
        %v651 = vcvt.s32.f32 %v619
        %v652 = vcvt.s32.f32 %v620
        %v653 = vcvt.s32.f32 %v621
        %v654 = vcvt.s32.f32 %v622
        %v655 = vcvt.s32.f32 %v623
        %v656 = vcvt.s32.f32 %v624
        %v657 = vcvt.s32.f32 %v625
        %v658 = vcvt.s32.f32 %v626
        %v659 = vcvt.s32.f32 %v627
        %v660 = vcvt.s32.f32 %v628
        %v661 = vcvt.s32.f32 %v629
        %v694 = vlaneseq
        %v695 = vand.u32 %v694, 127
        %v696 = vlaneseq
        %v697 = vshrl.u32 %v696, 7
        %v698 = vsub.s32 %v695, %v697
        %v699 = vrot.slane %v630, %v698
        %v700 = vadd.s32 %v695, 4294967288
        %v701 = vlaneseq
        %v702 = vshrl.u32 %v701, 7
        %v703 = vsub.s32 %v700, %v702
        %v704 = vrot.slane %v631, %v703
        %vm705 = vcmask 130112
        %v706 = vsel %vm705, %v704, %v699
        %v707 = vadd.s32 %v695, 4294967280
        %v708 = vlaneseq
        %v709 = vshrl.u32 %v708, 7
        %v710 = vsub.s32 %v707, %v709
        %v711 = vrot.slane %v632, %v710
        %vm712 = vcmask 195712
        %v713 = vsel %vm712, %v711, %v706
        %v714 = vadd.s32 %v695, 4294967272
        %v715 = vlaneseq
        %v716 = vshrl.u32 %v715, 7
        %v717 = vsub.s32 %v714, %v716
        %v718 = vrot.slane %v633, %v717
        %vm719 = vcmask 261312
        %v720 = vsel %vm719, %v718, %v713
        %v721 = vlaneseq
        %v722 = vshrl.u32 %v721, 7
        %v723 = vsub.s32 %v695, %v722
        %v724 = vrot.slane %v634, %v723
        %v725 = vlaneseq
        %v726 = vshrl.u32 %v725, 7
        %v727 = vsub.s32 %v700, %v726
        %v728 = vrot.slane %v635, %v727
        %v729 = vsel %vm705, %v728, %v724
        %v730 = vlaneseq
        %v731 = vshrl.u32 %v730, 7
        %v732 = vsub.s32 %v707, %v731
        %v733 = vrot.slane %v636, %v732
        %v734 = vsel %vm712, %v733, %v729
        %v735 = vlaneseq
        %v736 = vshrl.u32 %v735, 7
        %v737 = vsub.s32 %v714, %v736
        %v738 = vrot.slane %v637, %v737
        %v739 = vsel %vm719, %v738, %v734
        %v740 = vlaneseq
        %v741 = vshrl.u32 %v740, 7
        %v742 = vsub.s32 %v695, %v741
        %v743 = vrot.slane %v638, %v742
        %v744 = vlaneseq
        %v745 = vshrl.u32 %v744, 7
        %v746 = vsub.s32 %v700, %v745
        %v747 = vrot.slane %v639, %v746
        %v748 = vsel %vm705, %v747, %v743
        %v749 = vlaneseq
        %v750 = vshrl.u32 %v749, 7
        %v751 = vsub.s32 %v707, %v750
        %v752 = vrot.slane %v640, %v751
        %v753 = vsel %vm712, %v752, %v748
        %v754 = vlaneseq
        %v755 = vshrl.u32 %v754, 7
        %v756 = vsub.s32 %v714, %v755
        %v757 = vrot.slane %v641, %v756
        %v758 = vsel %vm719, %v757, %v753
        %v759 = vlaneseq
        %v760 = vshrl.u32 %v759, 7
        %v761 = vsub.s32 %v695, %v760
        %v762 = vrot.slane %v642, %v761
        %v763 = vlaneseq
        %v764 = vshrl.u32 %v763, 7
        %v765 = vsub.s32 %v700, %v764
        %v766 = vrot.slane %v643, %v765
        %v767 = vsel %vm705, %v766, %v762
        %v768 = vlaneseq
        %v769 = vshrl.u32 %v768, 7
        %v770 = vsub.s32 %v707, %v769
        %v771 = vrot.slane %v644, %v770
        %v772 = vsel %vm712, %v771, %v767
        %v773 = vlaneseq
        %v774 = vshrl.u32 %v773, 7
        %v775 = vsub.s32 %v714, %v774
        %v776 = vrot.slane %v645, %v775
        %v777 = vsel %vm719, %v776, %v772
        %v778 = vlaneseq
        %v779 = vshrl.u32 %v778, 7
        %v780 = vsub.s32 %v695, %v779
        %v781 = vrot.slane %v646, %v780
        %v782 = vlaneseq
        %v783 = vshrl.u32 %v782, 7
        %v784 = vsub.s32 %v700, %v783
        %v785 = vrot.slane %v647, %v784
        %v786 = vsel %vm705, %v785, %v781
        %v787 = vlaneseq
        %v788 = vshrl.u32 %v787, 7
        %v789 = vsub.s32 %v707, %v788
        %v790 = vrot.slane %v648, %v789
        %v791 = vsel %vm712, %v790, %v786
        %v792 = vlaneseq
        %v793 = vshrl.u32 %v792, 7
        %v794 = vsub.s32 %v714, %v793
        %v795 = vrot.slane %v649, %v794
        %v796 = vsel %vm719, %v795, %v791
        %v797 = vlaneseq
        %v798 = vshrl.u32 %v797, 7
        %v799 = vsub.s32 %v695, %v798
        %v800 = vrot.slane %v650, %v799
        %v801 = vlaneseq
        %v802 = vshrl.u32 %v801, 7
        %v803 = vsub.s32 %v700, %v802
        %v804 = vrot.slane %v651, %v803
        %v805 = vsel %vm705, %v804, %v800
        %v806 = vlaneseq
        %v807 = vshrl.u32 %v806, 7
        %v808 = vsub.s32 %v707, %v807
        %v809 = vrot.slane %v652, %v808
        %v810 = vsel %vm712, %v809, %v805
        %v811 = vlaneseq
        %v812 = vshrl.u32 %v811, 7
        %v813 = vsub.s32 %v714, %v812
        %v814 = vrot.slane %v653, %v813
        %v815 = vsel %vm719, %v814, %v810
        %v816 = vlaneseq
        %v817 = vshrl.u32 %v816, 7
        %v818 = vsub.s32 %v695, %v817
        %v819 = vrot.slane %v654, %v818
        %v820 = vlaneseq
        %v821 = vshrl.u32 %v820, 7
        %v822 = vsub.s32 %v700, %v821
        %v823 = vrot.slane %v655, %v822
        %v824 = vsel %vm705, %v823, %v819
        %v825 = vlaneseq
        %v826 = vshrl.u32 %v825, 7
        %v827 = vsub.s32 %v707, %v826
        %v828 = vrot.slane %v656, %v827
        %v829 = vsel %vm712, %v828, %v824
        %v830 = vlaneseq
        %v831 = vshrl.u32 %v830, 7
        %v832 = vsub.s32 %v714, %v831
        %v833 = vrot.slane %v657, %v832
        %v834 = vsel %vm719, %v833, %v829
        %v835 = vlaneseq
        %v836 = vshrl.u32 %v835, 7
        %v837 = vsub.s32 %v695, %v836
        %v838 = vrot.slane %v658, %v837
        %v839 = vlaneseq
        %v840 = vshrl.u32 %v839, 7
        %v841 = vsub.s32 %v700, %v840
        %v842 = vrot.slane %v659, %v841
        %v843 = vsel %vm705, %v842, %v838
        %v844 = vlaneseq
        %v845 = vshrl.u32 %v844, 7
        %v846 = vsub.s32 %v707, %v845
        %v847 = vrot.slane %v660, %v846
        %v848 = vsel %vm712, %v847, %v843
        %v849 = vlaneseq
        %v850 = vshrl.u32 %v849, 7
        %v851 = vsub.s32 %v714, %v850
        %v852 = vrot.slane %v661, %v851
        %v853 = vsel %vm719, %v852, %v848
        %vm854 = vcmask 1041409
        %vm855 = vcmask 1042434
        %v856 = vsel %vm855, %v720, %v720
        %vm857 = vcmask 1043459
        %v858 = vsel %vm857, %v720, %v856
        %vm859 = vcmask 1044484
        %v860 = vsel %vm859, %v720, %v858
        %vm861 = vcmask 1045509
        %v862 = vsel %vm861, %v720, %v860
        %vm863 = vcmask 1046534
        %v864 = vsel %vm863, %v720, %v862
        %vm865 = vcmask 1047559
        %v866 = vsel %vm865, %v720, %v864
        %v867 = vsel %vm855, %v739, %v739
        %v868 = vsel %vm857, %v739, %v867
        %v869 = vsel %vm859, %v739, %v868
        %v870 = vsel %vm861, %v739, %v869
        %v871 = vsel %vm863, %v739, %v870
        %v872 = vsel %vm865, %v739, %v871
        %v873 = vsel %vm855, %v758, %v758
        %v874 = vsel %vm857, %v758, %v873
        %v875 = vsel %vm859, %v758, %v874
        %v876 = vsel %vm861, %v758, %v875
        %v877 = vsel %vm863, %v758, %v876
        %v878 = vsel %vm865, %v758, %v877
        %v879 = vsel %vm855, %v777, %v777
        %v880 = vsel %vm857, %v777, %v879
        %v881 = vsel %vm859, %v777, %v880
        %v882 = vsel %vm861, %v777, %v881
        %v883 = vsel %vm863, %v777, %v882
        %v884 = vsel %vm865, %v777, %v883
        %v885 = vsel %vm855, %v796, %v796
        %v886 = vsel %vm857, %v796, %v885
        %v887 = vsel %vm859, %v796, %v886
        %v888 = vsel %vm861, %v796, %v887
        %v889 = vsel %vm863, %v796, %v888
        %v890 = vsel %vm865, %v796, %v889
        %v891 = vsel %vm855, %v815, %v815
        %v892 = vsel %vm857, %v815, %v891
        %v893 = vsel %vm859, %v815, %v892
        %v894 = vsel %vm861, %v815, %v893
        %v895 = vsel %vm863, %v815, %v894
        %v896 = vsel %vm865, %v815, %v895
        %v897 = vsel %vm855, %v834, %v834
        %v898 = vsel %vm857, %v834, %v897
        %v899 = vsel %vm859, %v834, %v898
        %v900 = vsel %vm861, %v834, %v899
        %v901 = vsel %vm863, %v834, %v900
        %v902 = vsel %vm865, %v834, %v901
        %v903 = vsel %vm855, %v853, %v853
        %v904 = vsel %vm857, %v853, %v903
        %v905 = vsel %vm859, %v853, %v904
        %v906 = vsel %vm861, %v853, %v905
        %v907 = vsel %vm863, %v853, %v906
        %v908 = vsel %vm865, %v853, %v907
        %v917 = vmul.f32 %v275, %v866
        %v918 = vmul.f32 %v276, %v866
        %v919 = vmul.f32 %v275, %v872
        %v920 = vmul.f32 %v276, %v872
        %v921 = vmul.f32 %v275, %v878
        %v922 = vmul.f32 %v276, %v878
        %v923 = vmul.f32 %v275, %v884
        %v924 = vmul.f32 %v276, %v884
        %v925 = vmul.f32 %v275, %v890
        %v926 = vmul.f32 %v276, %v890
        %v927 = vmul.f32 %v275, %v896
        %v928 = vmul.f32 %v276, %v896
        %v929 = vmul.f32 %v275, %v902
        %v930 = vmul.f32 %v276, %v902
        %v931 = vmul.f32 %v275, %v908
        %v932 = vmul.f32 %v276, %v908
        %v933 = vsel %vm469, %v917, 0.0
        %934 = vadd.xlane.f32.xlu0 %v933
        %v935 = vpop.xlane.xlu0 %934
        %v936 = vsel %vm469, %v918, 0.0
        %937 = vadd.xlane.f32.xlu0 %v936
        %v938 = vpop.xlane.xlu0 %937
        %v939 = vsel %vm469, %v919, 0.0
        %940 = vadd.xlane.f32.xlu0 %v939
        %v941 = vpop.xlane.xlu0 %940
        %v942 = vsel %vm469, %v920, 0.0
        %943 = vadd.xlane.f32.xlu0 %v942
        %v944 = vpop.xlane.xlu0 %943
        %v945 = vsel %vm469, %v921, 0.0
        %946 = vadd.xlane.f32.xlu0 %v945
        %v947 = vpop.xlane.xlu0 %946
        %v948 = vsel %vm469, %v922, 0.0
        %949 = vadd.xlane.f32.xlu0 %v948
        %v950 = vpop.xlane.xlu0 %949
        %v951 = vsel %vm469, %v923, 0.0
        %952 = vadd.xlane.f32.xlu0 %v951
        %v953 = vpop.xlane.xlu0 %952
        %v954 = vsel %vm469, %v924, 0.0
        %955 = vadd.xlane.f32.xlu0 %v954
        %v956 = vpop.xlane.xlu0 %955
        %v957 = vsel %vm469, %v925, 0.0
        %958 = vadd.xlane.f32.xlu0 %v957
        %v959 = vpop.xlane.xlu0 %958
        %v960 = vsel %vm469, %v926, 0.0
        %961 = vadd.xlane.f32.xlu0 %v960
        %v962 = vpop.xlane.xlu0 %961
        %v963 = vsel %vm469, %v927, 0.0
        %964 = vadd.xlane.f32.xlu0 %v963
        %v965 = vpop.xlane.xlu0 %964
        %v966 = vsel %vm469, %v928, 0.0
        %967 = vadd.xlane.f32.xlu0 %v966
        %v968 = vpop.xlane.xlu0 %967
        %v969 = vsel %vm469, %v929, 0.0
        %970 = vadd.xlane.f32.xlu0 %v969
        %v971 = vpop.xlane.xlu0 %970
        %v972 = vsel %vm469, %v930, 0.0
        %973 = vadd.xlane.f32.xlu0 %v972
        %v974 = vpop.xlane.xlu0 %973
        %v975 = vsel %vm469, %v931, 0.0
        %976 = vadd.xlane.f32.xlu0 %v975
        %v977 = vpop.xlane.xlu0 %976
        %v978 = vsel %vm469, %v932, 0.0
        %979 = vadd.xlane.f32.xlu0 %v978
        %v980 = vpop.xlane.xlu0 %979
        %v981 = vmul.f32 %v935, 0.5
        %v982 = vmul.f32 %v938, 0.5
        %v983 = vmul.f32 %v941, 0.5
        %v984 = vmul.f32 %v944, 0.5
        %v985 = vmul.f32 %v947, 0.5
        %v986 = vmul.f32 %v950, 0.5
        %v987 = vmul.f32 %v953, 0.5
        %v988 = vmul.f32 %v956, 0.5
        %v989 = vmul.f32 %v959, 0.5
        %v990 = vmul.f32 %v962, 0.5
        %v991 = vmul.f32 %v965, 0.5
        %v992 = vmul.f32 %v968, 0.5
        %v993 = vmul.f32 %v971, 0.5
        %v994 = vmul.f32 %v974, 0.5
        %v995 = vmul.f32 %v977, 0.5
        %v996 = vmul.f32 %v980, 0.5
        %v997 = vfloor.f32 %v981
        %v998 = vfloor.f32 %v982
        %v999 = vfloor.f32 %v983
        %v1000 = vfloor.f32 %v984
        %v1001 = vfloor.f32 %v985
        %v1002 = vfloor.f32 %v986
        %v1003 = vfloor.f32 %v987
        %v1004 = vfloor.f32 %v988
        %v1005 = vfloor.f32 %v989
        %v1006 = vfloor.f32 %v990
        %v1007 = vfloor.f32 %v991
        %v1008 = vfloor.f32 %v992
        %v1009 = vfloor.f32 %v993
        %v1010 = vfloor.f32 %v994
        %v1011 = vfloor.f32 %v995
        %v1012 = vfloor.f32 %v996
        %v1013 = vmul.f32 %v997, 2.0
        %v1014 = vmul.f32 %v998, 2.0
        %v1015 = vmul.f32 %v999, 2.0
        %v1016 = vmul.f32 %v1000, 2.0
        %v1017 = vmul.f32 %v1001, 2.0
        %v1018 = vmul.f32 %v1002, 2.0
        %v1019 = vmul.f32 %v1003, 2.0
        %v1020 = vmul.f32 %v1004, 2.0
        %v1021 = vmul.f32 %v1005, 2.0
        %v1022 = vmul.f32 %v1006, 2.0
        %v1023 = vmul.f32 %v1007, 2.0
        %v1024 = vmul.f32 %v1008, 2.0
        %v1025 = vmul.f32 %v1009, 2.0
        %v1026 = vmul.f32 %v1010, 2.0
        %v1027 = vmul.f32 %v1011, 2.0
        %v1028 = vmul.f32 %v1012, 2.0
        %v1029 = vsub.f32 %v935, %v1013
        %v1030 = vsub.f32 %v938, %v1014
        %v1031 = vsub.f32 %v941, %v1015
        %v1032 = vsub.f32 %v944, %v1016
        %v1033 = vsub.f32 %v947, %v1017
        %v1034 = vsub.f32 %v950, %v1018
        %v1035 = vsub.f32 %v953, %v1019
        %v1036 = vsub.f32 %v956, %v1020
        %v1037 = vsub.f32 %v959, %v1021
        %v1038 = vsub.f32 %v962, %v1022
        %v1039 = vsub.f32 %v965, %v1023
        %v1040 = vsub.f32 %v968, %v1024
        %v1041 = vsub.f32 %v971, %v1025
        %v1042 = vsub.f32 %v974, %v1026
        %v1043 = vsub.f32 %v977, %v1027
        %v1044 = vsub.f32 %v980, %v1028
        %v1061 = vlaneseq
        %v1062 = vshrl.u32 %v1061, 7
        %v1063 = vsub.s32 %v695, %v1062
        %v1064 = vrot.slane %v1029, %v1063
        %v1065 = vlaneseq
        %v1066 = vshrl.u32 %v1065, 7
        %v1067 = vsub.s32 %v700, %v1066
        %v1068 = vrot.slane %v1030, %v1067
        %v1069 = vsel %vm705, %v1068, %v1064
        %v1070 = vlaneseq
        %v1071 = vshrl.u32 %v1070, 7
        %v1072 = vsub.s32 %v695, %v1071
        %v1073 = vrot.slane %v1031, %v1072
        %v1074 = vlaneseq
        %v1075 = vshrl.u32 %v1074, 7
        %v1076 = vsub.s32 %v700, %v1075
        %v1077 = vrot.slane %v1032, %v1076
        %v1078 = vsel %vm705, %v1077, %v1073
        %v1079 = vlaneseq
        %v1080 = vshrl.u32 %v1079, 7
        %v1081 = vsub.s32 %v695, %v1080
        %v1082 = vrot.slane %v1033, %v1081
        %v1083 = vlaneseq
        %v1084 = vshrl.u32 %v1083, 7
        %v1085 = vsub.s32 %v700, %v1084
        %v1086 = vrot.slane %v1034, %v1085
        %v1087 = vsel %vm705, %v1086, %v1082
        %v1088 = vlaneseq
        %v1089 = vshrl.u32 %v1088, 7
        %v1090 = vsub.s32 %v695, %v1089
        %v1091 = vrot.slane %v1035, %v1090
        %v1092 = vlaneseq
        %v1093 = vshrl.u32 %v1092, 7
        %v1094 = vsub.s32 %v700, %v1093
        %v1095 = vrot.slane %v1036, %v1094
        %v1096 = vsel %vm705, %v1095, %v1091
        %v1097 = vlaneseq
        %v1098 = vshrl.u32 %v1097, 7
        %v1099 = vsub.s32 %v695, %v1098
        %v1100 = vrot.slane %v1037, %v1099
        %v1101 = vlaneseq
        %v1102 = vshrl.u32 %v1101, 7
        %v1103 = vsub.s32 %v700, %v1102
        %v1104 = vrot.slane %v1038, %v1103
        %v1105 = vsel %vm705, %v1104, %v1100
        %v1106 = vlaneseq
        %v1107 = vshrl.u32 %v1106, 7
        %v1108 = vsub.s32 %v695, %v1107
        %v1109 = vrot.slane %v1039, %v1108
        %v1110 = vlaneseq
        %v1111 = vshrl.u32 %v1110, 7
        %v1112 = vsub.s32 %v700, %v1111
        %v1113 = vrot.slane %v1040, %v1112
        %v1114 = vsel %vm705, %v1113, %v1109
        %v1115 = vlaneseq
        %v1116 = vshrl.u32 %v1115, 7
        %v1117 = vsub.s32 %v695, %v1116
        %v1118 = vrot.slane %v1041, %v1117
        %v1119 = vlaneseq
        %v1120 = vshrl.u32 %v1119, 7
        %v1121 = vsub.s32 %v700, %v1120
        %v1122 = vrot.slane %v1042, %v1121
        %v1123 = vsel %vm705, %v1122, %v1118
        %v1124 = vlaneseq
        %v1125 = vshrl.u32 %v1124, 7
        %v1126 = vsub.s32 %v695, %v1125
        %v1127 = vrot.slane %v1043, %v1126
        %v1128 = vlaneseq
        %v1129 = vshrl.u32 %v1128, 7
        %v1130 = vsub.s32 %v700, %v1129
        %v1131 = vrot.slane %v1044, %v1130
        %v1132 = vsel %vm705, %v1131, %v1127
        %v1133 = vsel %vm854, %v1078, %v1069
        %v1134 = vsel %vm855, %v1087, %v1133
        %v1135 = vsel %vm857, %v1096, %v1134
        %v1136 = vsel %vm859, %v1105, %v1135
        %v1137 = vsel %vm861, %v1114, %v1136
        %v1138 = vsel %vm863, %v1123, %v1137
        %v1139 = vsel %vm865, %v1132, %v1138
        %vm1141 = vcmask 130048
        %v1142 = vsel %vm1141, %v1139, 0.0
        %1143 = vadd.xlane.f32.xlu0 %v1142
        %v1144 = vpop.xlane.xlu0 %1143
        %vm1145 = vcmp.eq.f32.partialorder %v1144, 0.0
        %v1146 = vsel %vm1145, 1, 0
        %v1147 = vcvt.s32.f32 %v1146
        %v1148 = vmul.f32 %v315, %v866
        %v1149 = vmul.f32 %v316, %v866
        %v1150 = vmul.f32 %v317, %v866
        %v1151 = vmul.f32 %v318, %v866
        %v1152 = vmul.f32 %v319, %v872
        %v1153 = vmul.f32 %v320, %v872
        %v1154 = vmul.f32 %v321, %v872
        %v1155 = vmul.f32 %v322, %v872
        %v1156 = vmul.f32 %v323, %v878
        %v1157 = vmul.f32 %v324, %v878
        %v1158 = vmul.f32 %v325, %v878
        %v1159 = vmul.f32 %v326, %v878
        %v1160 = vmul.f32 %v327, %v884
        %v1161 = vmul.f32 %v328, %v884
        %v1162 = vmul.f32 %v329, %v884
        %v1163 = vmul.f32 %v330, %v884
        %v1164 = vmul.f32 %v331, %v890
        %v1165 = vmul.f32 %v332, %v890
        %v1166 = vmul.f32 %v333, %v890
        %v1167 = vmul.f32 %v334, %v890
        %v1168 = vmul.f32 %v335, %v896
        %v1169 = vmul.f32 %v336, %v896
        %v1170 = vmul.f32 %v337, %v896
        %v1171 = vmul.f32 %v338, %v896
        %v1172 = vmul.f32 %v339, %v902
        %v1173 = vmul.f32 %v340, %v902
        %v1174 = vmul.f32 %v341, %v902
        %v1175 = vmul.f32 %v342, %v902
        %v1176 = vmul.f32 %v343, %v908
        %v1177 = vmul.f32 %v344, %v908
        %v1178 = vmul.f32 %v345, %v908
        %v1179 = vmul.f32 %v346, %v908
        %v1180 = vsel %vm469, %v1148, 0.0
        %1181 = vadd.xlane.f32.xlu0 %v1180
        %v1182 = vpop.xlane.xlu0 %1181
        %v1183 = vsel %vm469, %v1149, 0.0
        %1184 = vadd.xlane.f32.xlu0 %v1183
        %v1185 = vpop.xlane.xlu0 %1184
        %v1186 = vsel %vm469, %v1150, 0.0
        %1187 = vadd.xlane.f32.xlu0 %v1186
        %v1188 = vpop.xlane.xlu0 %1187
        %v1189 = vsel %vm469, %v1151, 0.0
        %1190 = vadd.xlane.f32.xlu0 %v1189
        %v1191 = vpop.xlane.xlu0 %1190
        %v1192 = vsel %vm469, %v1152, 0.0
        %1193 = vadd.xlane.f32.xlu0 %v1192
        %v1194 = vpop.xlane.xlu0 %1193
        %v1195 = vsel %vm469, %v1153, 0.0
        %1196 = vadd.xlane.f32.xlu0 %v1195
        %v1197 = vpop.xlane.xlu0 %1196
        %v1198 = vsel %vm469, %v1154, 0.0
        %1199 = vadd.xlane.f32.xlu0 %v1198
        %v1200 = vpop.xlane.xlu0 %1199
        %v1201 = vsel %vm469, %v1155, 0.0
        %1202 = vadd.xlane.f32.xlu0 %v1201
        %v1203 = vpop.xlane.xlu0 %1202
        %v1204 = vsel %vm469, %v1156, 0.0
        %1205 = vadd.xlane.f32.xlu0 %v1204
        %v1206 = vpop.xlane.xlu0 %1205
        %v1207 = vsel %vm469, %v1157, 0.0
        %1208 = vadd.xlane.f32.xlu0 %v1207
        %v1209 = vpop.xlane.xlu0 %1208
        %v1210 = vsel %vm469, %v1158, 0.0
        %1211 = vadd.xlane.f32.xlu0 %v1210
        %v1212 = vpop.xlane.xlu0 %1211
        %v1213 = vsel %vm469, %v1159, 0.0
        %1214 = vadd.xlane.f32.xlu0 %v1213
        %v1215 = vpop.xlane.xlu0 %1214
        %v1216 = vsel %vm469, %v1160, 0.0
        %1217 = vadd.xlane.f32.xlu0 %v1216
        %v1218 = vpop.xlane.xlu0 %1217
        %v1219 = vsel %vm469, %v1161, 0.0
        %1220 = vadd.xlane.f32.xlu0 %v1219
        %v1221 = vpop.xlane.xlu0 %1220
        %v1222 = vsel %vm469, %v1162, 0.0
        %1223 = vadd.xlane.f32.xlu0 %v1222
        %v1224 = vpop.xlane.xlu0 %1223
        %v1225 = vsel %vm469, %v1163, 0.0
        %1226 = vadd.xlane.f32.xlu0 %v1225
        %v1227 = vpop.xlane.xlu0 %1226
        %v1228 = vsel %vm469, %v1164, 0.0
        %1229 = vadd.xlane.f32.xlu0 %v1228
        %v1230 = vpop.xlane.xlu0 %1229
        %v1231 = vsel %vm469, %v1165, 0.0
        %1232 = vadd.xlane.f32.xlu0 %v1231
        %v1233 = vpop.xlane.xlu0 %1232
        %v1234 = vsel %vm469, %v1166, 0.0
        %1235 = vadd.xlane.f32.xlu0 %v1234
        %v1236 = vpop.xlane.xlu0 %1235
        %v1237 = vsel %vm469, %v1167, 0.0
        %1238 = vadd.xlane.f32.xlu0 %v1237
        %v1239 = vpop.xlane.xlu0 %1238
        %v1240 = vsel %vm469, %v1168, 0.0
        %1241 = vadd.xlane.f32.xlu0 %v1240
        %v1242 = vpop.xlane.xlu0 %1241
        %v1243 = vsel %vm469, %v1169, 0.0
        %1244 = vadd.xlane.f32.xlu0 %v1243
        %v1245 = vpop.xlane.xlu0 %1244
        %v1246 = vsel %vm469, %v1170, 0.0
        %1247 = vadd.xlane.f32.xlu0 %v1246
        %v1248 = vpop.xlane.xlu0 %1247
        %v1249 = vsel %vm469, %v1171, 0.0
        %1250 = vadd.xlane.f32.xlu0 %v1249
        %v1251 = vpop.xlane.xlu0 %1250
        %v1252 = vsel %vm469, %v1172, 0.0
        %1253 = vadd.xlane.f32.xlu0 %v1252
        %v1254 = vpop.xlane.xlu0 %1253
        %v1255 = vsel %vm469, %v1173, 0.0
        %1256 = vadd.xlane.f32.xlu0 %v1255
        %v1257 = vpop.xlane.xlu0 %1256
        %v1258 = vsel %vm469, %v1174, 0.0
        %1259 = vadd.xlane.f32.xlu0 %v1258
        %v1260 = vpop.xlane.xlu0 %1259
        %v1261 = vsel %vm469, %v1175, 0.0
        %1262 = vadd.xlane.f32.xlu0 %v1261
        %v1263 = vpop.xlane.xlu0 %1262
        %v1264 = vsel %vm469, %v1176, 0.0
        %1265 = vadd.xlane.f32.xlu0 %v1264
        %v1266 = vpop.xlane.xlu0 %1265
        %v1267 = vsel %vm469, %v1177, 0.0
        %1268 = vadd.xlane.f32.xlu0 %v1267
        %v1269 = vpop.xlane.xlu0 %1268
        %v1270 = vsel %vm469, %v1178, 0.0
        %1271 = vadd.xlane.f32.xlu0 %v1270
        %v1272 = vpop.xlane.xlu0 %1271
        %v1273 = vsel %vm469, %v1179, 0.0
        %1274 = vadd.xlane.f32.xlu0 %v1273
        %v1275 = vpop.xlane.xlu0 %1274
        %v1308 = vlaneseq
        %v1309 = vshrl.u32 %v1308, 7
        %v1310 = vsub.s32 %v695, %v1309
        %v1311 = vrot.slane %v472, %v1310
        %v1312 = vlaneseq
        %v1313 = vshrl.u32 %v1312, 7
        %v1314 = vsub.s32 %v700, %v1313
        %v1315 = vrot.slane %v475, %v1314
        %v1316 = vsel %vm705, %v1315, %v1311
        %v1317 = vlaneseq
        %v1318 = vshrl.u32 %v1317, 7
        %v1319 = vsub.s32 %v707, %v1318
        %v1320 = vrot.slane %v478, %v1319
        %v1321 = vsel %vm712, %v1320, %v1316
        %v1322 = vlaneseq
        %v1323 = vshrl.u32 %v1322, 7
        %v1324 = vsub.s32 %v714, %v1323
        %v1325 = vrot.slane %v481, %v1324
        %v1326 = vsel %vm719, %v1325, %v1321
        %v1327 = vlaneseq
        %v1328 = vshrl.u32 %v1327, 7
        %v1329 = vsub.s32 %v695, %v1328
        %v1330 = vrot.slane %v484, %v1329
        %v1331 = vlaneseq
        %v1332 = vshrl.u32 %v1331, 7
        %v1333 = vsub.s32 %v700, %v1332
        %v1334 = vrot.slane %v487, %v1333
        %v1335 = vsel %vm705, %v1334, %v1330
        %v1336 = vlaneseq
        %v1337 = vshrl.u32 %v1336, 7
        %v1338 = vsub.s32 %v707, %v1337
        %v1339 = vrot.slane %v490, %v1338
        %v1340 = vsel %vm712, %v1339, %v1335
        %v1341 = vlaneseq
        %v1342 = vshrl.u32 %v1341, 7
        %v1343 = vsub.s32 %v714, %v1342
        %v1344 = vrot.slane %v493, %v1343
        %v1345 = vsel %vm719, %v1344, %v1340
        %v1346 = vlaneseq
        %v1347 = vshrl.u32 %v1346, 7
        %v1348 = vsub.s32 %v695, %v1347
        %v1349 = vrot.slane %v496, %v1348
        %v1350 = vlaneseq
        %v1351 = vshrl.u32 %v1350, 7
        %v1352 = vsub.s32 %v700, %v1351
        %v1353 = vrot.slane %v499, %v1352
        %v1354 = vsel %vm705, %v1353, %v1349
        %v1355 = vlaneseq
        %v1356 = vshrl.u32 %v1355, 7
        %v1357 = vsub.s32 %v707, %v1356
        %v1358 = vrot.slane %v502, %v1357
        %v1359 = vsel %vm712, %v1358, %v1354
        %v1360 = vlaneseq
        %v1361 = vshrl.u32 %v1360, 7
        %v1362 = vsub.s32 %v714, %v1361
        %v1363 = vrot.slane %v505, %v1362
        %v1364 = vsel %vm719, %v1363, %v1359
        %v1365 = vlaneseq
        %v1366 = vshrl.u32 %v1365, 7
        %v1367 = vsub.s32 %v695, %v1366
        %v1368 = vrot.slane %v508, %v1367
        %v1369 = vlaneseq
        %v1370 = vshrl.u32 %v1369, 7
        %v1371 = vsub.s32 %v700, %v1370
        %v1372 = vrot.slane %v511, %v1371
        %v1373 = vsel %vm705, %v1372, %v1368
        %v1374 = vlaneseq
        %v1375 = vshrl.u32 %v1374, 7
        %v1376 = vsub.s32 %v707, %v1375
        %v1377 = vrot.slane %v514, %v1376
        %v1378 = vsel %vm712, %v1377, %v1373
        %v1379 = vlaneseq
        %v1380 = vshrl.u32 %v1379, 7
        %v1381 = vsub.s32 %v714, %v1380
        %v1382 = vrot.slane %v517, %v1381
        %v1383 = vsel %vm719, %v1382, %v1378
        %v1384 = vlaneseq
        %v1385 = vshrl.u32 %v1384, 7
        %v1386 = vsub.s32 %v695, %v1385
        %v1387 = vrot.slane %v520, %v1386
        %v1388 = vlaneseq
        %v1389 = vshrl.u32 %v1388, 7
        %v1390 = vsub.s32 %v700, %v1389
        %v1391 = vrot.slane %v523, %v1390
        %v1392 = vsel %vm705, %v1391, %v1387
        %v1393 = vlaneseq
        %v1394 = vshrl.u32 %v1393, 7
        %v1395 = vsub.s32 %v707, %v1394
        %v1396 = vrot.slane %v526, %v1395
        %v1397 = vsel %vm712, %v1396, %v1392
        %v1398 = vlaneseq
        %v1399 = vshrl.u32 %v1398, 7
        %v1400 = vsub.s32 %v714, %v1399
        %v1401 = vrot.slane %v529, %v1400
        %v1402 = vsel %vm719, %v1401, %v1397
        %v1403 = vlaneseq
        %v1404 = vshrl.u32 %v1403, 7
        %v1405 = vsub.s32 %v695, %v1404
        %v1406 = vrot.slane %v532, %v1405
        %v1407 = vlaneseq
        %v1408 = vshrl.u32 %v1407, 7
        %v1409 = vsub.s32 %v700, %v1408
        %v1410 = vrot.slane %v535, %v1409
        %v1411 = vsel %vm705, %v1410, %v1406
        %v1412 = vlaneseq
        %v1413 = vshrl.u32 %v1412, 7
        %v1414 = vsub.s32 %v707, %v1413
        %v1415 = vrot.slane %v538, %v1414
        %v1416 = vsel %vm712, %v1415, %v1411
        %v1417 = vlaneseq
        %v1418 = vshrl.u32 %v1417, 7
        %v1419 = vsub.s32 %v714, %v1418
        %v1420 = vrot.slane %v541, %v1419
        %v1421 = vsel %vm719, %v1420, %v1416
        %v1422 = vlaneseq
        %v1423 = vshrl.u32 %v1422, 7
        %v1424 = vsub.s32 %v695, %v1423
        %v1425 = vrot.slane %v544, %v1424
        %v1426 = vlaneseq
        %v1427 = vshrl.u32 %v1426, 7
        %v1428 = vsub.s32 %v700, %v1427
        %v1429 = vrot.slane %v547, %v1428
        %v1430 = vsel %vm705, %v1429, %v1425
        %v1431 = vlaneseq
        %v1432 = vshrl.u32 %v1431, 7
        %v1433 = vsub.s32 %v707, %v1432
        %v1434 = vrot.slane %v550, %v1433
        %v1435 = vsel %vm712, %v1434, %v1430
        %v1436 = vlaneseq
        %v1437 = vshrl.u32 %v1436, 7
        %v1438 = vsub.s32 %v714, %v1437
        %v1439 = vrot.slane %v553, %v1438
        %v1440 = vsel %vm719, %v1439, %v1435
        %v1441 = vlaneseq
        %v1442 = vshrl.u32 %v1441, 7
        %v1443 = vsub.s32 %v695, %v1442
        %v1444 = vrot.slane %v556, %v1443
        %v1445 = vlaneseq
        %v1446 = vshrl.u32 %v1445, 7
        %v1447 = vsub.s32 %v700, %v1446
        %v1448 = vrot.slane %v559, %v1447
        %v1449 = vsel %vm705, %v1448, %v1444
        %v1450 = vlaneseq
        %v1451 = vshrl.u32 %v1450, 7
        %v1452 = vsub.s32 %v707, %v1451
        %v1453 = vrot.slane %v562, %v1452
        %v1454 = vsel %vm712, %v1453, %v1449
        %v1455 = vlaneseq
        %v1456 = vshrl.u32 %v1455, 7
        %v1457 = vsub.s32 %v714, %v1456
        %v1458 = vrot.slane %v565, %v1457
        %v1459 = vsel %vm719, %v1458, %v1454
        %v1460 = vsel %vm855, %v1326, %v1326
        %v1461 = vsel %vm857, %v1326, %v1460
        %v1462 = vsel %vm859, %v1326, %v1461
        %v1463 = vsel %vm861, %v1326, %v1462
        %v1464 = vsel %vm863, %v1326, %v1463
        %v1465 = vsel %vm865, %v1326, %v1464
        %v1466 = vsel %vm855, %v1345, %v1345
        %v1467 = vsel %vm857, %v1345, %v1466
        %v1468 = vsel %vm859, %v1345, %v1467
        %v1469 = vsel %vm861, %v1345, %v1468
        %v1470 = vsel %vm863, %v1345, %v1469
        %v1471 = vsel %vm865, %v1345, %v1470
        %v1472 = vsel %vm855, %v1364, %v1364
        %v1473 = vsel %vm857, %v1364, %v1472
        %v1474 = vsel %vm859, %v1364, %v1473
        %v1475 = vsel %vm861, %v1364, %v1474
        %v1476 = vsel %vm863, %v1364, %v1475
        %v1477 = vsel %vm865, %v1364, %v1476
        %v1478 = vsel %vm855, %v1383, %v1383
        %v1479 = vsel %vm857, %v1383, %v1478
        %v1480 = vsel %vm859, %v1383, %v1479
        %v1481 = vsel %vm861, %v1383, %v1480
        %v1482 = vsel %vm863, %v1383, %v1481
        %v1483 = vsel %vm865, %v1383, %v1482
        %v1484 = vsel %vm855, %v1402, %v1402
        %v1485 = vsel %vm857, %v1402, %v1484
        %v1486 = vsel %vm859, %v1402, %v1485
        %v1487 = vsel %vm861, %v1402, %v1486
        %v1488 = vsel %vm863, %v1402, %v1487
        %v1489 = vsel %vm865, %v1402, %v1488
        %v1490 = vsel %vm855, %v1421, %v1421
        %v1491 = vsel %vm857, %v1421, %v1490
        %v1492 = vsel %vm859, %v1421, %v1491
        %v1493 = vsel %vm861, %v1421, %v1492
        %v1494 = vsel %vm863, %v1421, %v1493
        %v1495 = vsel %vm865, %v1421, %v1494
        %v1496 = vsel %vm855, %v1440, %v1440
        %v1497 = vsel %vm857, %v1440, %v1496
        %v1498 = vsel %vm859, %v1440, %v1497
        %v1499 = vsel %vm861, %v1440, %v1498
        %v1500 = vsel %vm863, %v1440, %v1499
        %v1501 = vsel %vm865, %v1440, %v1500
        %v1502 = vsel %vm855, %v1459, %v1459
        %v1503 = vsel %vm857, %v1459, %v1502
        %v1504 = vsel %vm859, %v1459, %v1503
        %v1505 = vsel %vm861, %v1459, %v1504
        %v1506 = vsel %vm863, %v1459, %v1505
        %v1507 = vsel %vm865, %v1459, %v1506
        %v1516 = vmul.f32 %v315, %v1465
        %v1517 = vmul.f32 %v316, %v1465
        %v1518 = vmul.f32 %v317, %v1465
        %v1519 = vmul.f32 %v318, %v1465
        %v1520 = vmul.f32 %v319, %v1471
        %v1521 = vmul.f32 %v320, %v1471
        %v1522 = vmul.f32 %v321, %v1471
        %v1523 = vmul.f32 %v322, %v1471
        %v1524 = vmul.f32 %v323, %v1477
        %v1525 = vmul.f32 %v324, %v1477
        %v1526 = vmul.f32 %v325, %v1477
        %v1527 = vmul.f32 %v326, %v1477
        %v1528 = vmul.f32 %v327, %v1483
        %v1529 = vmul.f32 %v328, %v1483
        %v1530 = vmul.f32 %v329, %v1483
        %v1531 = vmul.f32 %v330, %v1483
        %v1532 = vmul.f32 %v331, %v1489
        %v1533 = vmul.f32 %v332, %v1489
        %v1534 = vmul.f32 %v333, %v1489
        %v1535 = vmul.f32 %v334, %v1489
        %v1536 = vmul.f32 %v335, %v1495
        %v1537 = vmul.f32 %v336, %v1495
        %v1538 = vmul.f32 %v337, %v1495
        %v1539 = vmul.f32 %v338, %v1495
        %v1540 = vmul.f32 %v339, %v1501
        %v1541 = vmul.f32 %v340, %v1501
        %v1542 = vmul.f32 %v341, %v1501
        %v1543 = vmul.f32 %v342, %v1501
        %v1544 = vmul.f32 %v343, %v1507
        %v1545 = vmul.f32 %v344, %v1507
        %v1546 = vmul.f32 %v345, %v1507
        %v1547 = vmul.f32 %v346, %v1507
        %v1548 = vsel %vm469, %v1516, 0.0
        %1549 = vadd.xlane.f32.xlu0 %v1548
        %v1550 = vpop.xlane.xlu0 %1549
        %v1551 = vsel %vm469, %v1517, 0.0
        %1552 = vadd.xlane.f32.xlu0 %v1551
        %v1553 = vpop.xlane.xlu0 %1552
        %v1554 = vsel %vm469, %v1518, 0.0
        %1555 = vadd.xlane.f32.xlu0 %v1554
        %v1556 = vpop.xlane.xlu0 %1555
        %v1557 = vsel %vm469, %v1519, 0.0
        %1558 = vadd.xlane.f32.xlu0 %v1557
        %v1559 = vpop.xlane.xlu0 %1558
        %v1560 = vsel %vm469, %v1520, 0.0
        %1561 = vadd.xlane.f32.xlu0 %v1560
        %v1562 = vpop.xlane.xlu0 %1561
        %v1563 = vsel %vm469, %v1521, 0.0
        %1564 = vadd.xlane.f32.xlu0 %v1563
        %v1565 = vpop.xlane.xlu0 %1564
        %v1566 = vsel %vm469, %v1522, 0.0
        %1567 = vadd.xlane.f32.xlu0 %v1566
        %v1568 = vpop.xlane.xlu0 %1567
        %v1569 = vsel %vm469, %v1523, 0.0
        %1570 = vadd.xlane.f32.xlu0 %v1569
        %v1571 = vpop.xlane.xlu0 %1570
        %v1572 = vsel %vm469, %v1524, 0.0
        %1573 = vadd.xlane.f32.xlu0 %v1572
        %v1574 = vpop.xlane.xlu0 %1573
        %v1575 = vsel %vm469, %v1525, 0.0
        %1576 = vadd.xlane.f32.xlu0 %v1575
        %v1577 = vpop.xlane.xlu0 %1576
        %v1578 = vsel %vm469, %v1526, 0.0
        %1579 = vadd.xlane.f32.xlu0 %v1578
        %v1580 = vpop.xlane.xlu0 %1579
        %v1581 = vsel %vm469, %v1527, 0.0
        %1582 = vadd.xlane.f32.xlu0 %v1581
        %v1583 = vpop.xlane.xlu0 %1582
        %v1584 = vsel %vm469, %v1528, 0.0
        %1585 = vadd.xlane.f32.xlu0 %v1584
        %v1586 = vpop.xlane.xlu0 %1585
        %v1587 = vsel %vm469, %v1529, 0.0
        %1588 = vadd.xlane.f32.xlu0 %v1587
        %v1589 = vpop.xlane.xlu0 %1588
        %v1590 = vsel %vm469, %v1530, 0.0
        %1591 = vadd.xlane.f32.xlu0 %v1590
        %v1592 = vpop.xlane.xlu0 %1591
        %v1593 = vsel %vm469, %v1531, 0.0
        %1594 = vadd.xlane.f32.xlu0 %v1593
        %v1595 = vpop.xlane.xlu0 %1594
        %v1596 = vsel %vm469, %v1532, 0.0
        %1597 = vadd.xlane.f32.xlu0 %v1596
        %v1598 = vpop.xlane.xlu0 %1597
        %v1599 = vsel %vm469, %v1533, 0.0
        %1600 = vadd.xlane.f32.xlu0 %v1599
        %v1601 = vpop.xlane.xlu0 %1600
        %v1602 = vsel %vm469, %v1534, 0.0
        %1603 = vadd.xlane.f32.xlu0 %v1602
        %v1604 = vpop.xlane.xlu0 %1603
        %v1605 = vsel %vm469, %v1535, 0.0
        %1606 = vadd.xlane.f32.xlu0 %v1605
        %v1607 = vpop.xlane.xlu0 %1606
        %v1608 = vsel %vm469, %v1536, 0.0
        %1609 = vadd.xlane.f32.xlu0 %v1608
        %v1610 = vpop.xlane.xlu0 %1609
        %v1611 = vsel %vm469, %v1537, 0.0
        %1612 = vadd.xlane.f32.xlu0 %v1611
        %v1613 = vpop.xlane.xlu0 %1612
        %v1614 = vsel %vm469, %v1538, 0.0
        %1615 = vadd.xlane.f32.xlu0 %v1614
        %v1616 = vpop.xlane.xlu0 %1615
        %v1617 = vsel %vm469, %v1539, 0.0
        %1618 = vadd.xlane.f32.xlu0 %v1617
        %v1619 = vpop.xlane.xlu0 %1618
        %v1620 = vsel %vm469, %v1540, 0.0
        %1621 = vadd.xlane.f32.xlu0 %v1620
        %v1622 = vpop.xlane.xlu0 %1621
        %v1623 = vsel %vm469, %v1541, 0.0
        %1624 = vadd.xlane.f32.xlu0 %v1623
        %v1625 = vpop.xlane.xlu0 %1624
        %v1626 = vsel %vm469, %v1542, 0.0
        %1627 = vadd.xlane.f32.xlu0 %v1626
        %v1628 = vpop.xlane.xlu0 %1627
        %v1629 = vsel %vm469, %v1543, 0.0
        %1630 = vadd.xlane.f32.xlu0 %v1629
        %v1631 = vpop.xlane.xlu0 %1630
        %v1632 = vsel %vm469, %v1544, 0.0
        %1633 = vadd.xlane.f32.xlu0 %v1632
        %v1634 = vpop.xlane.xlu0 %1633
        %v1635 = vsel %vm469, %v1545, 0.0
        %1636 = vadd.xlane.f32.xlu0 %v1635
        %v1637 = vpop.xlane.xlu0 %1636
        %v1638 = vsel %vm469, %v1546, 0.0
        %1639 = vadd.xlane.f32.xlu0 %v1638
        %v1640 = vpop.xlane.xlu0 %1639
        %v1641 = vsel %vm469, %v1547, 0.0
        %1642 = vadd.xlane.f32.xlu0 %v1641
        %v1643 = vpop.xlane.xlu0 %1642
        %v1644 = vrot.slane %v1147, 4
        %v1645 = vmin.f32 %v1147, %v1644
        %v1646 = vrot.slane %v1645, 2
        %v1647 = vmin.f32 %v1645, %v1646
        %v1648 = vrot.slane %v1647, 1
        %v1649 = vmin.f32 %v1647, %v1648
        %vm1650 = vcmp.ge.f32.partialorder %v1649, 1.0
        %s1651 = scalar_lea.vmem %s254, 256
        %v1652 = vld [vmem:[%s1651] sm:$0xff]
        %v1653 = vld [vmem:[%s1651 + $0x8] sm:$0xff]
        %v1654 = vld [vmem:[%s1651 + $0x10] sm:$0xff]
        %v1655 = vld [vmem:[%s1651 + $0x18] sm:$0xff]
        %v1656 = vld [vmem:[%s1651 + $0x20] sm:$0xff]
        %v1657 = vld [vmem:[%s1651 + $0x28] sm:$0xff]
        %v1658 = vld [vmem:[%s1651 + $0x30] sm:$0xff]
        %v1659 = vld [vmem:[%s1651 + $0x38] sm:$0xff]
        %v1660 = vld [vmem:[%s1651 + $0x40] sm:$0xff]
        %v1661 = vld [vmem:[%s1651 + $0x48] sm:$0xff]
        %v1662 = vld [vmem:[%s1651 + $0x50] sm:$0xff]
        %v1663 = vld [vmem:[%s1651 + $0x58] sm:$0xff]
        %v1664 = vld [vmem:[%s1651 + $0x60] sm:$0xff]
        %v1665 = vld [vmem:[%s1651 + $0x68] sm:$0xff]
        %v1666 = vld [vmem:[%s1651 + $0x70] sm:$0xff]
        %v1667 = vld [vmem:[%s1651 + $0x78] sm:$0xff]
        %v1668 = vld [vmem:[%s1651 + $0x80] sm:$0xff]
        %v1669 = vld [vmem:[%s1651 + $0x88] sm:$0xff]
        %v1670 = vld [vmem:[%s1651 + $0x90] sm:$0xff]
        %v1671 = vld [vmem:[%s1651 + $0x98] sm:$0xff]
        %v1672 = vld [vmem:[%s1651 + $0xa0] sm:$0xff]
        %v1673 = vld [vmem:[%s1651 + $0xa8] sm:$0xff]
        %v1674 = vld [vmem:[%s1651 + $0xb0] sm:$0xff]
        %v1675 = vld [vmem:[%s1651 + $0xb8] sm:$0xff]
        %v1676 = vld [vmem:[%s1651 + $0xc0] sm:$0xff]
        %v1677 = vld [vmem:[%s1651 + $0xc8] sm:$0xff]
        %v1678 = vld [vmem:[%s1651 + $0xd0] sm:$0xff]
        %v1679 = vld [vmem:[%s1651 + $0xd8] sm:$0xff]
        %v1680 = vld [vmem:[%s1651 + $0xe0] sm:$0xff]
        %v1681 = vld [vmem:[%s1651 + $0xe8] sm:$0xff]
        %v1682 = vld [vmem:[%s1651 + $0xf0] sm:$0xff]
        %v1683 = vld [vmem:[%s1651 + $0xf8] sm:$0xff]
        %s1684 = scalar_lea.vmem %s261, 256
        %v1685 = vld [vmem:[%s1684] sm:$0xff]
        %v1686 = vld [vmem:[%s1684 + $0x8] sm:$0xff]
        %v1687 = vld [vmem:[%s1684 + $0x10] sm:$0xff]
        %v1688 = vld [vmem:[%s1684 + $0x18] sm:$0xff]
        %v1689 = vld [vmem:[%s1684 + $0x20] sm:$0xff]
        %v1690 = vld [vmem:[%s1684 + $0x28] sm:$0xff]
        %v1691 = vld [vmem:[%s1684 + $0x30] sm:$0xff]
        %v1692 = vld [vmem:[%s1684 + $0x38] sm:$0xff]
        %v1693 = vld [vmem:[%s1684 + $0x40] sm:$0xff]
        %v1694 = vld [vmem:[%s1684 + $0x48] sm:$0xff]
        %v1695 = vld [vmem:[%s1684 + $0x50] sm:$0xff]
        %v1696 = vld [vmem:[%s1684 + $0x58] sm:$0xff]
        %v1697 = vld [vmem:[%s1684 + $0x60] sm:$0xff]
        %v1698 = vld [vmem:[%s1684 + $0x68] sm:$0xff]
        %v1699 = vld [vmem:[%s1684 + $0x70] sm:$0xff]
        %v1700 = vld [vmem:[%s1684 + $0x78] sm:$0xff]
        %v1701 = vld [vmem:[%s1684 + $0x80] sm:$0xff]
        %v1702 = vld [vmem:[%s1684 + $0x88] sm:$0xff]
        %v1703 = vld [vmem:[%s1684 + $0x90] sm:$0xff]
        %v1704 = vld [vmem:[%s1684 + $0x98] sm:$0xff]
        %v1705 = vld [vmem:[%s1684 + $0xa0] sm:$0xff]
        %v1706 = vld [vmem:[%s1684 + $0xa8] sm:$0xff]
        %v1707 = vld [vmem:[%s1684 + $0xb0] sm:$0xff]
        %v1708 = vld [vmem:[%s1684 + $0xb8] sm:$0xff]
        %v1709 = vld [vmem:[%s1684 + $0xc0] sm:$0xff]
        %v1710 = vld [vmem:[%s1684 + $0xc8] sm:$0xff]
        %v1711 = vld [vmem:[%s1684 + $0xd0] sm:$0xff]
        %v1712 = vld [vmem:[%s1684 + $0xd8] sm:$0xff]
        %v1713 = vld [vmem:[%s1684 + $0xe0] sm:$0xff]
        %v1714 = vld [vmem:[%s1684 + $0xe8] sm:$0xff]
        %v1715 = vld [vmem:[%s1684 + $0xf0] sm:$0xff]
        %v1716 = vld [vmem:[%s1684 + $0xf8] sm:$0xff]
        %v1749 = vlaneseq
        %v1750 = vshrl.u32 %v1749, 7
        %v1751 = vsub.s32 %v695, %v1750
        %v1752 = vrot.slane %v1550, %v1751
        %v1753 = vlaneseq
        %v1754 = vshrl.u32 %v1753, 7
        %v1755 = vsub.s32 %v700, %v1754
        %v1756 = vrot.slane %v1553, %v1755
        %v1757 = vsel %vm705, %v1756, %v1752
        %v1758 = vlaneseq
        %v1759 = vshrl.u32 %v1758, 7
        %v1760 = vsub.s32 %v707, %v1759
        %v1761 = vrot.slane %v1556, %v1760
        %v1762 = vsel %vm712, %v1761, %v1757
        %v1763 = vlaneseq
        %v1764 = vshrl.u32 %v1763, 7
        %v1765 = vsub.s32 %v714, %v1764
        %v1766 = vrot.slane %v1559, %v1765
        %v1767 = vsel %vm719, %v1766, %v1762
        %v1768 = vlaneseq
        %v1769 = vshrl.u32 %v1768, 7
        %v1770 = vsub.s32 %v695, %v1769
        %v1771 = vrot.slane %v1562, %v1770
        %v1772 = vlaneseq
        %v1773 = vshrl.u32 %v1772, 7
        %v1774 = vsub.s32 %v700, %v1773
        %v1775 = vrot.slane %v1565, %v1774
        %v1776 = vsel %vm705, %v1775, %v1771
        %v1777 = vlaneseq
        %v1778 = vshrl.u32 %v1777, 7
        %v1779 = vsub.s32 %v707, %v1778
        %v1780 = vrot.slane %v1568, %v1779
        %v1781 = vsel %vm712, %v1780, %v1776
        %v1782 = vlaneseq
        %v1783 = vshrl.u32 %v1782, 7
        %v1784 = vsub.s32 %v714, %v1783
        %v1785 = vrot.slane %v1571, %v1784
        %v1786 = vsel %vm719, %v1785, %v1781
        %v1787 = vlaneseq
        %v1788 = vshrl.u32 %v1787, 7
        %v1789 = vsub.s32 %v695, %v1788
        %v1790 = vrot.slane %v1574, %v1789
        %v1791 = vlaneseq
        %v1792 = vshrl.u32 %v1791, 7
        %v1793 = vsub.s32 %v700, %v1792
        %v1794 = vrot.slane %v1577, %v1793
        %v1795 = vsel %vm705, %v1794, %v1790
        %v1796 = vlaneseq
        %v1797 = vshrl.u32 %v1796, 7
        %v1798 = vsub.s32 %v707, %v1797
        %v1799 = vrot.slane %v1580, %v1798
        %v1800 = vsel %vm712, %v1799, %v1795
        %v1801 = vlaneseq
        %v1802 = vshrl.u32 %v1801, 7
        %v1803 = vsub.s32 %v714, %v1802
        %v1804 = vrot.slane %v1583, %v1803
        %v1805 = vsel %vm719, %v1804, %v1800
        %v1806 = vlaneseq
        %v1807 = vshrl.u32 %v1806, 7
        %v1808 = vsub.s32 %v695, %v1807
        %v1809 = vrot.slane %v1586, %v1808
        %v1810 = vlaneseq
        %v1811 = vshrl.u32 %v1810, 7
        %v1812 = vsub.s32 %v700, %v1811
        %v1813 = vrot.slane %v1589, %v1812
        %v1814 = vsel %vm705, %v1813, %v1809
        %v1815 = vlaneseq
        %v1816 = vshrl.u32 %v1815, 7
        %v1817 = vsub.s32 %v707, %v1816
        %v1818 = vrot.slane %v1592, %v1817
        %v1819 = vsel %vm712, %v1818, %v1814
        %v1820 = vlaneseq
        %v1821 = vshrl.u32 %v1820, 7
        %v1822 = vsub.s32 %v714, %v1821
        %v1823 = vrot.slane %v1595, %v1822
        %v1824 = vsel %vm719, %v1823, %v1819
        %v1825 = vlaneseq
        %v1826 = vshrl.u32 %v1825, 7
        %v1827 = vsub.s32 %v695, %v1826
        %v1828 = vrot.slane %v1598, %v1827
        %v1829 = vlaneseq
        %v1830 = vshrl.u32 %v1829, 7
        %v1831 = vsub.s32 %v700, %v1830
        %v1832 = vrot.slane %v1601, %v1831
        %v1833 = vsel %vm705, %v1832, %v1828
        %v1834 = vlaneseq
        %v1835 = vshrl.u32 %v1834, 7
        %v1836 = vsub.s32 %v707, %v1835
        %v1837 = vrot.slane %v1604, %v1836
        %v1838 = vsel %vm712, %v1837, %v1833
        %v1839 = vlaneseq
        %v1840 = vshrl.u32 %v1839, 7
        %v1841 = vsub.s32 %v714, %v1840
        %v1842 = vrot.slane %v1607, %v1841
        %v1843 = vsel %vm719, %v1842, %v1838
        %v1844 = vlaneseq
        %v1845 = vshrl.u32 %v1844, 7
        %v1846 = vsub.s32 %v695, %v1845
        %v1847 = vrot.slane %v1610, %v1846
        %v1848 = vlaneseq
        %v1849 = vshrl.u32 %v1848, 7
        %v1850 = vsub.s32 %v700, %v1849
        %v1851 = vrot.slane %v1613, %v1850
        %v1852 = vsel %vm705, %v1851, %v1847
        %v1853 = vlaneseq
        %v1854 = vshrl.u32 %v1853, 7
        %v1855 = vsub.s32 %v707, %v1854
        %v1856 = vrot.slane %v1616, %v1855
        %v1857 = vsel %vm712, %v1856, %v1852
        %v1858 = vlaneseq
        %v1859 = vshrl.u32 %v1858, 7
        %v1860 = vsub.s32 %v714, %v1859
        %v1861 = vrot.slane %v1619, %v1860
        %v1862 = vsel %vm719, %v1861, %v1857
        %v1863 = vlaneseq
        %v1864 = vshrl.u32 %v1863, 7
        %v1865 = vsub.s32 %v695, %v1864
        %v1866 = vrot.slane %v1622, %v1865
        %v1867 = vlaneseq
        %v1868 = vshrl.u32 %v1867, 7
        %v1869 = vsub.s32 %v700, %v1868
        %v1870 = vrot.slane %v1625, %v1869
        %v1871 = vsel %vm705, %v1870, %v1866
        %v1872 = vlaneseq
        %v1873 = vshrl.u32 %v1872, 7
        %v1874 = vsub.s32 %v707, %v1873
        %v1875 = vrot.slane %v1628, %v1874
        %v1876 = vsel %vm712, %v1875, %v1871
        %v1877 = vlaneseq
        %v1878 = vshrl.u32 %v1877, 7
        %v1879 = vsub.s32 %v714, %v1878
        %v1880 = vrot.slane %v1631, %v1879
        %v1881 = vsel %vm719, %v1880, %v1876
        %v1882 = vlaneseq
        %v1883 = vshrl.u32 %v1882, 7
        %v1884 = vsub.s32 %v695, %v1883
        %v1885 = vrot.slane %v1634, %v1884
        %v1886 = vlaneseq
        %v1887 = vshrl.u32 %v1886, 7
        %v1888 = vsub.s32 %v700, %v1887
        %v1889 = vrot.slane %v1637, %v1888
        %v1890 = vsel %vm705, %v1889, %v1885
        %v1891 = vlaneseq
        %v1892 = vshrl.u32 %v1891, 7
        %v1893 = vsub.s32 %v707, %v1892
        %v1894 = vrot.slane %v1640, %v1893
        %v1895 = vsel %vm712, %v1894, %v1890
        %v1896 = vlaneseq
        %v1897 = vshrl.u32 %v1896, 7
        %v1898 = vsub.s32 %v714, %v1897
        %v1899 = vrot.slane %v1643, %v1898
        %v1900 = vsel %vm719, %v1899, %v1895
        %v1901 = vsel %vm855, %v1767, %v1767
        %v1902 = vsel %vm857, %v1767, %v1901
        %v1903 = vsel %vm859, %v1767, %v1902
        %v1904 = vsel %vm861, %v1767, %v1903
        %v1905 = vsel %vm863, %v1767, %v1904
        %v1906 = vsel %vm865, %v1767, %v1905
        %v1907 = vsel %vm855, %v1786, %v1786
        %v1908 = vsel %vm857, %v1786, %v1907
        %v1909 = vsel %vm859, %v1786, %v1908
        %v1910 = vsel %vm861, %v1786, %v1909
        %v1911 = vsel %vm863, %v1786, %v1910
        %v1912 = vsel %vm865, %v1786, %v1911
        %v1913 = vsel %vm855, %v1805, %v1805
        %v1914 = vsel %vm857, %v1805, %v1913
        %v1915 = vsel %vm859, %v1805, %v1914
        %v1916 = vsel %vm861, %v1805, %v1915
        %v1917 = vsel %vm863, %v1805, %v1916
        %v1918 = vsel %vm865, %v1805, %v1917
        %v1919 = vsel %vm855, %v1824, %v1824
        %v1920 = vsel %vm857, %v1824, %v1919
        %v1921 = vsel %vm859, %v1824, %v1920
        %v1922 = vsel %vm861, %v1824, %v1921
        %v1923 = vsel %vm863, %v1824, %v1922
        %v1924 = vsel %vm865, %v1824, %v1923
        %v1925 = vsel %vm855, %v1843, %v1843
        %v1926 = vsel %vm857, %v1843, %v1925
        %v1927 = vsel %vm859, %v1843, %v1926
        %v1928 = vsel %vm861, %v1843, %v1927
        %v1929 = vsel %vm863, %v1843, %v1928
        %v1930 = vsel %vm865, %v1843, %v1929
        %v1931 = vsel %vm855, %v1862, %v1862
        %v1932 = vsel %vm857, %v1862, %v1931
        %v1933 = vsel %vm859, %v1862, %v1932
        %v1934 = vsel %vm861, %v1862, %v1933
        %v1935 = vsel %vm863, %v1862, %v1934
        %v1936 = vsel %vm865, %v1862, %v1935
        %v1937 = vsel %vm855, %v1881, %v1881
        %v1938 = vsel %vm857, %v1881, %v1937
        %v1939 = vsel %vm859, %v1881, %v1938
        %v1940 = vsel %vm861, %v1881, %v1939
        %v1941 = vsel %vm863, %v1881, %v1940
        %v1942 = vsel %vm865, %v1881, %v1941
        %v1943 = vsel %vm855, %v1900, %v1900
        %v1944 = vsel %vm857, %v1900, %v1943
        %v1945 = vsel %vm859, %v1900, %v1944
        %v1946 = vsel %vm861, %v1900, %v1945
        %v1947 = vsel %vm863, %v1900, %v1946
        %v1948 = vsel %vm865, %v1900, %v1947
        %v1957 = vmul.f32 %v1652, %v1906
        %v1958 = vmul.f32 %v1653, %v1906
        %v1959 = vmul.f32 %v1654, %v1906
        %v1960 = vmul.f32 %v1655, %v1906
        %v1961 = vmul.f32 %v1656, %v1912
        %v1962 = vmul.f32 %v1657, %v1912
        %v1963 = vmul.f32 %v1658, %v1912
        %v1964 = vmul.f32 %v1659, %v1912
        %v1965 = vmul.f32 %v1660, %v1918
        %v1966 = vmul.f32 %v1661, %v1918
        %v1967 = vmul.f32 %v1662, %v1918
        %v1968 = vmul.f32 %v1663, %v1918
        %v1969 = vmul.f32 %v1664, %v1924
        %v1970 = vmul.f32 %v1665, %v1924
        %v1971 = vmul.f32 %v1666, %v1924
        %v1972 = vmul.f32 %v1667, %v1924
        %v1973 = vmul.f32 %v1668, %v1930
        %v1974 = vmul.f32 %v1669, %v1930
        %v1975 = vmul.f32 %v1670, %v1930
        %v1976 = vmul.f32 %v1671, %v1930
        %v1977 = vmul.f32 %v1672, %v1936
        %v1978 = vmul.f32 %v1673, %v1936
        %v1979 = vmul.f32 %v1674, %v1936
        %v1980 = vmul.f32 %v1675, %v1936
        %v1981 = vmul.f32 %v1676, %v1942
        %v1982 = vmul.f32 %v1677, %v1942
        %v1983 = vmul.f32 %v1678, %v1942
        %v1984 = vmul.f32 %v1679, %v1942
        %v1985 = vmul.f32 %v1680, %v1948
        %v1986 = vmul.f32 %v1681, %v1948
        %v1987 = vmul.f32 %v1682, %v1948
        %v1988 = vmul.f32 %v1683, %v1948
        %v1989 = vsel %vm469, %v1957, 0.0
        %1990 = vadd.xlane.f32.xlu0 %v1989
        %v1991 = vpop.xlane.xlu0 %1990
        %v1992 = vsel %vm469, %v1958, 0.0
        %1993 = vadd.xlane.f32.xlu0 %v1992
        %v1994 = vpop.xlane.xlu0 %1993
        %v1995 = vsel %vm469, %v1959, 0.0
        %1996 = vadd.xlane.f32.xlu0 %v1995
        %v1997 = vpop.xlane.xlu0 %1996
        %v1998 = vsel %vm469, %v1960, 0.0
        %1999 = vadd.xlane.f32.xlu0 %v1998
        %v2000 = vpop.xlane.xlu0 %1999
        %v2001 = vsel %vm469, %v1961, 0.0
        %2002 = vadd.xlane.f32.xlu0 %v2001
        %v2003 = vpop.xlane.xlu0 %2002
        %v2004 = vsel %vm469, %v1962, 0.0
        %2005 = vadd.xlane.f32.xlu0 %v2004
        %v2006 = vpop.xlane.xlu0 %2005
        %v2007 = vsel %vm469, %v1963, 0.0
        %2008 = vadd.xlane.f32.xlu0 %v2007
        %v2009 = vpop.xlane.xlu0 %2008
        %v2010 = vsel %vm469, %v1964, 0.0
        %2011 = vadd.xlane.f32.xlu0 %v2010
        %v2012 = vpop.xlane.xlu0 %2011
        %v2013 = vsel %vm469, %v1965, 0.0
        %2014 = vadd.xlane.f32.xlu0 %v2013
        %v2015 = vpop.xlane.xlu0 %2014
        %v2016 = vsel %vm469, %v1966, 0.0
        %2017 = vadd.xlane.f32.xlu0 %v2016
        %v2018 = vpop.xlane.xlu0 %2017
        %v2019 = vsel %vm469, %v1967, 0.0
        %2020 = vadd.xlane.f32.xlu0 %v2019
        %v2021 = vpop.xlane.xlu0 %2020
        %v2022 = vsel %vm469, %v1968, 0.0
        %2023 = vadd.xlane.f32.xlu0 %v2022
        %v2024 = vpop.xlane.xlu0 %2023
        %v2025 = vsel %vm469, %v1969, 0.0
        %2026 = vadd.xlane.f32.xlu0 %v2025
        %v2027 = vpop.xlane.xlu0 %2026
        %v2028 = vsel %vm469, %v1970, 0.0
        %2029 = vadd.xlane.f32.xlu0 %v2028
        %v2030 = vpop.xlane.xlu0 %2029
        %v2031 = vsel %vm469, %v1971, 0.0
        %2032 = vadd.xlane.f32.xlu0 %v2031
        %v2033 = vpop.xlane.xlu0 %2032
        %v2034 = vsel %vm469, %v1972, 0.0
        %2035 = vadd.xlane.f32.xlu0 %v2034
        %v2036 = vpop.xlane.xlu0 %2035
        %v2037 = vsel %vm469, %v1973, 0.0
        %2038 = vadd.xlane.f32.xlu0 %v2037
        %v2039 = vpop.xlane.xlu0 %2038
        %v2040 = vsel %vm469, %v1974, 0.0
        %2041 = vadd.xlane.f32.xlu0 %v2040
        %v2042 = vpop.xlane.xlu0 %2041
        %v2043 = vsel %vm469, %v1975, 0.0
        %2044 = vadd.xlane.f32.xlu0 %v2043
        %v2045 = vpop.xlane.xlu0 %2044
        %v2046 = vsel %vm469, %v1976, 0.0
        %2047 = vadd.xlane.f32.xlu0 %v2046
        %v2048 = vpop.xlane.xlu0 %2047
        %v2049 = vsel %vm469, %v1977, 0.0
        %2050 = vadd.xlane.f32.xlu0 %v2049
        %v2051 = vpop.xlane.xlu0 %2050
        %v2052 = vsel %vm469, %v1978, 0.0
        %2053 = vadd.xlane.f32.xlu0 %v2052
        %v2054 = vpop.xlane.xlu0 %2053
        %v2055 = vsel %vm469, %v1979, 0.0
        %2056 = vadd.xlane.f32.xlu0 %v2055
        %v2057 = vpop.xlane.xlu0 %2056
        %v2058 = vsel %vm469, %v1980, 0.0
        %2059 = vadd.xlane.f32.xlu0 %v2058
        %v2060 = vpop.xlane.xlu0 %2059
        %v2061 = vsel %vm469, %v1981, 0.0
        %2062 = vadd.xlane.f32.xlu0 %v2061
        %v2063 = vpop.xlane.xlu0 %2062
        %v2064 = vsel %vm469, %v1982, 0.0
        %2065 = vadd.xlane.f32.xlu0 %v2064
        %v2066 = vpop.xlane.xlu0 %2065
        %v2067 = vsel %vm469, %v1983, 0.0
        %2068 = vadd.xlane.f32.xlu0 %v2067
        %v2069 = vpop.xlane.xlu0 %2068
        %v2070 = vsel %vm469, %v1984, 0.0
        %2071 = vadd.xlane.f32.xlu0 %v2070
        %v2072 = vpop.xlane.xlu0 %2071
        %v2073 = vsel %vm469, %v1985, 0.0
        %2074 = vadd.xlane.f32.xlu0 %v2073
        %v2075 = vpop.xlane.xlu0 %2074
        %v2076 = vsel %vm469, %v1986, 0.0
        %2077 = vadd.xlane.f32.xlu0 %v2076
        %v2078 = vpop.xlane.xlu0 %2077
        %v2079 = vsel %vm469, %v1987, 0.0
        %2080 = vadd.xlane.f32.xlu0 %v2079
        %v2081 = vpop.xlane.xlu0 %2080
        %v2082 = vsel %vm469, %v1988, 0.0
        %2083 = vadd.xlane.f32.xlu0 %v2082
        %v2084 = vpop.xlane.xlu0 %2083
        %vm2085 = vcmp.lt.f32.partialorder %v1991, 0.0
        %vm2086 = vcmp.lt.f32.partialorder %v1994, 0.0
        %vm2087 = vcmp.lt.f32.partialorder %v1997, 0.0
        %vm2088 = vcmp.lt.f32.partialorder %v2000, 0.0
        %vm2089 = vcmp.lt.f32.partialorder %v2003, 0.0
        %vm2090 = vcmp.lt.f32.partialorder %v2006, 0.0
        %vm2091 = vcmp.lt.f32.partialorder %v2009, 0.0
        %vm2092 = vcmp.lt.f32.partialorder %v2012, 0.0
        %vm2093 = vcmp.lt.f32.partialorder %v2015, 0.0
        %vm2094 = vcmp.lt.f32.partialorder %v2018, 0.0
        %vm2095 = vcmp.lt.f32.partialorder %v2021, 0.0
        %vm2096 = vcmp.lt.f32.partialorder %v2024, 0.0
        %vm2097 = vcmp.lt.f32.partialorder %v2027, 0.0
        %vm2098 = vcmp.lt.f32.partialorder %v2030, 0.0
        %vm2099 = vcmp.lt.f32.partialorder %v2033, 0.0
        %vm2100 = vcmp.lt.f32.partialorder %v2036, 0.0
        %vm2101 = vcmp.lt.f32.partialorder %v2039, 0.0
        %vm2102 = vcmp.lt.f32.partialorder %v2042, 0.0
        %vm2103 = vcmp.lt.f32.partialorder %v2045, 0.0
        %vm2104 = vcmp.lt.f32.partialorder %v2048, 0.0
        %vm2105 = vcmp.lt.f32.partialorder %v2051, 0.0
        %vm2106 = vcmp.lt.f32.partialorder %v2054, 0.0
        %vm2107 = vcmp.lt.f32.partialorder %v2057, 0.0
        %vm2108 = vcmp.lt.f32.partialorder %v2060, 0.0
        %vm2109 = vcmp.lt.f32.partialorder %v2063, 0.0
        %vm2110 = vcmp.lt.f32.partialorder %v2066, 0.0
        %vm2111 = vcmp.lt.f32.partialorder %v2069, 0.0
        %vm2112 = vcmp.lt.f32.partialorder %v2072, 0.0
        %vm2113 = vcmp.lt.f32.partialorder %v2075, 0.0
        %vm2114 = vcmp.lt.f32.partialorder %v2078, 0.0
        %vm2115 = vcmp.lt.f32.partialorder %v2081, 0.0
        %vm2116 = vcmp.lt.f32.partialorder %v2084, 0.0
        %v2117 = vsel %vm2085, 1, 0
        %v2118 = vsel %vm2086, 1, 0
        %v2119 = vsel %vm2087, 1, 0
        %v2120 = vsel %vm2088, 1, 0
        %v2121 = vsel %vm2089, 1, 0
        %v2122 = vsel %vm2090, 1, 0
        %v2123 = vsel %vm2091, 1, 0
        %v2124 = vsel %vm2092, 1, 0
        %v2125 = vsel %vm2093, 1, 0
        %v2126 = vsel %vm2094, 1, 0
        %v2127 = vsel %vm2095, 1, 0
        %v2128 = vsel %vm2096, 1, 0
        %v2129 = vsel %vm2097, 1, 0
        %v2130 = vsel %vm2098, 1, 0
        %v2131 = vsel %vm2099, 1, 0
        %v2132 = vsel %vm2100, 1, 0
        %v2133 = vsel %vm2101, 1, 0
        %v2134 = vsel %vm2102, 1, 0
        %v2135 = vsel %vm2103, 1, 0
        %v2136 = vsel %vm2104, 1, 0
        %v2137 = vsel %vm2105, 1, 0
        %v2138 = vsel %vm2106, 1, 0
        %v2139 = vsel %vm2107, 1, 0
        %v2140 = vsel %vm2108, 1, 0
        %v2141 = vsel %vm2109, 1, 0
        %v2142 = vsel %vm2110, 1, 0
        %v2143 = vsel %vm2111, 1, 0
        %v2144 = vsel %vm2112, 1, 0
        %v2145 = vsel %vm2113, 1, 0
        %v2146 = vsel %vm2114, 1, 0
        %v2147 = vsel %vm2115, 1, 0
        %v2148 = vsel %vm2116, 1, 0
        %v2149 = vcvt.s32.f32 %v2117
        %v2150 = vcvt.s32.f32 %v2118
        %v2151 = vcvt.s32.f32 %v2119
        %v2152 = vcvt.s32.f32 %v2120
        %v2153 = vcvt.s32.f32 %v2121
        %v2154 = vcvt.s32.f32 %v2122
        %v2155 = vcvt.s32.f32 %v2123
        %v2156 = vcvt.s32.f32 %v2124
        %v2157 = vcvt.s32.f32 %v2125
        %v2158 = vcvt.s32.f32 %v2126
        %v2159 = vcvt.s32.f32 %v2127
        %v2160 = vcvt.s32.f32 %v2128
        %v2161 = vcvt.s32.f32 %v2129
        %v2162 = vcvt.s32.f32 %v2130
        %v2163 = vcvt.s32.f32 %v2131
        %v2164 = vcvt.s32.f32 %v2132
        %v2165 = vcvt.s32.f32 %v2133
        %v2166 = vcvt.s32.f32 %v2134
        %v2167 = vcvt.s32.f32 %v2135
        %v2168 = vcvt.s32.f32 %v2136
        %v2169 = vcvt.s32.f32 %v2137
        %v2170 = vcvt.s32.f32 %v2138
        %v2171 = vcvt.s32.f32 %v2139
        %v2172 = vcvt.s32.f32 %v2140
        %v2173 = vcvt.s32.f32 %v2141
        %v2174 = vcvt.s32.f32 %v2142
        %v2175 = vcvt.s32.f32 %v2143
        %v2176 = vcvt.s32.f32 %v2144
        %v2177 = vcvt.s32.f32 %v2145
        %v2178 = vcvt.s32.f32 %v2146
        %v2179 = vcvt.s32.f32 %v2147
        %v2180 = vcvt.s32.f32 %v2148
        %v2213 = vlaneseq
        %v2214 = vshrl.u32 %v2213, 7
        %v2215 = vsub.s32 %v695, %v2214
        %v2216 = vrot.slane %v2149, %v2215
        %v2217 = vlaneseq
        %v2218 = vshrl.u32 %v2217, 7
        %v2219 = vsub.s32 %v700, %v2218
        %v2220 = vrot.slane %v2150, %v2219
        %v2221 = vsel %vm705, %v2220, %v2216
        %v2222 = vlaneseq
        %v2223 = vshrl.u32 %v2222, 7
        %v2224 = vsub.s32 %v707, %v2223
        %v2225 = vrot.slane %v2151, %v2224
        %v2226 = vsel %vm712, %v2225, %v2221
        %v2227 = vlaneseq
        %v2228 = vshrl.u32 %v2227, 7
        %v2229 = vsub.s32 %v714, %v2228
        %v2230 = vrot.slane %v2152, %v2229
        %v2231 = vsel %vm719, %v2230, %v2226
        %v2232 = vlaneseq
        %v2233 = vshrl.u32 %v2232, 7
        %v2234 = vsub.s32 %v695, %v2233
        %v2235 = vrot.slane %v2153, %v2234
        %v2236 = vlaneseq
        %v2237 = vshrl.u32 %v2236, 7
        %v2238 = vsub.s32 %v700, %v2237
        %v2239 = vrot.slane %v2154, %v2238
        %v2240 = vsel %vm705, %v2239, %v2235
        %v2241 = vlaneseq
        %v2242 = vshrl.u32 %v2241, 7
        %v2243 = vsub.s32 %v707, %v2242
        %v2244 = vrot.slane %v2155, %v2243
        %v2245 = vsel %vm712, %v2244, %v2240
        %v2246 = vlaneseq
        %v2247 = vshrl.u32 %v2246, 7
        %v2248 = vsub.s32 %v714, %v2247
        %v2249 = vrot.slane %v2156, %v2248
        %v2250 = vsel %vm719, %v2249, %v2245
        %v2251 = vlaneseq
        %v2252 = vshrl.u32 %v2251, 7
        %v2253 = vsub.s32 %v695, %v2252
        %v2254 = vrot.slane %v2157, %v2253
        %v2255 = vlaneseq
        %v2256 = vshrl.u32 %v2255, 7
        %v2257 = vsub.s32 %v700, %v2256
        %v2258 = vrot.slane %v2158, %v2257
        %v2259 = vsel %vm705, %v2258, %v2254
        %v2260 = vlaneseq
        %v2261 = vshrl.u32 %v2260, 7
        %v2262 = vsub.s32 %v707, %v2261
        %v2263 = vrot.slane %v2159, %v2262
        %v2264 = vsel %vm712, %v2263, %v2259
        %v2265 = vlaneseq
        %v2266 = vshrl.u32 %v2265, 7
        %v2267 = vsub.s32 %v714, %v2266
        %v2268 = vrot.slane %v2160, %v2267
        %v2269 = vsel %vm719, %v2268, %v2264
        %v2270 = vlaneseq
        %v2271 = vshrl.u32 %v2270, 7
        %v2272 = vsub.s32 %v695, %v2271
        %v2273 = vrot.slane %v2161, %v2272
        %v2274 = vlaneseq
        %v2275 = vshrl.u32 %v2274, 7
        %v2276 = vsub.s32 %v700, %v2275
        %v2277 = vrot.slane %v2162, %v2276
        %v2278 = vsel %vm705, %v2277, %v2273
        %v2279 = vlaneseq
        %v2280 = vshrl.u32 %v2279, 7
        %v2281 = vsub.s32 %v707, %v2280
        %v2282 = vrot.slane %v2163, %v2281
        %v2283 = vsel %vm712, %v2282, %v2278
        %v2284 = vlaneseq
        %v2285 = vshrl.u32 %v2284, 7
        %v2286 = vsub.s32 %v714, %v2285
        %v2287 = vrot.slane %v2164, %v2286
        %v2288 = vsel %vm719, %v2287, %v2283
        %v2289 = vlaneseq
        %v2290 = vshrl.u32 %v2289, 7
        %v2291 = vsub.s32 %v695, %v2290
        %v2292 = vrot.slane %v2165, %v2291
        %v2293 = vlaneseq
        %v2294 = vshrl.u32 %v2293, 7
        %v2295 = vsub.s32 %v700, %v2294
        %v2296 = vrot.slane %v2166, %v2295
        %v2297 = vsel %vm705, %v2296, %v2292
        %v2298 = vlaneseq
        %v2299 = vshrl.u32 %v2298, 7
        %v2300 = vsub.s32 %v707, %v2299
        %v2301 = vrot.slane %v2167, %v2300
        %v2302 = vsel %vm712, %v2301, %v2297
        %v2303 = vlaneseq
        %v2304 = vshrl.u32 %v2303, 7
        %v2305 = vsub.s32 %v714, %v2304
        %v2306 = vrot.slane %v2168, %v2305
        %v2307 = vsel %vm719, %v2306, %v2302
        %v2308 = vlaneseq
        %v2309 = vshrl.u32 %v2308, 7
        %v2310 = vsub.s32 %v695, %v2309
        %v2311 = vrot.slane %v2169, %v2310
        %v2312 = vlaneseq
        %v2313 = vshrl.u32 %v2312, 7
        %v2314 = vsub.s32 %v700, %v2313
        %v2315 = vrot.slane %v2170, %v2314
        %v2316 = vsel %vm705, %v2315, %v2311
        %v2317 = vlaneseq
        %v2318 = vshrl.u32 %v2317, 7
        %v2319 = vsub.s32 %v707, %v2318
        %v2320 = vrot.slane %v2171, %v2319
        %v2321 = vsel %vm712, %v2320, %v2316
        %v2322 = vlaneseq
        %v2323 = vshrl.u32 %v2322, 7
        %v2324 = vsub.s32 %v714, %v2323
        %v2325 = vrot.slane %v2172, %v2324
        %v2326 = vsel %vm719, %v2325, %v2321
        %v2327 = vlaneseq
        %v2328 = vshrl.u32 %v2327, 7
        %v2329 = vsub.s32 %v695, %v2328
        %v2330 = vrot.slane %v2173, %v2329
        %v2331 = vlaneseq
        %v2332 = vshrl.u32 %v2331, 7
        %v2333 = vsub.s32 %v700, %v2332
        %v2334 = vrot.slane %v2174, %v2333
        %v2335 = vsel %vm705, %v2334, %v2330
        %v2336 = vlaneseq
        %v2337 = vshrl.u32 %v2336, 7
        %v2338 = vsub.s32 %v707, %v2337
        %v2339 = vrot.slane %v2175, %v2338
        %v2340 = vsel %vm712, %v2339, %v2335
        %v2341 = vlaneseq
        %v2342 = vshrl.u32 %v2341, 7
        %v2343 = vsub.s32 %v714, %v2342
        %v2344 = vrot.slane %v2176, %v2343
        %v2345 = vsel %vm719, %v2344, %v2340
        %v2346 = vlaneseq
        %v2347 = vshrl.u32 %v2346, 7
        %v2348 = vsub.s32 %v695, %v2347
        %v2349 = vrot.slane %v2177, %v2348
        %v2350 = vlaneseq
        %v2351 = vshrl.u32 %v2350, 7
        %v2352 = vsub.s32 %v700, %v2351
        %v2353 = vrot.slane %v2178, %v2352
        %v2354 = vsel %vm705, %v2353, %v2349
        %v2355 = vlaneseq
        %v2356 = vshrl.u32 %v2355, 7
        %v2357 = vsub.s32 %v707, %v2356
        %v2358 = vrot.slane %v2179, %v2357
        %v2359 = vsel %vm712, %v2358, %v2354
        %v2360 = vlaneseq
        %v2361 = vshrl.u32 %v2360, 7
        %v2362 = vsub.s32 %v714, %v2361
        %v2363 = vrot.slane %v2180, %v2362
        %v2364 = vsel %vm719, %v2363, %v2359
        %v2365 = vsel %vm855, %v2231, %v2231
        %v2366 = vsel %vm857, %v2231, %v2365
        %v2367 = vsel %vm859, %v2231, %v2366
        %v2368 = vsel %vm861, %v2231, %v2367
        %v2369 = vsel %vm863, %v2231, %v2368
        %v2370 = vsel %vm865, %v2231, %v2369
        %v2371 = vsel %vm855, %v2250, %v2250
        %v2372 = vsel %vm857, %v2250, %v2371
        %v2373 = vsel %vm859, %v2250, %v2372
        %v2374 = vsel %vm861, %v2250, %v2373
        %v2375 = vsel %vm863, %v2250, %v2374
        %v2376 = vsel %vm865, %v2250, %v2375
        %v2377 = vsel %vm855, %v2269, %v2269
        %v2378 = vsel %vm857, %v2269, %v2377
        %v2379 = vsel %vm859, %v2269, %v2378
        %v2380 = vsel %vm861, %v2269, %v2379
        %v2381 = vsel %vm863, %v2269, %v2380
        %v2382 = vsel %vm865, %v2269, %v2381
        %v2383 = vsel %vm855, %v2288, %v2288
        %v2384 = vsel %vm857, %v2288, %v2383
        %v2385 = vsel %vm859, %v2288, %v2384
        %v2386 = vsel %vm861, %v2288, %v2385
        %v2387 = vsel %vm863, %v2288, %v2386
        %v2388 = vsel %vm865, %v2288, %v2387
        %v2389 = vsel %vm855, %v2307, %v2307
        %v2390 = vsel %vm857, %v2307, %v2389
        %v2391 = vsel %vm859, %v2307, %v2390
        %v2392 = vsel %vm861, %v2307, %v2391
        %v2393 = vsel %vm863, %v2307, %v2392
        %v2394 = vsel %vm865, %v2307, %v2393
        %v2395 = vsel %vm855, %v2326, %v2326
        %v2396 = vsel %vm857, %v2326, %v2395
        %v2397 = vsel %vm859, %v2326, %v2396
        %v2398 = vsel %vm861, %v2326, %v2397
        %v2399 = vsel %vm863, %v2326, %v2398
        %v2400 = vsel %vm865, %v2326, %v2399
        %v2401 = vsel %vm855, %v2345, %v2345
        %v2402 = vsel %vm857, %v2345, %v2401
        %v2403 = vsel %vm859, %v2345, %v2402
        %v2404 = vsel %vm861, %v2345, %v2403
        %v2405 = vsel %vm863, %v2345, %v2404
        %v2406 = vsel %vm865, %v2345, %v2405
        %v2407 = vsel %vm855, %v2364, %v2364
        %v2408 = vsel %vm857, %v2364, %v2407
        %v2409 = vsel %vm859, %v2364, %v2408
        %v2410 = vsel %vm861, %v2364, %v2409
        %v2411 = vsel %vm863, %v2364, %v2410
        %v2412 = vsel %vm865, %v2364, %v2411
        %v2421 = vmul.f32 %v275, %v2370
        %v2422 = vmul.f32 %v276, %v2370
        %v2423 = vmul.f32 %v275, %v2376
        %v2424 = vmul.f32 %v276, %v2376
        %v2425 = vmul.f32 %v275, %v2382
        %v2426 = vmul.f32 %v276, %v2382
        %v2427 = vmul.f32 %v275, %v2388
        %v2428 = vmul.f32 %v276, %v2388
        %v2429 = vmul.f32 %v275, %v2394
        %v2430 = vmul.f32 %v276, %v2394
        %v2431 = vmul.f32 %v275, %v2400
        %v2432 = vmul.f32 %v276, %v2400
        %v2433 = vmul.f32 %v275, %v2406
        %v2434 = vmul.f32 %v276, %v2406
        %v2435 = vmul.f32 %v275, %v2412
        %v2436 = vmul.f32 %v276, %v2412
        %v2437 = vsel %vm469, %v2421, 0.0
        %2438 = vadd.xlane.f32.xlu0 %v2437
        %v2439 = vpop.xlane.xlu0 %2438
        %v2440 = vsel %vm469, %v2422, 0.0
        %2441 = vadd.xlane.f32.xlu0 %v2440
        %v2442 = vpop.xlane.xlu0 %2441
        %v2443 = vsel %vm469, %v2423, 0.0
        %2444 = vadd.xlane.f32.xlu0 %v2443
        %v2445 = vpop.xlane.xlu0 %2444
        %v2446 = vsel %vm469, %v2424, 0.0
        %2447 = vadd.xlane.f32.xlu0 %v2446
        %v2448 = vpop.xlane.xlu0 %2447
        %v2449 = vsel %vm469, %v2425, 0.0
        %2450 = vadd.xlane.f32.xlu0 %v2449
        %v2451 = vpop.xlane.xlu0 %2450
        %v2452 = vsel %vm469, %v2426, 0.0
        %2453 = vadd.xlane.f32.xlu0 %v2452
        %v2454 = vpop.xlane.xlu0 %2453
        %v2455 = vsel %vm469, %v2427, 0.0
        %2456 = vadd.xlane.f32.xlu0 %v2455
        %v2457 = vpop.xlane.xlu0 %2456
        %v2458 = vsel %vm469, %v2428, 0.0
        %2459 = vadd.xlane.f32.xlu0 %v2458
        %v2460 = vpop.xlane.xlu0 %2459
        %v2461 = vsel %vm469, %v2429, 0.0
        %2462 = vadd.xlane.f32.xlu0 %v2461
        %v2463 = vpop.xlane.xlu0 %2462
        %v2464 = vsel %vm469, %v2430, 0.0
        %2465 = vadd.xlane.f32.xlu0 %v2464
        %v2466 = vpop.xlane.xlu0 %2465
        %v2467 = vsel %vm469, %v2431, 0.0
        %2468 = vadd.xlane.f32.xlu0 %v2467
        %v2469 = vpop.xlane.xlu0 %2468
        %v2470 = vsel %vm469, %v2432, 0.0
        %2471 = vadd.xlane.f32.xlu0 %v2470
        %v2472 = vpop.xlane.xlu0 %2471
        %v2473 = vsel %vm469, %v2433, 0.0
        %2474 = vadd.xlane.f32.xlu0 %v2473
        %v2475 = vpop.xlane.xlu0 %2474
        %v2476 = vsel %vm469, %v2434, 0.0
        %2477 = vadd.xlane.f32.xlu0 %v2476
        %v2478 = vpop.xlane.xlu0 %2477
        %v2479 = vsel %vm469, %v2435, 0.0
        %2480 = vadd.xlane.f32.xlu0 %v2479
        %v2481 = vpop.xlane.xlu0 %2480
        %v2482 = vsel %vm469, %v2436, 0.0
        %2483 = vadd.xlane.f32.xlu0 %v2482
        %v2484 = vpop.xlane.xlu0 %2483
        %v2485 = vmul.f32 %v2439, 0.5
        %v2486 = vmul.f32 %v2442, 0.5
        %v2487 = vmul.f32 %v2445, 0.5
        %v2488 = vmul.f32 %v2448, 0.5
        %v2489 = vmul.f32 %v2451, 0.5
        %v2490 = vmul.f32 %v2454, 0.5
        %v2491 = vmul.f32 %v2457, 0.5
        %v2492 = vmul.f32 %v2460, 0.5
        %v2493 = vmul.f32 %v2463, 0.5
        %v2494 = vmul.f32 %v2466, 0.5
        %v2495 = vmul.f32 %v2469, 0.5
        %v2496 = vmul.f32 %v2472, 0.5
        %v2497 = vmul.f32 %v2475, 0.5
        %v2498 = vmul.f32 %v2478, 0.5
        %v2499 = vmul.f32 %v2481, 0.5
        %v2500 = vmul.f32 %v2484, 0.5
        %v2501 = vfloor.f32 %v2485
        %v2502 = vfloor.f32 %v2486
        %v2503 = vfloor.f32 %v2487
        %v2504 = vfloor.f32 %v2488
        %v2505 = vfloor.f32 %v2489
        %v2506 = vfloor.f32 %v2490
        %v2507 = vfloor.f32 %v2491
        %v2508 = vfloor.f32 %v2492
        %v2509 = vfloor.f32 %v2493
        %v2510 = vfloor.f32 %v2494
        %v2511 = vfloor.f32 %v2495
        %v2512 = vfloor.f32 %v2496
        %v2513 = vfloor.f32 %v2497
        %v2514 = vfloor.f32 %v2498
        %v2515 = vfloor.f32 %v2499
        %v2516 = vfloor.f32 %v2500
        %v2517 = vmul.f32 %v2501, 2.0
        %v2518 = vmul.f32 %v2502, 2.0
        %v2519 = vmul.f32 %v2503, 2.0
        %v2520 = vmul.f32 %v2504, 2.0
        %v2521 = vmul.f32 %v2505, 2.0
        %v2522 = vmul.f32 %v2506, 2.0
        %v2523 = vmul.f32 %v2507, 2.0
        %v2524 = vmul.f32 %v2508, 2.0
        %v2525 = vmul.f32 %v2509, 2.0
        %v2526 = vmul.f32 %v2510, 2.0
        %v2527 = vmul.f32 %v2511, 2.0
        %v2528 = vmul.f32 %v2512, 2.0
        %v2529 = vmul.f32 %v2513, 2.0
        %v2530 = vmul.f32 %v2514, 2.0
        %v2531 = vmul.f32 %v2515, 2.0
        %v2532 = vmul.f32 %v2516, 2.0
        %v2533 = vsub.f32 %v2439, %v2517
        %v2534 = vsub.f32 %v2442, %v2518
        %v2535 = vsub.f32 %v2445, %v2519
        %v2536 = vsub.f32 %v2448, %v2520
        %v2537 = vsub.f32 %v2451, %v2521
        %v2538 = vsub.f32 %v2454, %v2522
        %v2539 = vsub.f32 %v2457, %v2523
        %v2540 = vsub.f32 %v2460, %v2524
        %v2541 = vsub.f32 %v2463, %v2525
        %v2542 = vsub.f32 %v2466, %v2526
        %v2543 = vsub.f32 %v2469, %v2527
        %v2544 = vsub.f32 %v2472, %v2528
        %v2545 = vsub.f32 %v2475, %v2529
        %v2546 = vsub.f32 %v2478, %v2530
        %v2547 = vsub.f32 %v2481, %v2531
        %v2548 = vsub.f32 %v2484, %v2532
        %v2565 = vlaneseq
        %v2566 = vshrl.u32 %v2565, 7
        %v2567 = vsub.s32 %v695, %v2566
        %v2568 = vrot.slane %v2533, %v2567
        %v2569 = vlaneseq
        %v2570 = vshrl.u32 %v2569, 7
        %v2571 = vsub.s32 %v700, %v2570
        %v2572 = vrot.slane %v2534, %v2571
        %v2573 = vsel %vm705, %v2572, %v2568
        %v2574 = vlaneseq
        %v2575 = vshrl.u32 %v2574, 7
        %v2576 = vsub.s32 %v695, %v2575
        %v2577 = vrot.slane %v2535, %v2576
        %v2578 = vlaneseq
        %v2579 = vshrl.u32 %v2578, 7
        %v2580 = vsub.s32 %v700, %v2579
        %v2581 = vrot.slane %v2536, %v2580
        %v2582 = vsel %vm705, %v2581, %v2577
        %v2583 = vlaneseq
        %v2584 = vshrl.u32 %v2583, 7
        %v2585 = vsub.s32 %v695, %v2584
        %v2586 = vrot.slane %v2537, %v2585
        %v2587 = vlaneseq
        %v2588 = vshrl.u32 %v2587, 7
        %v2589 = vsub.s32 %v700, %v2588
        %v2590 = vrot.slane %v2538, %v2589
        %v2591 = vsel %vm705, %v2590, %v2586
        %v2592 = vlaneseq
        %v2593 = vshrl.u32 %v2592, 7
        %v2594 = vsub.s32 %v695, %v2593
        %v2595 = vrot.slane %v2539, %v2594
        %v2596 = vlaneseq
        %v2597 = vshrl.u32 %v2596, 7
        %v2598 = vsub.s32 %v700, %v2597
        %v2599 = vrot.slane %v2540, %v2598
        %v2600 = vsel %vm705, %v2599, %v2595
        %v2601 = vlaneseq
        %v2602 = vshrl.u32 %v2601, 7
        %v2603 = vsub.s32 %v695, %v2602
        %v2604 = vrot.slane %v2541, %v2603
        %v2605 = vlaneseq
        %v2606 = vshrl.u32 %v2605, 7
        %v2607 = vsub.s32 %v700, %v2606
        %v2608 = vrot.slane %v2542, %v2607
        %v2609 = vsel %vm705, %v2608, %v2604
        %v2610 = vlaneseq
        %v2611 = vshrl.u32 %v2610, 7
        %v2612 = vsub.s32 %v695, %v2611
        %v2613 = vrot.slane %v2543, %v2612
        %v2614 = vlaneseq
        %v2615 = vshrl.u32 %v2614, 7
        %v2616 = vsub.s32 %v700, %v2615
        %v2617 = vrot.slane %v2544, %v2616
        %v2618 = vsel %vm705, %v2617, %v2613
        %v2619 = vlaneseq
        %v2620 = vshrl.u32 %v2619, 7
        %v2621 = vsub.s32 %v695, %v2620
        %v2622 = vrot.slane %v2545, %v2621
        %v2623 = vlaneseq
        %v2624 = vshrl.u32 %v2623, 7
        %v2625 = vsub.s32 %v700, %v2624
        %v2626 = vrot.slane %v2546, %v2625
        %v2627 = vsel %vm705, %v2626, %v2622
        %v2628 = vlaneseq
        %v2629 = vshrl.u32 %v2628, 7
        %v2630 = vsub.s32 %v695, %v2629
        %v2631 = vrot.slane %v2547, %v2630
        %v2632 = vlaneseq
        %v2633 = vshrl.u32 %v2632, 7
        %v2634 = vsub.s32 %v700, %v2633
        %v2635 = vrot.slane %v2548, %v2634
        %v2636 = vsel %vm705, %v2635, %v2631
        %v2637 = vsel %vm854, %v2582, %v2573
        %v2638 = vsel %vm855, %v2591, %v2637
        %v2639 = vsel %vm857, %v2600, %v2638
        %v2640 = vsel %vm859, %v2609, %v2639
        %v2641 = vsel %vm861, %v2618, %v2640
        %v2642 = vsel %vm863, %v2627, %v2641
        %v2643 = vsel %vm865, %v2636, %v2642
        %v2645 = vsel %vm1141, %v2643, 0.0
        %2646 = vadd.xlane.f32.xlu0 %v2645
        %v2647 = vpop.xlane.xlu0 %2646
        %vm2648 = vcmp.eq.f32.partialorder %v2647, 0.0
        %v2649 = vsel %vm2648, 1, 0
        %v2650 = vcvt.s32.f32 %v2649
        %v2651 = vmul.f32 %v1685, %v2370
        %v2652 = vmul.f32 %v1686, %v2370
        %v2653 = vmul.f32 %v1687, %v2370
        %v2654 = vmul.f32 %v1688, %v2370
        %v2655 = vmul.f32 %v1689, %v2376
        %v2656 = vmul.f32 %v1690, %v2376
        %v2657 = vmul.f32 %v1691, %v2376
        %v2658 = vmul.f32 %v1692, %v2376
        %v2659 = vmul.f32 %v1693, %v2382
        %v2660 = vmul.f32 %v1694, %v2382
        %v2661 = vmul.f32 %v1695, %v2382
        %v2662 = vmul.f32 %v1696, %v2382
        %v2663 = vmul.f32 %v1697, %v2388
        %v2664 = vmul.f32 %v1698, %v2388
        %v2665 = vmul.f32 %v1699, %v2388
        %v2666 = vmul.f32 %v1700, %v2388
        %v2667 = vmul.f32 %v1701, %v2394
        %v2668 = vmul.f32 %v1702, %v2394
        %v2669 = vmul.f32 %v1703, %v2394
        %v2670 = vmul.f32 %v1704, %v2394
        %v2671 = vmul.f32 %v1705, %v2400
        %v2672 = vmul.f32 %v1706, %v2400
        %v2673 = vmul.f32 %v1707, %v2400
        %v2674 = vmul.f32 %v1708, %v2400
        %v2675 = vmul.f32 %v1709, %v2406
        %v2676 = vmul.f32 %v1710, %v2406
        %v2677 = vmul.f32 %v1711, %v2406
        %v2678 = vmul.f32 %v1712, %v2406
        %v2679 = vmul.f32 %v1713, %v2412
        %v2680 = vmul.f32 %v1714, %v2412
        %v2681 = vmul.f32 %v1715, %v2412
        %v2682 = vmul.f32 %v1716, %v2412
        %v2683 = vsel %vm469, %v2651, 0.0
        %2684 = vadd.xlane.f32.xlu0 %v2683
        %v2685 = vpop.xlane.xlu0 %2684
        %v2686 = vsel %vm469, %v2652, 0.0
        %2687 = vadd.xlane.f32.xlu0 %v2686
        %v2688 = vpop.xlane.xlu0 %2687
        %v2689 = vsel %vm469, %v2653, 0.0
        %2690 = vadd.xlane.f32.xlu0 %v2689
        %v2691 = vpop.xlane.xlu0 %2690
        %v2692 = vsel %vm469, %v2654, 0.0
        %2693 = vadd.xlane.f32.xlu0 %v2692
        %v2694 = vpop.xlane.xlu0 %2693
        %v2695 = vsel %vm469, %v2655, 0.0
        %2696 = vadd.xlane.f32.xlu0 %v2695
        %v2697 = vpop.xlane.xlu0 %2696
        %v2698 = vsel %vm469, %v2656, 0.0
        %2699 = vadd.xlane.f32.xlu0 %v2698
        %v2700 = vpop.xlane.xlu0 %2699
        %v2701 = vsel %vm469, %v2657, 0.0
        %2702 = vadd.xlane.f32.xlu0 %v2701
        %v2703 = vpop.xlane.xlu0 %2702
        %v2704 = vsel %vm469, %v2658, 0.0
        %2705 = vadd.xlane.f32.xlu0 %v2704
        %v2706 = vpop.xlane.xlu0 %2705
        %v2707 = vsel %vm469, %v2659, 0.0
        %2708 = vadd.xlane.f32.xlu0 %v2707
        %v2709 = vpop.xlane.xlu0 %2708
        %v2710 = vsel %vm469, %v2660, 0.0
        %2711 = vadd.xlane.f32.xlu0 %v2710
        %v2712 = vpop.xlane.xlu0 %2711
        %v2713 = vsel %vm469, %v2661, 0.0
        %2714 = vadd.xlane.f32.xlu0 %v2713
        %v2715 = vpop.xlane.xlu0 %2714
        %v2716 = vsel %vm469, %v2662, 0.0
        %2717 = vadd.xlane.f32.xlu0 %v2716
        %v2718 = vpop.xlane.xlu0 %2717
        %v2719 = vsel %vm469, %v2663, 0.0
        %2720 = vadd.xlane.f32.xlu0 %v2719
        %v2721 = vpop.xlane.xlu0 %2720
        %v2722 = vsel %vm469, %v2664, 0.0
        %2723 = vadd.xlane.f32.xlu0 %v2722
        %v2724 = vpop.xlane.xlu0 %2723
        %v2725 = vsel %vm469, %v2665, 0.0
        %2726 = vadd.xlane.f32.xlu0 %v2725
        %v2727 = vpop.xlane.xlu0 %2726
        %v2728 = vsel %vm469, %v2666, 0.0
        %2729 = vadd.xlane.f32.xlu0 %v2728
        %v2730 = vpop.xlane.xlu0 %2729
        %v2731 = vsel %vm469, %v2667, 0.0
        %2732 = vadd.xlane.f32.xlu0 %v2731
        %v2733 = vpop.xlane.xlu0 %2732
        %v2734 = vsel %vm469, %v2668, 0.0
        %2735 = vadd.xlane.f32.xlu0 %v2734
        %v2736 = vpop.xlane.xlu0 %2735
        %v2737 = vsel %vm469, %v2669, 0.0
        %2738 = vadd.xlane.f32.xlu0 %v2737
        %v2739 = vpop.xlane.xlu0 %2738
        %v2740 = vsel %vm469, %v2670, 0.0
        %2741 = vadd.xlane.f32.xlu0 %v2740
        %v2742 = vpop.xlane.xlu0 %2741
        %v2743 = vsel %vm469, %v2671, 0.0
        %2744 = vadd.xlane.f32.xlu0 %v2743
        %v2745 = vpop.xlane.xlu0 %2744
        %v2746 = vsel %vm469, %v2672, 0.0
        %2747 = vadd.xlane.f32.xlu0 %v2746
        %v2748 = vpop.xlane.xlu0 %2747
        %v2749 = vsel %vm469, %v2673, 0.0
        %2750 = vadd.xlane.f32.xlu0 %v2749
        %v2751 = vpop.xlane.xlu0 %2750
        %v2752 = vsel %vm469, %v2674, 0.0
        %2753 = vadd.xlane.f32.xlu0 %v2752
        %v2754 = vpop.xlane.xlu0 %2753
        %v2755 = vsel %vm469, %v2675, 0.0
        %2756 = vadd.xlane.f32.xlu0 %v2755
        %v2757 = vpop.xlane.xlu0 %2756
        %v2758 = vsel %vm469, %v2676, 0.0
        %2759 = vadd.xlane.f32.xlu0 %v2758
        %v2760 = vpop.xlane.xlu0 %2759
        %v2761 = vsel %vm469, %v2677, 0.0
        %2762 = vadd.xlane.f32.xlu0 %v2761
        %v2763 = vpop.xlane.xlu0 %2762
        %v2764 = vsel %vm469, %v2678, 0.0
        %2765 = vadd.xlane.f32.xlu0 %v2764
        %v2766 = vpop.xlane.xlu0 %2765
        %v2767 = vsel %vm469, %v2679, 0.0
        %2768 = vadd.xlane.f32.xlu0 %v2767
        %v2769 = vpop.xlane.xlu0 %2768
        %v2770 = vsel %vm469, %v2680, 0.0
        %2771 = vadd.xlane.f32.xlu0 %v2770
        %v2772 = vpop.xlane.xlu0 %2771
        %v2773 = vsel %vm469, %v2681, 0.0
        %2774 = vadd.xlane.f32.xlu0 %v2773
        %v2775 = vpop.xlane.xlu0 %2774
        %v2776 = vsel %vm469, %v2682, 0.0
        %2777 = vadd.xlane.f32.xlu0 %v2776
        %v2778 = vpop.xlane.xlu0 %2777
        %v2811 = vlaneseq
        %v2812 = vshrl.u32 %v2811, 7
        %v2813 = vsub.s32 %v695, %v2812
        %v2814 = vrot.slane %v1991, %v2813
        %v2815 = vlaneseq
        %v2816 = vshrl.u32 %v2815, 7
        %v2817 = vsub.s32 %v700, %v2816
        %v2818 = vrot.slane %v1994, %v2817
        %v2819 = vsel %vm705, %v2818, %v2814
        %v2820 = vlaneseq
        %v2821 = vshrl.u32 %v2820, 7
        %v2822 = vsub.s32 %v707, %v2821
        %v2823 = vrot.slane %v1997, %v2822
        %v2824 = vsel %vm712, %v2823, %v2819
        %v2825 = vlaneseq
        %v2826 = vshrl.u32 %v2825, 7
        %v2827 = vsub.s32 %v714, %v2826
        %v2828 = vrot.slane %v2000, %v2827
        %v2829 = vsel %vm719, %v2828, %v2824
        %v2830 = vlaneseq
        %v2831 = vshrl.u32 %v2830, 7
        %v2832 = vsub.s32 %v695, %v2831
        %v2833 = vrot.slane %v2003, %v2832
        %v2834 = vlaneseq
        %v2835 = vshrl.u32 %v2834, 7
        %v2836 = vsub.s32 %v700, %v2835
        %v2837 = vrot.slane %v2006, %v2836
        %v2838 = vsel %vm705, %v2837, %v2833
        %v2839 = vlaneseq
        %v2840 = vshrl.u32 %v2839, 7
        %v2841 = vsub.s32 %v707, %v2840
        %v2842 = vrot.slane %v2009, %v2841
        %v2843 = vsel %vm712, %v2842, %v2838
        %v2844 = vlaneseq
        %v2845 = vshrl.u32 %v2844, 7
        %v2846 = vsub.s32 %v714, %v2845
        %v2847 = vrot.slane %v2012, %v2846
        %v2848 = vsel %vm719, %v2847, %v2843
        %v2849 = vlaneseq
        %v2850 = vshrl.u32 %v2849, 7
        %v2851 = vsub.s32 %v695, %v2850
        %v2852 = vrot.slane %v2015, %v2851
        %v2853 = vlaneseq
        %v2854 = vshrl.u32 %v2853, 7
        %v2855 = vsub.s32 %v700, %v2854
        %v2856 = vrot.slane %v2018, %v2855
        %v2857 = vsel %vm705, %v2856, %v2852
        %v2858 = vlaneseq
        %v2859 = vshrl.u32 %v2858, 7
        %v2860 = vsub.s32 %v707, %v2859
        %v2861 = vrot.slane %v2021, %v2860
        %v2862 = vsel %vm712, %v2861, %v2857
        %v2863 = vlaneseq
        %v2864 = vshrl.u32 %v2863, 7
        %v2865 = vsub.s32 %v714, %v2864
        %v2866 = vrot.slane %v2024, %v2865
        %v2867 = vsel %vm719, %v2866, %v2862
        %v2868 = vlaneseq
        %v2869 = vshrl.u32 %v2868, 7
        %v2870 = vsub.s32 %v695, %v2869
        %v2871 = vrot.slane %v2027, %v2870
        %v2872 = vlaneseq
        %v2873 = vshrl.u32 %v2872, 7
        %v2874 = vsub.s32 %v700, %v2873
        %v2875 = vrot.slane %v2030, %v2874
        %v2876 = vsel %vm705, %v2875, %v2871
        %v2877 = vlaneseq
        %v2878 = vshrl.u32 %v2877, 7
        %v2879 = vsub.s32 %v707, %v2878
        %v2880 = vrot.slane %v2033, %v2879
        %v2881 = vsel %vm712, %v2880, %v2876
        %v2882 = vlaneseq
        %v2883 = vshrl.u32 %v2882, 7
        %v2884 = vsub.s32 %v714, %v2883
        %v2885 = vrot.slane %v2036, %v2884
        %v2886 = vsel %vm719, %v2885, %v2881
        %v2887 = vlaneseq
        %v2888 = vshrl.u32 %v2887, 7
        %v2889 = vsub.s32 %v695, %v2888
        %v2890 = vrot.slane %v2039, %v2889
        %v2891 = vlaneseq
        %v2892 = vshrl.u32 %v2891, 7
        %v2893 = vsub.s32 %v700, %v2892
        %v2894 = vrot.slane %v2042, %v2893
        %v2895 = vsel %vm705, %v2894, %v2890
        %v2896 = vlaneseq
        %v2897 = vshrl.u32 %v2896, 7
        %v2898 = vsub.s32 %v707, %v2897
        %v2899 = vrot.slane %v2045, %v2898
        %v2900 = vsel %vm712, %v2899, %v2895
        %v2901 = vlaneseq
        %v2902 = vshrl.u32 %v2901, 7
        %v2903 = vsub.s32 %v714, %v2902
        %v2904 = vrot.slane %v2048, %v2903
        %v2905 = vsel %vm719, %v2904, %v2900
        %v2906 = vlaneseq
        %v2907 = vshrl.u32 %v2906, 7
        %v2908 = vsub.s32 %v695, %v2907
        %v2909 = vrot.slane %v2051, %v2908
        %v2910 = vlaneseq
        %v2911 = vshrl.u32 %v2910, 7
        %v2912 = vsub.s32 %v700, %v2911
        %v2913 = vrot.slane %v2054, %v2912
        %v2914 = vsel %vm705, %v2913, %v2909
        %v2915 = vlaneseq
        %v2916 = vshrl.u32 %v2915, 7
        %v2917 = vsub.s32 %v707, %v2916
        %v2918 = vrot.slane %v2057, %v2917
        %v2919 = vsel %vm712, %v2918, %v2914
        %v2920 = vlaneseq
        %v2921 = vshrl.u32 %v2920, 7
        %v2922 = vsub.s32 %v714, %v2921
        %v2923 = vrot.slane %v2060, %v2922
        %v2924 = vsel %vm719, %v2923, %v2919
        %v2925 = vlaneseq
        %v2926 = vshrl.u32 %v2925, 7
        %v2927 = vsub.s32 %v695, %v2926
        %v2928 = vrot.slane %v2063, %v2927
        %v2929 = vlaneseq
        %v2930 = vshrl.u32 %v2929, 7
        %v2931 = vsub.s32 %v700, %v2930
        %v2932 = vrot.slane %v2066, %v2931
        %v2933 = vsel %vm705, %v2932, %v2928
        %v2934 = vlaneseq
        %v2935 = vshrl.u32 %v2934, 7
        %v2936 = vsub.s32 %v707, %v2935
        %v2937 = vrot.slane %v2069, %v2936
        %v2938 = vsel %vm712, %v2937, %v2933
        %v2939 = vlaneseq
        %v2940 = vshrl.u32 %v2939, 7
        %v2941 = vsub.s32 %v714, %v2940
        %v2942 = vrot.slane %v2072, %v2941
        %v2943 = vsel %vm719, %v2942, %v2938
        %v2944 = vlaneseq
        %v2945 = vshrl.u32 %v2944, 7
        %v2946 = vsub.s32 %v695, %v2945
        %v2947 = vrot.slane %v2075, %v2946
        %v2948 = vlaneseq
        %v2949 = vshrl.u32 %v2948, 7
        %v2950 = vsub.s32 %v700, %v2949
        %v2951 = vrot.slane %v2078, %v2950
        %v2952 = vsel %vm705, %v2951, %v2947
        %v2953 = vlaneseq
        %v2954 = vshrl.u32 %v2953, 7
        %v2955 = vsub.s32 %v707, %v2954
        %v2956 = vrot.slane %v2081, %v2955
        %v2957 = vsel %vm712, %v2956, %v2952
        %v2958 = vlaneseq
        %v2959 = vshrl.u32 %v2958, 7
        %v2960 = vsub.s32 %v714, %v2959
        %v2961 = vrot.slane %v2084, %v2960
        %v2962 = vsel %vm719, %v2961, %v2957
        %v2963 = vsel %vm855, %v2829, %v2829
        %v2964 = vsel %vm857, %v2829, %v2963
        %v2965 = vsel %vm859, %v2829, %v2964
        %v2966 = vsel %vm861, %v2829, %v2965
        %v2967 = vsel %vm863, %v2829, %v2966
        %v2968 = vsel %vm865, %v2829, %v2967
        %v2969 = vsel %vm855, %v2848, %v2848
        %v2970 = vsel %vm857, %v2848, %v2969
        %v2971 = vsel %vm859, %v2848, %v2970
        %v2972 = vsel %vm861, %v2848, %v2971
        %v2973 = vsel %vm863, %v2848, %v2972
        %v2974 = vsel %vm865, %v2848, %v2973
        %v2975 = vsel %vm855, %v2867, %v2867
        %v2976 = vsel %vm857, %v2867, %v2975
        %v2977 = vsel %vm859, %v2867, %v2976
        %v2978 = vsel %vm861, %v2867, %v2977
        %v2979 = vsel %vm863, %v2867, %v2978
        %v2980 = vsel %vm865, %v2867, %v2979
        %v2981 = vsel %vm855, %v2886, %v2886
        %v2982 = vsel %vm857, %v2886, %v2981
        %v2983 = vsel %vm859, %v2886, %v2982
        %v2984 = vsel %vm861, %v2886, %v2983
        %v2985 = vsel %vm863, %v2886, %v2984
        %v2986 = vsel %vm865, %v2886, %v2985
        %v2987 = vsel %vm855, %v2905, %v2905
        %v2988 = vsel %vm857, %v2905, %v2987
        %v2989 = vsel %vm859, %v2905, %v2988
        %v2990 = vsel %vm861, %v2905, %v2989
        %v2991 = vsel %vm863, %v2905, %v2990
        %v2992 = vsel %vm865, %v2905, %v2991
        %v2993 = vsel %vm855, %v2924, %v2924
        %v2994 = vsel %vm857, %v2924, %v2993
        %v2995 = vsel %vm859, %v2924, %v2994
        %v2996 = vsel %vm861, %v2924, %v2995
        %v2997 = vsel %vm863, %v2924, %v2996
        %v2998 = vsel %vm865, %v2924, %v2997
        %v2999 = vsel %vm855, %v2943, %v2943
        %v3000 = vsel %vm857, %v2943, %v2999
        %v3001 = vsel %vm859, %v2943, %v3000
        %v3002 = vsel %vm861, %v2943, %v3001
        %v3003 = vsel %vm863, %v2943, %v3002
        %v3004 = vsel %vm865, %v2943, %v3003
        %v3005 = vsel %vm855, %v2962, %v2962
        %v3006 = vsel %vm857, %v2962, %v3005
        %v3007 = vsel %vm859, %v2962, %v3006
        %v3008 = vsel %vm861, %v2962, %v3007
        %v3009 = vsel %vm863, %v2962, %v3008
        %v3010 = vsel %vm865, %v2962, %v3009
        %v3019 = vmul.f32 %v1685, %v2968
        %v3020 = vmul.f32 %v1686, %v2968
        %v3021 = vmul.f32 %v1687, %v2968
        %v3022 = vmul.f32 %v1688, %v2968
        %v3023 = vmul.f32 %v1689, %v2974
        %v3024 = vmul.f32 %v1690, %v2974
        %v3025 = vmul.f32 %v1691, %v2974
        %v3026 = vmul.f32 %v1692, %v2974
        %v3027 = vmul.f32 %v1693, %v2980
        %v3028 = vmul.f32 %v1694, %v2980
        %v3029 = vmul.f32 %v1695, %v2980
        %v3030 = vmul.f32 %v1696, %v2980
        %v3031 = vmul.f32 %v1697, %v2986
        %v3032 = vmul.f32 %v1698, %v2986
        %v3033 = vmul.f32 %v1699, %v2986
        %v3034 = vmul.f32 %v1700, %v2986
        %v3035 = vmul.f32 %v1701, %v2992
        %v3036 = vmul.f32 %v1702, %v2992
        %v3037 = vmul.f32 %v1703, %v2992
        %v3038 = vmul.f32 %v1704, %v2992
        %v3039 = vmul.f32 %v1705, %v2998
        %v3040 = vmul.f32 %v1706, %v2998
        %v3041 = vmul.f32 %v1707, %v2998
        %v3042 = vmul.f32 %v1708, %v2998
        %v3043 = vmul.f32 %v1709, %v3004
        %v3044 = vmul.f32 %v1710, %v3004
        %v3045 = vmul.f32 %v1711, %v3004
        %v3046 = vmul.f32 %v1712, %v3004
        %v3047 = vmul.f32 %v1713, %v3010
        %v3048 = vmul.f32 %v1714, %v3010
        %v3049 = vmul.f32 %v1715, %v3010
        %v3050 = vmul.f32 %v1716, %v3010
        %v3051 = vsel %vm469, %v3019, 0.0
        %3052 = vadd.xlane.f32.xlu0 %v3051
        %v3053 = vpop.xlane.xlu0 %3052
        %v3054 = vsel %vm469, %v3020, 0.0
        %3055 = vadd.xlane.f32.xlu0 %v3054
        %v3056 = vpop.xlane.xlu0 %3055
        %v3057 = vsel %vm469, %v3021, 0.0
        %3058 = vadd.xlane.f32.xlu0 %v3057
        %v3059 = vpop.xlane.xlu0 %3058
        %v3060 = vsel %vm469, %v3022, 0.0
        %3061 = vadd.xlane.f32.xlu0 %v3060
        %v3062 = vpop.xlane.xlu0 %3061
        %v3063 = vsel %vm469, %v3023, 0.0
        %3064 = vadd.xlane.f32.xlu0 %v3063
        %v3065 = vpop.xlane.xlu0 %3064
        %v3066 = vsel %vm469, %v3024, 0.0
        %3067 = vadd.xlane.f32.xlu0 %v3066
        %v3068 = vpop.xlane.xlu0 %3067
        %v3069 = vsel %vm469, %v3025, 0.0
        %3070 = vadd.xlane.f32.xlu0 %v3069
        %v3071 = vpop.xlane.xlu0 %3070
        %v3072 = vsel %vm469, %v3026, 0.0
        %3073 = vadd.xlane.f32.xlu0 %v3072
        %v3074 = vpop.xlane.xlu0 %3073
        %v3075 = vsel %vm469, %v3027, 0.0
        %3076 = vadd.xlane.f32.xlu0 %v3075
        %v3077 = vpop.xlane.xlu0 %3076
        %v3078 = vsel %vm469, %v3028, 0.0
        %3079 = vadd.xlane.f32.xlu0 %v3078
        %v3080 = vpop.xlane.xlu0 %3079
        %v3081 = vsel %vm469, %v3029, 0.0
        %3082 = vadd.xlane.f32.xlu0 %v3081
        %v3083 = vpop.xlane.xlu0 %3082
        %v3084 = vsel %vm469, %v3030, 0.0
        %3085 = vadd.xlane.f32.xlu0 %v3084
        %v3086 = vpop.xlane.xlu0 %3085
        %v3087 = vsel %vm469, %v3031, 0.0
        %3088 = vadd.xlane.f32.xlu0 %v3087
        %v3089 = vpop.xlane.xlu0 %3088
        %v3090 = vsel %vm469, %v3032, 0.0
        %3091 = vadd.xlane.f32.xlu0 %v3090
        %v3092 = vpop.xlane.xlu0 %3091
        %v3093 = vsel %vm469, %v3033, 0.0
        %3094 = vadd.xlane.f32.xlu0 %v3093
        %v3095 = vpop.xlane.xlu0 %3094
        %v3096 = vsel %vm469, %v3034, 0.0
        %3097 = vadd.xlane.f32.xlu0 %v3096
        %v3098 = vpop.xlane.xlu0 %3097
        %v3099 = vsel %vm469, %v3035, 0.0
        %3100 = vadd.xlane.f32.xlu0 %v3099
        %v3101 = vpop.xlane.xlu0 %3100
        %v3102 = vsel %vm469, %v3036, 0.0
        %3103 = vadd.xlane.f32.xlu0 %v3102
        %v3104 = vpop.xlane.xlu0 %3103
        %v3105 = vsel %vm469, %v3037, 0.0
        %3106 = vadd.xlane.f32.xlu0 %v3105
        %v3107 = vpop.xlane.xlu0 %3106
        %v3108 = vsel %vm469, %v3038, 0.0
        %3109 = vadd.xlane.f32.xlu0 %v3108
        %v3110 = vpop.xlane.xlu0 %3109
        %v3111 = vsel %vm469, %v3039, 0.0
        %3112 = vadd.xlane.f32.xlu0 %v3111
        %v3113 = vpop.xlane.xlu0 %3112
        %v3114 = vsel %vm469, %v3040, 0.0
        %3115 = vadd.xlane.f32.xlu0 %v3114
        %v3116 = vpop.xlane.xlu0 %3115
        %v3117 = vsel %vm469, %v3041, 0.0
        %3118 = vadd.xlane.f32.xlu0 %v3117
        %v3119 = vpop.xlane.xlu0 %3118
        %v3120 = vsel %vm469, %v3042, 0.0
        %3121 = vadd.xlane.f32.xlu0 %v3120
        %v3122 = vpop.xlane.xlu0 %3121
        %v3123 = vsel %vm469, %v3043, 0.0
        %3124 = vadd.xlane.f32.xlu0 %v3123
        %v3125 = vpop.xlane.xlu0 %3124
        %v3126 = vsel %vm469, %v3044, 0.0
        %3127 = vadd.xlane.f32.xlu0 %v3126
        %v3128 = vpop.xlane.xlu0 %3127
        %v3129 = vsel %vm469, %v3045, 0.0
        %3130 = vadd.xlane.f32.xlu0 %v3129
        %v3131 = vpop.xlane.xlu0 %3130
        %v3132 = vsel %vm469, %v3046, 0.0
        %3133 = vadd.xlane.f32.xlu0 %v3132
        %v3134 = vpop.xlane.xlu0 %3133
        %v3135 = vsel %vm469, %v3047, 0.0
        %3136 = vadd.xlane.f32.xlu0 %v3135
        %v3137 = vpop.xlane.xlu0 %3136
        %v3138 = vsel %vm469, %v3048, 0.0
        %3139 = vadd.xlane.f32.xlu0 %v3138
        %v3140 = vpop.xlane.xlu0 %3139
        %v3141 = vsel %vm469, %v3049, 0.0
        %3142 = vadd.xlane.f32.xlu0 %v3141
        %v3143 = vpop.xlane.xlu0 %3142
        %v3144 = vsel %vm469, %v3050, 0.0
        %3145 = vadd.xlane.f32.xlu0 %v3144
        %v3146 = vpop.xlane.xlu0 %3145
        %v3147 = vsel %vm1650, 1, 0
        %vm3148 = vcmp.eq.s32.totalorder %v3147, 1
        %v3149 = vsel %vm3148, %v1550, %v3053
        %v3150 = vsel %vm3148, %v1553, %v3056
        %v3151 = vsel %vm3148, %v1556, %v3059
        %v3152 = vsel %vm3148, %v1559, %v3062
        %v3153 = vsel %vm3148, %v1562, %v3065
        %v3154 = vsel %vm3148, %v1565, %v3068
        %v3155 = vsel %vm3148, %v1568, %v3071
        %v3156 = vsel %vm3148, %v1571, %v3074
        %v3157 = vsel %vm3148, %v1574, %v3077
        %v3158 = vsel %vm3148, %v1577, %v3080
        %v3159 = vsel %vm3148, %v1580, %v3083
        %v3160 = vsel %vm3148, %v1583, %v3086
        %v3161 = vsel %vm3148, %v1586, %v3089
        %v3162 = vsel %vm3148, %v1589, %v3092
        %v3163 = vsel %vm3148, %v1592, %v3095
        %v3164 = vsel %vm3148, %v1595, %v3098
        %v3165 = vsel %vm3148, %v1598, %v3101
        %v3166 = vsel %vm3148, %v1601, %v3104
        %v3167 = vsel %vm3148, %v1604, %v3107
        %v3168 = vsel %vm3148, %v1607, %v3110
        %v3169 = vsel %vm3148, %v1610, %v3113
        %v3170 = vsel %vm3148, %v1613, %v3116
        %v3171 = vsel %vm3148, %v1616, %v3119
        %v3172 = vsel %vm3148, %v1619, %v3122
        %v3173 = vsel %vm3148, %v1622, %v3125
        %v3174 = vsel %vm3148, %v1625, %v3128
        %v3175 = vsel %vm3148, %v1628, %v3131
        %v3176 = vsel %vm3148, %v1631, %v3134
        %v3177 = vsel %vm3148, %v1634, %v3137
        %v3178 = vsel %vm3148, %v1637, %v3140
        %v3179 = vsel %vm3148, %v1640, %v3143
        %v3180 = vsel %vm3148, %v1643, %v3146
        %v3181 = vsel %vm3148, %v1182, %v2685
        %v3182 = vsel %vm3148, %v1185, %v2688
        %v3183 = vsel %vm3148, %v1188, %v2691
        %v3184 = vsel %vm3148, %v1191, %v2694
        %v3185 = vsel %vm3148, %v1194, %v2697
        %v3186 = vsel %vm3148, %v1197, %v2700
        %v3187 = vsel %vm3148, %v1200, %v2703
        %v3188 = vsel %vm3148, %v1203, %v2706
        %v3189 = vsel %vm3148, %v1206, %v2709
        %v3190 = vsel %vm3148, %v1209, %v2712
        %v3191 = vsel %vm3148, %v1212, %v2715
        %v3192 = vsel %vm3148, %v1215, %v2718
        %v3193 = vsel %vm3148, %v1218, %v2721
        %v3194 = vsel %vm3148, %v1221, %v2724
        %v3195 = vsel %vm3148, %v1224, %v2727
        %v3196 = vsel %vm3148, %v1227, %v2730
        %v3197 = vsel %vm3148, %v1230, %v2733
        %v3198 = vsel %vm3148, %v1233, %v2736
        %v3199 = vsel %vm3148, %v1236, %v2739
        %v3200 = vsel %vm3148, %v1239, %v2742
        %v3201 = vsel %vm3148, %v1242, %v2745
        %v3202 = vsel %vm3148, %v1245, %v2748
        %v3203 = vsel %vm3148, %v1248, %v2751
        %v3204 = vsel %vm3148, %v1251, %v2754
        %v3205 = vsel %vm3148, %v1254, %v2757
        %v3206 = vsel %vm3148, %v1257, %v2760
        %v3207 = vsel %vm3148, %v1260, %v2763
        %v3208 = vsel %vm3148, %v1263, %v2766
        %v3209 = vsel %vm3148, %v1266, %v2769
        %v3210 = vsel %vm3148, %v1269, %v2772
        %v3211 = vsel %vm3148, %v1272, %v2775
        %v3212 = vsel %vm3148, %v1275, %v2778
        %v3213 = vsel %vm3148, %v1147, %v2650
        %v3214 = vrot.slane %v3213, 4
        %v3215 = vmin.f32 %v3213, %v3214
        %v3216 = vrot.slane %v3215, 2
        %v3217 = vmin.f32 %v3215, %v3216
        %v3218 = vrot.slane %v3217, 1
        %v3219 = vmin.f32 %v3217, %v3218
        %vm3220 = vcmp.ge.f32.partialorder %v3219, 1.0
        %vm3221 = vmor %vm1650, %vm3220
        %s3222 = scalar_lea.vmem %s254, 512
        %v3223 = vld [vmem:[%s3222] sm:$0xff]
        %v3224 = vld [vmem:[%s3222 + $0x8] sm:$0xff]
        %v3225 = vld [vmem:[%s3222 + $0x10] sm:$0xff]
        %v3226 = vld [vmem:[%s3222 + $0x18] sm:$0xff]
        %v3227 = vld [vmem:[%s3222 + $0x20] sm:$0xff]
        %v3228 = vld [vmem:[%s3222 + $0x28] sm:$0xff]
        %v3229 = vld [vmem:[%s3222 + $0x30] sm:$0xff]
        %v3230 = vld [vmem:[%s3222 + $0x38] sm:$0xff]
        %v3231 = vld [vmem:[%s3222 + $0x40] sm:$0xff]
        %v3232 = vld [vmem:[%s3222 + $0x48] sm:$0xff]
        %v3233 = vld [vmem:[%s3222 + $0x50] sm:$0xff]
        %v3234 = vld [vmem:[%s3222 + $0x58] sm:$0xff]
        %v3235 = vld [vmem:[%s3222 + $0x60] sm:$0xff]
        %v3236 = vld [vmem:[%s3222 + $0x68] sm:$0xff]
        %v3237 = vld [vmem:[%s3222 + $0x70] sm:$0xff]
        %v3238 = vld [vmem:[%s3222 + $0x78] sm:$0xff]
        %v3239 = vld [vmem:[%s3222 + $0x80] sm:$0xff]
        %v3240 = vld [vmem:[%s3222 + $0x88] sm:$0xff]
        %v3241 = vld [vmem:[%s3222 + $0x90] sm:$0xff]
        %v3242 = vld [vmem:[%s3222 + $0x98] sm:$0xff]
        %v3243 = vld [vmem:[%s3222 + $0xa0] sm:$0xff]
        %v3244 = vld [vmem:[%s3222 + $0xa8] sm:$0xff]
        %v3245 = vld [vmem:[%s3222 + $0xb0] sm:$0xff]
        %v3246 = vld [vmem:[%s3222 + $0xb8] sm:$0xff]
        %v3247 = vld [vmem:[%s3222 + $0xc0] sm:$0xff]
        %v3248 = vld [vmem:[%s3222 + $0xc8] sm:$0xff]
        %v3249 = vld [vmem:[%s3222 + $0xd0] sm:$0xff]
        %v3250 = vld [vmem:[%s3222 + $0xd8] sm:$0xff]
        %v3251 = vld [vmem:[%s3222 + $0xe0] sm:$0xff]
        %v3252 = vld [vmem:[%s3222 + $0xe8] sm:$0xff]
        %v3253 = vld [vmem:[%s3222 + $0xf0] sm:$0xff]
        %v3254 = vld [vmem:[%s3222 + $0xf8] sm:$0xff]
        %s3255 = scalar_lea.vmem %s261, 512
        %v3256 = vld [vmem:[%s3255] sm:$0xff]
        %v3257 = vld [vmem:[%s3255 + $0x8] sm:$0xff]
        %v3258 = vld [vmem:[%s3255 + $0x10] sm:$0xff]
        %v3259 = vld [vmem:[%s3255 + $0x18] sm:$0xff]
        %v3260 = vld [vmem:[%s3255 + $0x20] sm:$0xff]
        %v3261 = vld [vmem:[%s3255 + $0x28] sm:$0xff]
        %v3262 = vld [vmem:[%s3255 + $0x30] sm:$0xff]
        %v3263 = vld [vmem:[%s3255 + $0x38] sm:$0xff]
        %v3264 = vld [vmem:[%s3255 + $0x40] sm:$0xff]
        %v3265 = vld [vmem:[%s3255 + $0x48] sm:$0xff]
        %v3266 = vld [vmem:[%s3255 + $0x50] sm:$0xff]
        %v3267 = vld [vmem:[%s3255 + $0x58] sm:$0xff]
        %v3268 = vld [vmem:[%s3255 + $0x60] sm:$0xff]
        %v3269 = vld [vmem:[%s3255 + $0x68] sm:$0xff]
        %v3270 = vld [vmem:[%s3255 + $0x70] sm:$0xff]
        %v3271 = vld [vmem:[%s3255 + $0x78] sm:$0xff]
        %v3272 = vld [vmem:[%s3255 + $0x80] sm:$0xff]
        %v3273 = vld [vmem:[%s3255 + $0x88] sm:$0xff]
        %v3274 = vld [vmem:[%s3255 + $0x90] sm:$0xff]
        %v3275 = vld [vmem:[%s3255 + $0x98] sm:$0xff]
        %v3276 = vld [vmem:[%s3255 + $0xa0] sm:$0xff]
        %v3277 = vld [vmem:[%s3255 + $0xa8] sm:$0xff]
        %v3278 = vld [vmem:[%s3255 + $0xb0] sm:$0xff]
        %v3279 = vld [vmem:[%s3255 + $0xb8] sm:$0xff]
        %v3280 = vld [vmem:[%s3255 + $0xc0] sm:$0xff]
        %v3281 = vld [vmem:[%s3255 + $0xc8] sm:$0xff]
        %v3282 = vld [vmem:[%s3255 + $0xd0] sm:$0xff]
        %v3283 = vld [vmem:[%s3255 + $0xd8] sm:$0xff]
        %v3284 = vld [vmem:[%s3255 + $0xe0] sm:$0xff]
        %v3285 = vld [vmem:[%s3255 + $0xe8] sm:$0xff]
        %v3286 = vld [vmem:[%s3255 + $0xf0] sm:$0xff]
        %v3287 = vld [vmem:[%s3255 + $0xf8] sm:$0xff]
        %v3320 = vlaneseq
        %v3321 = vshrl.u32 %v3320, 7
        %v3322 = vsub.s32 %v695, %v3321
        %v3323 = vrot.slane %v3149, %v3322
        %v3324 = vlaneseq
        %v3325 = vshrl.u32 %v3324, 7
        %v3326 = vsub.s32 %v700, %v3325
        %v3327 = vrot.slane %v3150, %v3326
        %v3328 = vsel %vm705, %v3327, %v3323
        %v3329 = vlaneseq
        %v3330 = vshrl.u32 %v3329, 7
        %v3331 = vsub.s32 %v707, %v3330
        %v3332 = vrot.slane %v3151, %v3331
        %v3333 = vsel %vm712, %v3332, %v3328
        %v3334 = vlaneseq
        %v3335 = vshrl.u32 %v3334, 7
        %v3336 = vsub.s32 %v714, %v3335
        %v3337 = vrot.slane %v3152, %v3336
        %v3338 = vsel %vm719, %v3337, %v3333
        %v3339 = vlaneseq
        %v3340 = vshrl.u32 %v3339, 7
        %v3341 = vsub.s32 %v695, %v3340
        %v3342 = vrot.slane %v3153, %v3341
        %v3343 = vlaneseq
        %v3344 = vshrl.u32 %v3343, 7
        %v3345 = vsub.s32 %v700, %v3344
        %v3346 = vrot.slane %v3154, %v3345
        %v3347 = vsel %vm705, %v3346, %v3342
        %v3348 = vlaneseq
        %v3349 = vshrl.u32 %v3348, 7
        %v3350 = vsub.s32 %v707, %v3349
        %v3351 = vrot.slane %v3155, %v3350
        %v3352 = vsel %vm712, %v3351, %v3347
        %v3353 = vlaneseq
        %v3354 = vshrl.u32 %v3353, 7
        %v3355 = vsub.s32 %v714, %v3354
        %v3356 = vrot.slane %v3156, %v3355
        %v3357 = vsel %vm719, %v3356, %v3352
        %v3358 = vlaneseq
        %v3359 = vshrl.u32 %v3358, 7
        %v3360 = vsub.s32 %v695, %v3359
        %v3361 = vrot.slane %v3157, %v3360
        %v3362 = vlaneseq
        %v3363 = vshrl.u32 %v3362, 7
        %v3364 = vsub.s32 %v700, %v3363
        %v3365 = vrot.slane %v3158, %v3364
        %v3366 = vsel %vm705, %v3365, %v3361
        %v3367 = vlaneseq
        %v3368 = vshrl.u32 %v3367, 7
        %v3369 = vsub.s32 %v707, %v3368
        %v3370 = vrot.slane %v3159, %v3369
        %v3371 = vsel %vm712, %v3370, %v3366
        %v3372 = vlaneseq
        %v3373 = vshrl.u32 %v3372, 7
        %v3374 = vsub.s32 %v714, %v3373
        %v3375 = vrot.slane %v3160, %v3374
        %v3376 = vsel %vm719, %v3375, %v3371
        %v3377 = vlaneseq
        %v3378 = vshrl.u32 %v3377, 7
        %v3379 = vsub.s32 %v695, %v3378
        %v3380 = vrot.slane %v3161, %v3379
        %v3381 = vlaneseq
        %v3382 = vshrl.u32 %v3381, 7
        %v3383 = vsub.s32 %v700, %v3382
        %v3384 = vrot.slane %v3162, %v3383
        %v3385 = vsel %vm705, %v3384, %v3380
        %v3386 = vlaneseq
        %v3387 = vshrl.u32 %v3386, 7
        %v3388 = vsub.s32 %v707, %v3387
        %v3389 = vrot.slane %v3163, %v3388
        %v3390 = vsel %vm712, %v3389, %v3385
        %v3391 = vlaneseq
        %v3392 = vshrl.u32 %v3391, 7
        %v3393 = vsub.s32 %v714, %v3392
        %v3394 = vrot.slane %v3164, %v3393
        %v3395 = vsel %vm719, %v3394, %v3390
        %v3396 = vlaneseq
        %v3397 = vshrl.u32 %v3396, 7
        %v3398 = vsub.s32 %v695, %v3397
        %v3399 = vrot.slane %v3165, %v3398
        %v3400 = vlaneseq
        %v3401 = vshrl.u32 %v3400, 7
        %v3402 = vsub.s32 %v700, %v3401
        %v3403 = vrot.slane %v3166, %v3402
        %v3404 = vsel %vm705, %v3403, %v3399
        %v3405 = vlaneseq
        %v3406 = vshrl.u32 %v3405, 7
        %v3407 = vsub.s32 %v707, %v3406
        %v3408 = vrot.slane %v3167, %v3407
        %v3409 = vsel %vm712, %v3408, %v3404
        %v3410 = vlaneseq
        %v3411 = vshrl.u32 %v3410, 7
        %v3412 = vsub.s32 %v714, %v3411
        %v3413 = vrot.slane %v3168, %v3412
        %v3414 = vsel %vm719, %v3413, %v3409
        %v3415 = vlaneseq
        %v3416 = vshrl.u32 %v3415, 7
        %v3417 = vsub.s32 %v695, %v3416
        %v3418 = vrot.slane %v3169, %v3417
        %v3419 = vlaneseq
        %v3420 = vshrl.u32 %v3419, 7
        %v3421 = vsub.s32 %v700, %v3420
        %v3422 = vrot.slane %v3170, %v3421
        %v3423 = vsel %vm705, %v3422, %v3418
        %v3424 = vlaneseq
        %v3425 = vshrl.u32 %v3424, 7
        %v3426 = vsub.s32 %v707, %v3425
        %v3427 = vrot.slane %v3171, %v3426
        %v3428 = vsel %vm712, %v3427, %v3423
        %v3429 = vlaneseq
        %v3430 = vshrl.u32 %v3429, 7
        %v3431 = vsub.s32 %v714, %v3430
        %v3432 = vrot.slane %v3172, %v3431
        %v3433 = vsel %vm719, %v3432, %v3428
        %v3434 = vlaneseq
        %v3435 = vshrl.u32 %v3434, 7
        %v3436 = vsub.s32 %v695, %v3435
        %v3437 = vrot.slane %v3173, %v3436
        %v3438 = vlaneseq
        %v3439 = vshrl.u32 %v3438, 7
        %v3440 = vsub.s32 %v700, %v3439
        %v3441 = vrot.slane %v3174, %v3440
        %v3442 = vsel %vm705, %v3441, %v3437
        %v3443 = vlaneseq
        %v3444 = vshrl.u32 %v3443, 7
        %v3445 = vsub.s32 %v707, %v3444
        %v3446 = vrot.slane %v3175, %v3445
        %v3447 = vsel %vm712, %v3446, %v3442
        %v3448 = vlaneseq
        %v3449 = vshrl.u32 %v3448, 7
        %v3450 = vsub.s32 %v714, %v3449
        %v3451 = vrot.slane %v3176, %v3450
        %v3452 = vsel %vm719, %v3451, %v3447
        %v3453 = vlaneseq
        %v3454 = vshrl.u32 %v3453, 7
        %v3455 = vsub.s32 %v695, %v3454
        %v3456 = vrot.slane %v3177, %v3455
        %v3457 = vlaneseq
        %v3458 = vshrl.u32 %v3457, 7
        %v3459 = vsub.s32 %v700, %v3458
        %v3460 = vrot.slane %v3178, %v3459
        %v3461 = vsel %vm705, %v3460, %v3456
        %v3462 = vlaneseq
        %v3463 = vshrl.u32 %v3462, 7
        %v3464 = vsub.s32 %v707, %v3463
        %v3465 = vrot.slane %v3179, %v3464
        %v3466 = vsel %vm712, %v3465, %v3461
        %v3467 = vlaneseq
        %v3468 = vshrl.u32 %v3467, 7
        %v3469 = vsub.s32 %v714, %v3468
        %v3470 = vrot.slane %v3180, %v3469
        %v3471 = vsel %vm719, %v3470, %v3466
        %v3472 = vsel %vm855, %v3338, %v3338
        %v3473 = vsel %vm857, %v3338, %v3472
        %v3474 = vsel %vm859, %v3338, %v3473
        %v3475 = vsel %vm861, %v3338, %v3474
        %v3476 = vsel %vm863, %v3338, %v3475
        %v3477 = vsel %vm865, %v3338, %v3476
        %v3478 = vsel %vm855, %v3357, %v3357
        %v3479 = vsel %vm857, %v3357, %v3478
        %v3480 = vsel %vm859, %v3357, %v3479
        %v3481 = vsel %vm861, %v3357, %v3480
        %v3482 = vsel %vm863, %v3357, %v3481
        %v3483 = vsel %vm865, %v3357, %v3482
        %v3484 = vsel %vm855, %v3376, %v3376
        %v3485 = vsel %vm857, %v3376, %v3484
        %v3486 = vsel %vm859, %v3376, %v3485
        %v3487 = vsel %vm861, %v3376, %v3486
        %v3488 = vsel %vm863, %v3376, %v3487
        %v3489 = vsel %vm865, %v3376, %v3488
        %v3490 = vsel %vm855, %v3395, %v3395
        %v3491 = vsel %vm857, %v3395, %v3490
        %v3492 = vsel %vm859, %v3395, %v3491
        %v3493 = vsel %vm861, %v3395, %v3492
        %v3494 = vsel %vm863, %v3395, %v3493
        %v3495 = vsel %vm865, %v3395, %v3494
        %v3496 = vsel %vm855, %v3414, %v3414
        %v3497 = vsel %vm857, %v3414, %v3496
        %v3498 = vsel %vm859, %v3414, %v3497
        %v3499 = vsel %vm861, %v3414, %v3498
        %v3500 = vsel %vm863, %v3414, %v3499
        %v3501 = vsel %vm865, %v3414, %v3500
        %v3502 = vsel %vm855, %v3433, %v3433
        %v3503 = vsel %vm857, %v3433, %v3502
        %v3504 = vsel %vm859, %v3433, %v3503
        %v3505 = vsel %vm861, %v3433, %v3504
        %v3506 = vsel %vm863, %v3433, %v3505
        %v3507 = vsel %vm865, %v3433, %v3506
        %v3508 = vsel %vm855, %v3452, %v3452
        %v3509 = vsel %vm857, %v3452, %v3508
        %v3510 = vsel %vm859, %v3452, %v3509
        %v3511 = vsel %vm861, %v3452, %v3510
        %v3512 = vsel %vm863, %v3452, %v3511
        %v3513 = vsel %vm865, %v3452, %v3512
        %v3514 = vsel %vm855, %v3471, %v3471
        %v3515 = vsel %vm857, %v3471, %v3514
        %v3516 = vsel %vm859, %v3471, %v3515
        %v3517 = vsel %vm861, %v3471, %v3516
        %v3518 = vsel %vm863, %v3471, %v3517
        %v3519 = vsel %vm865, %v3471, %v3518
        %v3528 = vmul.f32 %v3223, %v3477
        %v3529 = vmul.f32 %v3224, %v3477
        %v3530 = vmul.f32 %v3225, %v3477
        %v3531 = vmul.f32 %v3226, %v3477
        %v3532 = vmul.f32 %v3227, %v3483
        %v3533 = vmul.f32 %v3228, %v3483
        %v3534 = vmul.f32 %v3229, %v3483
        %v3535 = vmul.f32 %v3230, %v3483
        %v3536 = vmul.f32 %v3231, %v3489
        %v3537 = vmul.f32 %v3232, %v3489
        %v3538 = vmul.f32 %v3233, %v3489
        %v3539 = vmul.f32 %v3234, %v3489
        %v3540 = vmul.f32 %v3235, %v3495
        %v3541 = vmul.f32 %v3236, %v3495
        %v3542 = vmul.f32 %v3237, %v3495
        %v3543 = vmul.f32 %v3238, %v3495
        %v3544 = vmul.f32 %v3239, %v3501
        %v3545 = vmul.f32 %v3240, %v3501
        %v3546 = vmul.f32 %v3241, %v3501
        %v3547 = vmul.f32 %v3242, %v3501
        %v3548 = vmul.f32 %v3243, %v3507
        %v3549 = vmul.f32 %v3244, %v3507
        %v3550 = vmul.f32 %v3245, %v3507
        %v3551 = vmul.f32 %v3246, %v3507
        %v3552 = vmul.f32 %v3247, %v3513
        %v3553 = vmul.f32 %v3248, %v3513
        %v3554 = vmul.f32 %v3249, %v3513
        %v3555 = vmul.f32 %v3250, %v3513
        %v3556 = vmul.f32 %v3251, %v3519
        %v3557 = vmul.f32 %v3252, %v3519
        %v3558 = vmul.f32 %v3253, %v3519
        %v3559 = vmul.f32 %v3254, %v3519
        %v3560 = vsel %vm469, %v3528, 0.0
        %3561 = vadd.xlane.f32.xlu0 %v3560
        %v3562 = vpop.xlane.xlu0 %3561
        %v3563 = vsel %vm469, %v3529, 0.0
        %3564 = vadd.xlane.f32.xlu0 %v3563
        %v3565 = vpop.xlane.xlu0 %3564
        %v3566 = vsel %vm469, %v3530, 0.0
        %3567 = vadd.xlane.f32.xlu0 %v3566
        %v3568 = vpop.xlane.xlu0 %3567
        %v3569 = vsel %vm469, %v3531, 0.0
        %3570 = vadd.xlane.f32.xlu0 %v3569
        %v3571 = vpop.xlane.xlu0 %3570
        %v3572 = vsel %vm469, %v3532, 0.0
        %3573 = vadd.xlane.f32.xlu0 %v3572
        %v3574 = vpop.xlane.xlu0 %3573
        %v3575 = vsel %vm469, %v3533, 0.0
        %3576 = vadd.xlane.f32.xlu0 %v3575
        %v3577 = vpop.xlane.xlu0 %3576
        %v3578 = vsel %vm469, %v3534, 0.0
        %3579 = vadd.xlane.f32.xlu0 %v3578
        %v3580 = vpop.xlane.xlu0 %3579
        %v3581 = vsel %vm469, %v3535, 0.0
        %3582 = vadd.xlane.f32.xlu0 %v3581
        %v3583 = vpop.xlane.xlu0 %3582
        %v3584 = vsel %vm469, %v3536, 0.0
        %3585 = vadd.xlane.f32.xlu0 %v3584
        %v3586 = vpop.xlane.xlu0 %3585
        %v3587 = vsel %vm469, %v3537, 0.0
        %3588 = vadd.xlane.f32.xlu0 %v3587
        %v3589 = vpop.xlane.xlu0 %3588
        %v3590 = vsel %vm469, %v3538, 0.0
        %3591 = vadd.xlane.f32.xlu0 %v3590
        %v3592 = vpop.xlane.xlu0 %3591
        %v3593 = vsel %vm469, %v3539, 0.0
        %3594 = vadd.xlane.f32.xlu0 %v3593
        %v3595 = vpop.xlane.xlu0 %3594
        %v3596 = vsel %vm469, %v3540, 0.0
        %3597 = vadd.xlane.f32.xlu0 %v3596
        %v3598 = vpop.xlane.xlu0 %3597
        %v3599 = vsel %vm469, %v3541, 0.0
        %3600 = vadd.xlane.f32.xlu0 %v3599
        %v3601 = vpop.xlane.xlu0 %3600
        %v3602 = vsel %vm469, %v3542, 0.0
        %3603 = vadd.xlane.f32.xlu0 %v3602
        %v3604 = vpop.xlane.xlu0 %3603
        %v3605 = vsel %vm469, %v3543, 0.0
        %3606 = vadd.xlane.f32.xlu0 %v3605
        %v3607 = vpop.xlane.xlu0 %3606
        %v3608 = vsel %vm469, %v3544, 0.0
        %3609 = vadd.xlane.f32.xlu0 %v3608
        %v3610 = vpop.xlane.xlu0 %3609
        %v3611 = vsel %vm469, %v3545, 0.0
        %3612 = vadd.xlane.f32.xlu0 %v3611
        %v3613 = vpop.xlane.xlu0 %3612
        %v3614 = vsel %vm469, %v3546, 0.0
        %3615 = vadd.xlane.f32.xlu0 %v3614
        %v3616 = vpop.xlane.xlu0 %3615
        %v3617 = vsel %vm469, %v3547, 0.0
        %3618 = vadd.xlane.f32.xlu0 %v3617
        %v3619 = vpop.xlane.xlu0 %3618
        %v3620 = vsel %vm469, %v3548, 0.0
        %3621 = vadd.xlane.f32.xlu0 %v3620
        %v3622 = vpop.xlane.xlu0 %3621
        %v3623 = vsel %vm469, %v3549, 0.0
        %3624 = vadd.xlane.f32.xlu0 %v3623
        %v3625 = vpop.xlane.xlu0 %3624
        %v3626 = vsel %vm469, %v3550, 0.0
        %3627 = vadd.xlane.f32.xlu0 %v3626
        %v3628 = vpop.xlane.xlu0 %3627
        %v3629 = vsel %vm469, %v3551, 0.0
        %3630 = vadd.xlane.f32.xlu0 %v3629
        %v3631 = vpop.xlane.xlu0 %3630
        %v3632 = vsel %vm469, %v3552, 0.0
        %3633 = vadd.xlane.f32.xlu0 %v3632
        %v3634 = vpop.xlane.xlu0 %3633
        %v3635 = vsel %vm469, %v3553, 0.0
        %3636 = vadd.xlane.f32.xlu0 %v3635
        %v3637 = vpop.xlane.xlu0 %3636
        %v3638 = vsel %vm469, %v3554, 0.0
        %3639 = vadd.xlane.f32.xlu0 %v3638
        %v3640 = vpop.xlane.xlu0 %3639
        %v3641 = vsel %vm469, %v3555, 0.0
        %3642 = vadd.xlane.f32.xlu0 %v3641
        %v3643 = vpop.xlane.xlu0 %3642
        %v3644 = vsel %vm469, %v3556, 0.0
        %3645 = vadd.xlane.f32.xlu0 %v3644
        %v3646 = vpop.xlane.xlu0 %3645
        %v3647 = vsel %vm469, %v3557, 0.0
        %3648 = vadd.xlane.f32.xlu0 %v3647
        %v3649 = vpop.xlane.xlu0 %3648
        %v3650 = vsel %vm469, %v3558, 0.0
        %3651 = vadd.xlane.f32.xlu0 %v3650
        %v3652 = vpop.xlane.xlu0 %3651
        %v3653 = vsel %vm469, %v3559, 0.0
        %3654 = vadd.xlane.f32.xlu0 %v3653
        %v3655 = vpop.xlane.xlu0 %3654
        %vm3656 = vcmp.lt.f32.partialorder %v3562, 0.0
        %vm3657 = vcmp.lt.f32.partialorder %v3565, 0.0
        %vm3658 = vcmp.lt.f32.partialorder %v3568, 0.0
        %vm3659 = vcmp.lt.f32.partialorder %v3571, 0.0
        %vm3660 = vcmp.lt.f32.partialorder %v3574, 0.0
        %vm3661 = vcmp.lt.f32.partialorder %v3577, 0.0
        %vm3662 = vcmp.lt.f32.partialorder %v3580, 0.0
        %vm3663 = vcmp.lt.f32.partialorder %v3583, 0.0
        %vm3664 = vcmp.lt.f32.partialorder %v3586, 0.0
        %vm3665 = vcmp.lt.f32.partialorder %v3589, 0.0
        %vm3666 = vcmp.lt.f32.partialorder %v3592, 0.0
        %vm3667 = vcmp.lt.f32.partialorder %v3595, 0.0
        %vm3668 = vcmp.lt.f32.partialorder %v3598, 0.0
        %vm3669 = vcmp.lt.f32.partialorder %v3601, 0.0
        %vm3670 = vcmp.lt.f32.partialorder %v3604, 0.0
        %vm3671 = vcmp.lt.f32.partialorder %v3607, 0.0
        %vm3672 = vcmp.lt.f32.partialorder %v3610, 0.0
        %vm3673 = vcmp.lt.f32.partialorder %v3613, 0.0
        %vm3674 = vcmp.lt.f32.partialorder %v3616, 0.0
        %vm3675 = vcmp.lt.f32.partialorder %v3619, 0.0
        %vm3676 = vcmp.lt.f32.partialorder %v3622, 0.0
        %vm3677 = vcmp.lt.f32.partialorder %v3625, 0.0
        %vm3678 = vcmp.lt.f32.partialorder %v3628, 0.0
        %vm3679 = vcmp.lt.f32.partialorder %v3631, 0.0
        %vm3680 = vcmp.lt.f32.partialorder %v3634, 0.0
        %vm3681 = vcmp.lt.f32.partialorder %v3637, 0.0
        %vm3682 = vcmp.lt.f32.partialorder %v3640, 0.0
        %vm3683 = vcmp.lt.f32.partialorder %v3643, 0.0
        %vm3684 = vcmp.lt.f32.partialorder %v3646, 0.0
        %vm3685 = vcmp.lt.f32.partialorder %v3649, 0.0
        %vm3686 = vcmp.lt.f32.partialorder %v3652, 0.0
        %vm3687 = vcmp.lt.f32.partialorder %v3655, 0.0
        %v3688 = vsel %vm3656, 1, 0
        %v3689 = vsel %vm3657, 1, 0
        %v3690 = vsel %vm3658, 1, 0
        %v3691 = vsel %vm3659, 1, 0
        %v3692 = vsel %vm3660, 1, 0
        %v3693 = vsel %vm3661, 1, 0
        %v3694 = vsel %vm3662, 1, 0
        %v3695 = vsel %vm3663, 1, 0
        %v3696 = vsel %vm3664, 1, 0
        %v3697 = vsel %vm3665, 1, 0
        %v3698 = vsel %vm3666, 1, 0
        %v3699 = vsel %vm3667, 1, 0
        %v3700 = vsel %vm3668, 1, 0
        %v3701 = vsel %vm3669, 1, 0
        %v3702 = vsel %vm3670, 1, 0
        %v3703 = vsel %vm3671, 1, 0
        %v3704 = vsel %vm3672, 1, 0
        %v3705 = vsel %vm3673, 1, 0
        %v3706 = vsel %vm3674, 1, 0
        %v3707 = vsel %vm3675, 1, 0
        %v3708 = vsel %vm3676, 1, 0
        %v3709 = vsel %vm3677, 1, 0
        %v3710 = vsel %vm3678, 1, 0
        %v3711 = vsel %vm3679, 1, 0
        %v3712 = vsel %vm3680, 1, 0
        %v3713 = vsel %vm3681, 1, 0
        %v3714 = vsel %vm3682, 1, 0
        %v3715 = vsel %vm3683, 1, 0
        %v3716 = vsel %vm3684, 1, 0
        %v3717 = vsel %vm3685, 1, 0
        %v3718 = vsel %vm3686, 1, 0
        %v3719 = vsel %vm3687, 1, 0
        %v3720 = vcvt.s32.f32 %v3688
        %v3721 = vcvt.s32.f32 %v3689
        %v3722 = vcvt.s32.f32 %v3690
        %v3723 = vcvt.s32.f32 %v3691
        %v3724 = vcvt.s32.f32 %v3692
        %v3725 = vcvt.s32.f32 %v3693
        %v3726 = vcvt.s32.f32 %v3694
        %v3727 = vcvt.s32.f32 %v3695
        %v3728 = vcvt.s32.f32 %v3696
        %v3729 = vcvt.s32.f32 %v3697
        %v3730 = vcvt.s32.f32 %v3698
        %v3731 = vcvt.s32.f32 %v3699
        %v3732 = vcvt.s32.f32 %v3700
        %v3733 = vcvt.s32.f32 %v3701
        %v3734 = vcvt.s32.f32 %v3702
        %v3735 = vcvt.s32.f32 %v3703
        %v3736 = vcvt.s32.f32 %v3704
        %v3737 = vcvt.s32.f32 %v3705
        %v3738 = vcvt.s32.f32 %v3706
        %v3739 = vcvt.s32.f32 %v3707
        %v3740 = vcvt.s32.f32 %v3708
        %v3741 = vcvt.s32.f32 %v3709
        %v3742 = vcvt.s32.f32 %v3710
        %v3743 = vcvt.s32.f32 %v3711
        %v3744 = vcvt.s32.f32 %v3712
        %v3745 = vcvt.s32.f32 %v3713
        %v3746 = vcvt.s32.f32 %v3714
        %v3747 = vcvt.s32.f32 %v3715
        %v3748 = vcvt.s32.f32 %v3716
        %v3749 = vcvt.s32.f32 %v3717
        %v3750 = vcvt.s32.f32 %v3718
        %v3751 = vcvt.s32.f32 %v3719
        %v3784 = vlaneseq
        %v3785 = vshrl.u32 %v3784, 7
        %v3786 = vsub.s32 %v695, %v3785
        %v3787 = vrot.slane %v3720, %v3786
        %v3788 = vlaneseq
        %v3789 = vshrl.u32 %v3788, 7
        %v3790 = vsub.s32 %v700, %v3789
        %v3791 = vrot.slane %v3721, %v3790
        %v3792 = vsel %vm705, %v3791, %v3787
        %v3793 = vlaneseq
        %v3794 = vshrl.u32 %v3793, 7
        %v3795 = vsub.s32 %v707, %v3794
        %v3796 = vrot.slane %v3722, %v3795
        %v3797 = vsel %vm712, %v3796, %v3792
        %v3798 = vlaneseq
        %v3799 = vshrl.u32 %v3798, 7
        %v3800 = vsub.s32 %v714, %v3799
        %v3801 = vrot.slane %v3723, %v3800
        %v3802 = vsel %vm719, %v3801, %v3797
        %v3803 = vlaneseq
        %v3804 = vshrl.u32 %v3803, 7
        %v3805 = vsub.s32 %v695, %v3804
        %v3806 = vrot.slane %v3724, %v3805
        %v3807 = vlaneseq
        %v3808 = vshrl.u32 %v3807, 7
        %v3809 = vsub.s32 %v700, %v3808
        %v3810 = vrot.slane %v3725, %v3809
        %v3811 = vsel %vm705, %v3810, %v3806
        %v3812 = vlaneseq
        %v3813 = vshrl.u32 %v3812, 7
        %v3814 = vsub.s32 %v707, %v3813
        %v3815 = vrot.slane %v3726, %v3814
        %v3816 = vsel %vm712, %v3815, %v3811
        %v3817 = vlaneseq
        %v3818 = vshrl.u32 %v3817, 7
        %v3819 = vsub.s32 %v714, %v3818
        %v3820 = vrot.slane %v3727, %v3819
        %v3821 = vsel %vm719, %v3820, %v3816
        %v3822 = vlaneseq
        %v3823 = vshrl.u32 %v3822, 7
        %v3824 = vsub.s32 %v695, %v3823
        %v3825 = vrot.slane %v3728, %v3824
        %v3826 = vlaneseq
        %v3827 = vshrl.u32 %v3826, 7
        %v3828 = vsub.s32 %v700, %v3827
        %v3829 = vrot.slane %v3729, %v3828
        %v3830 = vsel %vm705, %v3829, %v3825
        %v3831 = vlaneseq
        %v3832 = vshrl.u32 %v3831, 7
        %v3833 = vsub.s32 %v707, %v3832
        %v3834 = vrot.slane %v3730, %v3833
        %v3835 = vsel %vm712, %v3834, %v3830
        %v3836 = vlaneseq
        %v3837 = vshrl.u32 %v3836, 7
        %v3838 = vsub.s32 %v714, %v3837
        %v3839 = vrot.slane %v3731, %v3838
        %v3840 = vsel %vm719, %v3839, %v3835
        %v3841 = vlaneseq
        %v3842 = vshrl.u32 %v3841, 7
        %v3843 = vsub.s32 %v695, %v3842
        %v3844 = vrot.slane %v3732, %v3843
        %v3845 = vlaneseq
        %v3846 = vshrl.u32 %v3845, 7
        %v3847 = vsub.s32 %v700, %v3846
        %v3848 = vrot.slane %v3733, %v3847
        %v3849 = vsel %vm705, %v3848, %v3844
        %v3850 = vlaneseq
        %v3851 = vshrl.u32 %v3850, 7
        %v3852 = vsub.s32 %v707, %v3851
        %v3853 = vrot.slane %v3734, %v3852
        %v3854 = vsel %vm712, %v3853, %v3849
        %v3855 = vlaneseq
        %v3856 = vshrl.u32 %v3855, 7
        %v3857 = vsub.s32 %v714, %v3856
        %v3858 = vrot.slane %v3735, %v3857
        %v3859 = vsel %vm719, %v3858, %v3854
        %v3860 = vlaneseq
        %v3861 = vshrl.u32 %v3860, 7
        %v3862 = vsub.s32 %v695, %v3861
        %v3863 = vrot.slane %v3736, %v3862
        %v3864 = vlaneseq
        %v3865 = vshrl.u32 %v3864, 7
        %v3866 = vsub.s32 %v700, %v3865
        %v3867 = vrot.slane %v3737, %v3866
        %v3868 = vsel %vm705, %v3867, %v3863
        %v3869 = vlaneseq
        %v3870 = vshrl.u32 %v3869, 7
        %v3871 = vsub.s32 %v707, %v3870
        %v3872 = vrot.slane %v3738, %v3871
        %v3873 = vsel %vm712, %v3872, %v3868
        %v3874 = vlaneseq
        %v3875 = vshrl.u32 %v3874, 7
        %v3876 = vsub.s32 %v714, %v3875
        %v3877 = vrot.slane %v3739, %v3876
        %v3878 = vsel %vm719, %v3877, %v3873
        %v3879 = vlaneseq
        %v3880 = vshrl.u32 %v3879, 7
        %v3881 = vsub.s32 %v695, %v3880
        %v3882 = vrot.slane %v3740, %v3881
        %v3883 = vlaneseq
        %v3884 = vshrl.u32 %v3883, 7
        %v3885 = vsub.s32 %v700, %v3884
        %v3886 = vrot.slane %v3741, %v3885
        %v3887 = vsel %vm705, %v3886, %v3882
        %v3888 = vlaneseq
        %v3889 = vshrl.u32 %v3888, 7
        %v3890 = vsub.s32 %v707, %v3889
        %v3891 = vrot.slane %v3742, %v3890
        %v3892 = vsel %vm712, %v3891, %v3887
        %v3893 = vlaneseq
        %v3894 = vshrl.u32 %v3893, 7
        %v3895 = vsub.s32 %v714, %v3894
        %v3896 = vrot.slane %v3743, %v3895
        %v3897 = vsel %vm719, %v3896, %v3892
        %v3898 = vlaneseq
        %v3899 = vshrl.u32 %v3898, 7
        %v3900 = vsub.s32 %v695, %v3899
        %v3901 = vrot.slane %v3744, %v3900
        %v3902 = vlaneseq
        %v3903 = vshrl.u32 %v3902, 7
        %v3904 = vsub.s32 %v700, %v3903
        %v3905 = vrot.slane %v3745, %v3904
        %v3906 = vsel %vm705, %v3905, %v3901
        %v3907 = vlaneseq
        %v3908 = vshrl.u32 %v3907, 7
        %v3909 = vsub.s32 %v707, %v3908
        %v3910 = vrot.slane %v3746, %v3909
        %v3911 = vsel %vm712, %v3910, %v3906
        %v3912 = vlaneseq
        %v3913 = vshrl.u32 %v3912, 7
        %v3914 = vsub.s32 %v714, %v3913
        %v3915 = vrot.slane %v3747, %v3914
        %v3916 = vsel %vm719, %v3915, %v3911
        %v3917 = vlaneseq
        %v3918 = vshrl.u32 %v3917, 7
        %v3919 = vsub.s32 %v695, %v3918
        %v3920 = vrot.slane %v3748, %v3919
        %v3921 = vlaneseq
        %v3922 = vshrl.u32 %v3921, 7
        %v3923 = vsub.s32 %v700, %v3922
        %v3924 = vrot.slane %v3749, %v3923
        %v3925 = vsel %vm705, %v3924, %v3920
        %v3926 = vlaneseq
        %v3927 = vshrl.u32 %v3926, 7
        %v3928 = vsub.s32 %v707, %v3927
        %v3929 = vrot.slane %v3750, %v3928
        %v3930 = vsel %vm712, %v3929, %v3925
        %v3931 = vlaneseq
        %v3932 = vshrl.u32 %v3931, 7
        %v3933 = vsub.s32 %v714, %v3932
        %v3934 = vrot.slane %v3751, %v3933
        %v3935 = vsel %vm719, %v3934, %v3930
        %v3936 = vsel %vm855, %v3802, %v3802
        %v3937 = vsel %vm857, %v3802, %v3936
        %v3938 = vsel %vm859, %v3802, %v3937
        %v3939 = vsel %vm861, %v3802, %v3938
        %v3940 = vsel %vm863, %v3802, %v3939
        %v3941 = vsel %vm865, %v3802, %v3940
        %v3942 = vsel %vm855, %v3821, %v3821
        %v3943 = vsel %vm857, %v3821, %v3942
        %v3944 = vsel %vm859, %v3821, %v3943
        %v3945 = vsel %vm861, %v3821, %v3944
        %v3946 = vsel %vm863, %v3821, %v3945
        %v3947 = vsel %vm865, %v3821, %v3946
        %v3948 = vsel %vm855, %v3840, %v3840
        %v3949 = vsel %vm857, %v3840, %v3948
        %v3950 = vsel %vm859, %v3840, %v3949
        %v3951 = vsel %vm861, %v3840, %v3950
        %v3952 = vsel %vm863, %v3840, %v3951
        %v3953 = vsel %vm865, %v3840, %v3952
        %v3954 = vsel %vm855, %v3859, %v3859
        %v3955 = vsel %vm857, %v3859, %v3954
        %v3956 = vsel %vm859, %v3859, %v3955
        %v3957 = vsel %vm861, %v3859, %v3956
        %v3958 = vsel %vm863, %v3859, %v3957
        %v3959 = vsel %vm865, %v3859, %v3958
        %v3960 = vsel %vm855, %v3878, %v3878
        %v3961 = vsel %vm857, %v3878, %v3960
        %v3962 = vsel %vm859, %v3878, %v3961
        %v3963 = vsel %vm861, %v3878, %v3962
        %v3964 = vsel %vm863, %v3878, %v3963
        %v3965 = vsel %vm865, %v3878, %v3964
        %v3966 = vsel %vm855, %v3897, %v3897
        %v3967 = vsel %vm857, %v3897, %v3966
        %v3968 = vsel %vm859, %v3897, %v3967
        %v3969 = vsel %vm861, %v3897, %v3968
        %v3970 = vsel %vm863, %v3897, %v3969
        %v3971 = vsel %vm865, %v3897, %v3970
        %v3972 = vsel %vm855, %v3916, %v3916
        %v3973 = vsel %vm857, %v3916, %v3972
        %v3974 = vsel %vm859, %v3916, %v3973
        %v3975 = vsel %vm861, %v3916, %v3974
        %v3976 = vsel %vm863, %v3916, %v3975
        %v3977 = vsel %vm865, %v3916, %v3976
        %v3978 = vsel %vm855, %v3935, %v3935
        %v3979 = vsel %vm857, %v3935, %v3978
        %v3980 = vsel %vm859, %v3935, %v3979
        %v3981 = vsel %vm861, %v3935, %v3980
        %v3982 = vsel %vm863, %v3935, %v3981
        %v3983 = vsel %vm865, %v3935, %v3982
        %v3992 = vmul.f32 %v275, %v3941
        %v3993 = vmul.f32 %v276, %v3941
        %v3994 = vmul.f32 %v275, %v3947
        %v3995 = vmul.f32 %v276, %v3947
        %v3996 = vmul.f32 %v275, %v3953
        %v3997 = vmul.f32 %v276, %v3953
        %v3998 = vmul.f32 %v275, %v3959
        %v3999 = vmul.f32 %v276, %v3959
        %v4000 = vmul.f32 %v275, %v3965
        %v4001 = vmul.f32 %v276, %v3965
        %v4002 = vmul.f32 %v275, %v3971
        %v4003 = vmul.f32 %v276, %v3971
        %v4004 = vmul.f32 %v275, %v3977
        %v4005 = vmul.f32 %v276, %v3977
        %v4006 = vmul.f32 %v275, %v3983
        %v4007 = vmul.f32 %v276, %v3983
        %v4008 = vsel %vm469, %v3992, 0.0
        %4009 = vadd.xlane.f32.xlu0 %v4008
        %v4010 = vpop.xlane.xlu0 %4009
        %v4011 = vsel %vm469, %v3993, 0.0
        %4012 = vadd.xlane.f32.xlu0 %v4011
        %v4013 = vpop.xlane.xlu0 %4012
        %v4014 = vsel %vm469, %v3994, 0.0
        %4015 = vadd.xlane.f32.xlu0 %v4014
        %v4016 = vpop.xlane.xlu0 %4015
        %v4017 = vsel %vm469, %v3995, 0.0
        %4018 = vadd.xlane.f32.xlu0 %v4017
        %v4019 = vpop.xlane.xlu0 %4018
        %v4020 = vsel %vm469, %v3996, 0.0
        %4021 = vadd.xlane.f32.xlu0 %v4020
        %v4022 = vpop.xlane.xlu0 %4021
        %v4023 = vsel %vm469, %v3997, 0.0
        %4024 = vadd.xlane.f32.xlu0 %v4023
        %v4025 = vpop.xlane.xlu0 %4024
        %v4026 = vsel %vm469, %v3998, 0.0
        %4027 = vadd.xlane.f32.xlu0 %v4026
        %v4028 = vpop.xlane.xlu0 %4027
        %v4029 = vsel %vm469, %v3999, 0.0
        %4030 = vadd.xlane.f32.xlu0 %v4029
        %v4031 = vpop.xlane.xlu0 %4030
        %v4032 = vsel %vm469, %v4000, 0.0
        %4033 = vadd.xlane.f32.xlu0 %v4032
        %v4034 = vpop.xlane.xlu0 %4033
        %v4035 = vsel %vm469, %v4001, 0.0
        %4036 = vadd.xlane.f32.xlu0 %v4035
        %v4037 = vpop.xlane.xlu0 %4036
        %v4038 = vsel %vm469, %v4002, 0.0
        %4039 = vadd.xlane.f32.xlu0 %v4038
        %v4040 = vpop.xlane.xlu0 %4039
        %v4041 = vsel %vm469, %v4003, 0.0
        %4042 = vadd.xlane.f32.xlu0 %v4041
        %v4043 = vpop.xlane.xlu0 %4042
        %v4044 = vsel %vm469, %v4004, 0.0
        %4045 = vadd.xlane.f32.xlu0 %v4044
        %v4046 = vpop.xlane.xlu0 %4045
        %v4047 = vsel %vm469, %v4005, 0.0
        %4048 = vadd.xlane.f32.xlu0 %v4047
        %v4049 = vpop.xlane.xlu0 %4048
        %v4050 = vsel %vm469, %v4006, 0.0
        %4051 = vadd.xlane.f32.xlu0 %v4050
        %v4052 = vpop.xlane.xlu0 %4051
        %v4053 = vsel %vm469, %v4007, 0.0
        %4054 = vadd.xlane.f32.xlu0 %v4053
        %v4055 = vpop.xlane.xlu0 %4054
        %v4056 = vmul.f32 %v4010, 0.5
        %v4057 = vmul.f32 %v4013, 0.5
        %v4058 = vmul.f32 %v4016, 0.5
        %v4059 = vmul.f32 %v4019, 0.5
        %v4060 = vmul.f32 %v4022, 0.5
        %v4061 = vmul.f32 %v4025, 0.5
        %v4062 = vmul.f32 %v4028, 0.5
        %v4063 = vmul.f32 %v4031, 0.5
        %v4064 = vmul.f32 %v4034, 0.5
        %v4065 = vmul.f32 %v4037, 0.5
        %v4066 = vmul.f32 %v4040, 0.5
        %v4067 = vmul.f32 %v4043, 0.5
        %v4068 = vmul.f32 %v4046, 0.5
        %v4069 = vmul.f32 %v4049, 0.5
        %v4070 = vmul.f32 %v4052, 0.5
        %v4071 = vmul.f32 %v4055, 0.5
        %v4072 = vfloor.f32 %v4056
        %v4073 = vfloor.f32 %v4057
        %v4074 = vfloor.f32 %v4058
        %v4075 = vfloor.f32 %v4059
        %v4076 = vfloor.f32 %v4060
        %v4077 = vfloor.f32 %v4061
        %v4078 = vfloor.f32 %v4062
        %v4079 = vfloor.f32 %v4063
        %v4080 = vfloor.f32 %v4064
        %v4081 = vfloor.f32 %v4065
        %v4082 = vfloor.f32 %v4066
        %v4083 = vfloor.f32 %v4067
        %v4084 = vfloor.f32 %v4068
        %v4085 = vfloor.f32 %v4069
        %v4086 = vfloor.f32 %v4070
        %v4087 = vfloor.f32 %v4071
        %v4088 = vmul.f32 %v4072, 2.0
        %v4089 = vmul.f32 %v4073, 2.0
        %v4090 = vmul.f32 %v4074, 2.0
        %v4091 = vmul.f32 %v4075, 2.0
        %v4092 = vmul.f32 %v4076, 2.0
        %v4093 = vmul.f32 %v4077, 2.0
        %v4094 = vmul.f32 %v4078, 2.0
        %v4095 = vmul.f32 %v4079, 2.0
        %v4096 = vmul.f32 %v4080, 2.0
        %v4097 = vmul.f32 %v4081, 2.0
        %v4098 = vmul.f32 %v4082, 2.0
        %v4099 = vmul.f32 %v4083, 2.0
        %v4100 = vmul.f32 %v4084, 2.0
        %v4101 = vmul.f32 %v4085, 2.0
        %v4102 = vmul.f32 %v4086, 2.0
        %v4103 = vmul.f32 %v4087, 2.0
        %v4104 = vsub.f32 %v4010, %v4088
        %v4105 = vsub.f32 %v4013, %v4089
        %v4106 = vsub.f32 %v4016, %v4090
        %v4107 = vsub.f32 %v4019, %v4091
        %v4108 = vsub.f32 %v4022, %v4092
        %v4109 = vsub.f32 %v4025, %v4093
        %v4110 = vsub.f32 %v4028, %v4094
        %v4111 = vsub.f32 %v4031, %v4095
        %v4112 = vsub.f32 %v4034, %v4096
        %v4113 = vsub.f32 %v4037, %v4097
        %v4114 = vsub.f32 %v4040, %v4098
        %v4115 = vsub.f32 %v4043, %v4099
        %v4116 = vsub.f32 %v4046, %v4100
        %v4117 = vsub.f32 %v4049, %v4101
        %v4118 = vsub.f32 %v4052, %v4102
        %v4119 = vsub.f32 %v4055, %v4103
        %v4136 = vlaneseq
        %v4137 = vshrl.u32 %v4136, 7
        %v4138 = vsub.s32 %v695, %v4137
        %v4139 = vrot.slane %v4104, %v4138
        %v4140 = vlaneseq
        %v4141 = vshrl.u32 %v4140, 7
        %v4142 = vsub.s32 %v700, %v4141
        %v4143 = vrot.slane %v4105, %v4142
        %v4144 = vsel %vm705, %v4143, %v4139
        %v4145 = vlaneseq
        %v4146 = vshrl.u32 %v4145, 7
        %v4147 = vsub.s32 %v695, %v4146
        %v4148 = vrot.slane %v4106, %v4147
        %v4149 = vlaneseq
        %v4150 = vshrl.u32 %v4149, 7
        %v4151 = vsub.s32 %v700, %v4150
        %v4152 = vrot.slane %v4107, %v4151
        %v4153 = vsel %vm705, %v4152, %v4148
        %v4154 = vlaneseq
        %v4155 = vshrl.u32 %v4154, 7
        %v4156 = vsub.s32 %v695, %v4155
        %v4157 = vrot.slane %v4108, %v4156
        %v4158 = vlaneseq
        %v4159 = vshrl.u32 %v4158, 7
        %v4160 = vsub.s32 %v700, %v4159
        %v4161 = vrot.slane %v4109, %v4160
        %v4162 = vsel %vm705, %v4161, %v4157
        %v4163 = vlaneseq
        %v4164 = vshrl.u32 %v4163, 7
        %v4165 = vsub.s32 %v695, %v4164
        %v4166 = vrot.slane %v4110, %v4165
        %v4167 = vlaneseq
        %v4168 = vshrl.u32 %v4167, 7
        %v4169 = vsub.s32 %v700, %v4168
        %v4170 = vrot.slane %v4111, %v4169
        %v4171 = vsel %vm705, %v4170, %v4166
        %v4172 = vlaneseq
        %v4173 = vshrl.u32 %v4172, 7
        %v4174 = vsub.s32 %v695, %v4173
        %v4175 = vrot.slane %v4112, %v4174
        %v4176 = vlaneseq
        %v4177 = vshrl.u32 %v4176, 7
        %v4178 = vsub.s32 %v700, %v4177
        %v4179 = vrot.slane %v4113, %v4178
        %v4180 = vsel %vm705, %v4179, %v4175
        %v4181 = vlaneseq
        %v4182 = vshrl.u32 %v4181, 7
        %v4183 = vsub.s32 %v695, %v4182
        %v4184 = vrot.slane %v4114, %v4183
        %v4185 = vlaneseq
        %v4186 = vshrl.u32 %v4185, 7
        %v4187 = vsub.s32 %v700, %v4186
        %v4188 = vrot.slane %v4115, %v4187
        %v4189 = vsel %vm705, %v4188, %v4184
        %v4190 = vlaneseq
        %v4191 = vshrl.u32 %v4190, 7
        %v4192 = vsub.s32 %v695, %v4191
        %v4193 = vrot.slane %v4116, %v4192
        %v4194 = vlaneseq
        %v4195 = vshrl.u32 %v4194, 7
        %v4196 = vsub.s32 %v700, %v4195
        %v4197 = vrot.slane %v4117, %v4196
        %v4198 = vsel %vm705, %v4197, %v4193
        %v4199 = vlaneseq
        %v4200 = vshrl.u32 %v4199, 7
        %v4201 = vsub.s32 %v695, %v4200
        %v4202 = vrot.slane %v4118, %v4201
        %v4203 = vlaneseq
        %v4204 = vshrl.u32 %v4203, 7
        %v4205 = vsub.s32 %v700, %v4204
        %v4206 = vrot.slane %v4119, %v4205
        %v4207 = vsel %vm705, %v4206, %v4202
        %v4208 = vsel %vm854, %v4153, %v4144
        %v4209 = vsel %vm855, %v4162, %v4208
        %v4210 = vsel %vm857, %v4171, %v4209
        %v4211 = vsel %vm859, %v4180, %v4210
        %v4212 = vsel %vm861, %v4189, %v4211
        %v4213 = vsel %vm863, %v4198, %v4212
        %v4214 = vsel %vm865, %v4207, %v4213
        %v4216 = vsel %vm1141, %v4214, 0.0
        %4217 = vadd.xlane.f32.xlu0 %v4216
        %v4218 = vpop.xlane.xlu0 %4217
        %vm4219 = vcmp.eq.f32.partialorder %v4218, 0.0
        %v4220 = vsel %vm4219, 1, 0
        %v4221 = vcvt.s32.f32 %v4220
        %v4222 = vmul.f32 %v3256, %v3941
        %v4223 = vmul.f32 %v3257, %v3941
        %v4224 = vmul.f32 %v3258, %v3941
        %v4225 = vmul.f32 %v3259, %v3941
        %v4226 = vmul.f32 %v3260, %v3947
        %v4227 = vmul.f32 %v3261, %v3947
        %v4228 = vmul.f32 %v3262, %v3947
        %v4229 = vmul.f32 %v3263, %v3947
        %v4230 = vmul.f32 %v3264, %v3953
        %v4231 = vmul.f32 %v3265, %v3953
        %v4232 = vmul.f32 %v3266, %v3953
        %v4233 = vmul.f32 %v3267, %v3953
        %v4234 = vmul.f32 %v3268, %v3959
        %v4235 = vmul.f32 %v3269, %v3959
        %v4236 = vmul.f32 %v3270, %v3959
        %v4237 = vmul.f32 %v3271, %v3959
        %v4238 = vmul.f32 %v3272, %v3965
        %v4239 = vmul.f32 %v3273, %v3965
        %v4240 = vmul.f32 %v3274, %v3965
        %v4241 = vmul.f32 %v3275, %v3965
        %v4242 = vmul.f32 %v3276, %v3971
        %v4243 = vmul.f32 %v3277, %v3971
        %v4244 = vmul.f32 %v3278, %v3971
        %v4245 = vmul.f32 %v3279, %v3971
        %v4246 = vmul.f32 %v3280, %v3977
        %v4247 = vmul.f32 %v3281, %v3977
        %v4248 = vmul.f32 %v3282, %v3977
        %v4249 = vmul.f32 %v3283, %v3977
        %v4250 = vmul.f32 %v3284, %v3983
        %v4251 = vmul.f32 %v3285, %v3983
        %v4252 = vmul.f32 %v3286, %v3983
        %v4253 = vmul.f32 %v3287, %v3983
        %v4254 = vsel %vm469, %v4222, 0.0
        %4255 = vadd.xlane.f32.xlu0 %v4254
        %v4256 = vpop.xlane.xlu0 %4255
        %v4257 = vsel %vm469, %v4223, 0.0
        %4258 = vadd.xlane.f32.xlu0 %v4257
        %v4259 = vpop.xlane.xlu0 %4258
        %v4260 = vsel %vm469, %v4224, 0.0
        %4261 = vadd.xlane.f32.xlu0 %v4260
        %v4262 = vpop.xlane.xlu0 %4261
        %v4263 = vsel %vm469, %v4225, 0.0
        %4264 = vadd.xlane.f32.xlu0 %v4263
        %v4265 = vpop.xlane.xlu0 %4264
        %v4266 = vsel %vm469, %v4226, 0.0
        %4267 = vadd.xlane.f32.xlu0 %v4266
        %v4268 = vpop.xlane.xlu0 %4267
        %v4269 = vsel %vm469, %v4227, 0.0
        %4270 = vadd.xlane.f32.xlu0 %v4269
        %v4271 = vpop.xlane.xlu0 %4270
        %v4272 = vsel %vm469, %v4228, 0.0
        %4273 = vadd.xlane.f32.xlu0 %v4272
        %v4274 = vpop.xlane.xlu0 %4273
        %v4275 = vsel %vm469, %v4229, 0.0
        %4276 = vadd.xlane.f32.xlu0 %v4275
        %v4277 = vpop.xlane.xlu0 %4276
        %v4278 = vsel %vm469, %v4230, 0.0
        %4279 = vadd.xlane.f32.xlu0 %v4278
        %v4280 = vpop.xlane.xlu0 %4279
        %v4281 = vsel %vm469, %v4231, 0.0
        %4282 = vadd.xlane.f32.xlu0 %v4281
        %v4283 = vpop.xlane.xlu0 %4282
        %v4284 = vsel %vm469, %v4232, 0.0
        %4285 = vadd.xlane.f32.xlu0 %v4284
        %v4286 = vpop.xlane.xlu0 %4285
        %v4287 = vsel %vm469, %v4233, 0.0
        %4288 = vadd.xlane.f32.xlu0 %v4287
        %v4289 = vpop.xlane.xlu0 %4288
        %v4290 = vsel %vm469, %v4234, 0.0
        %4291 = vadd.xlane.f32.xlu0 %v4290
        %v4292 = vpop.xlane.xlu0 %4291
        %v4293 = vsel %vm469, %v4235, 0.0
        %4294 = vadd.xlane.f32.xlu0 %v4293
        %v4295 = vpop.xlane.xlu0 %4294
        %v4296 = vsel %vm469, %v4236, 0.0
        %4297 = vadd.xlane.f32.xlu0 %v4296
        %v4298 = vpop.xlane.xlu0 %4297
        %v4299 = vsel %vm469, %v4237, 0.0
        %4300 = vadd.xlane.f32.xlu0 %v4299
        %v4301 = vpop.xlane.xlu0 %4300
        %v4302 = vsel %vm469, %v4238, 0.0
        %4303 = vadd.xlane.f32.xlu0 %v4302
        %v4304 = vpop.xlane.xlu0 %4303
        %v4305 = vsel %vm469, %v4239, 0.0
        %4306 = vadd.xlane.f32.xlu0 %v4305
        %v4307 = vpop.xlane.xlu0 %4306
        %v4308 = vsel %vm469, %v4240, 0.0
        %4309 = vadd.xlane.f32.xlu0 %v4308
        %v4310 = vpop.xlane.xlu0 %4309
        %v4311 = vsel %vm469, %v4241, 0.0
        %4312 = vadd.xlane.f32.xlu0 %v4311
        %v4313 = vpop.xlane.xlu0 %4312
        %v4314 = vsel %vm469, %v4242, 0.0
        %4315 = vadd.xlane.f32.xlu0 %v4314
        %v4316 = vpop.xlane.xlu0 %4315
        %v4317 = vsel %vm469, %v4243, 0.0
        %4318 = vadd.xlane.f32.xlu0 %v4317
        %v4319 = vpop.xlane.xlu0 %4318
        %v4320 = vsel %vm469, %v4244, 0.0
        %4321 = vadd.xlane.f32.xlu0 %v4320
        %v4322 = vpop.xlane.xlu0 %4321
        %v4323 = vsel %vm469, %v4245, 0.0
        %4324 = vadd.xlane.f32.xlu0 %v4323
        %v4325 = vpop.xlane.xlu0 %4324
        %v4326 = vsel %vm469, %v4246, 0.0
        %4327 = vadd.xlane.f32.xlu0 %v4326
        %v4328 = vpop.xlane.xlu0 %4327
        %v4329 = vsel %vm469, %v4247, 0.0
        %4330 = vadd.xlane.f32.xlu0 %v4329
        %v4331 = vpop.xlane.xlu0 %4330
        %v4332 = vsel %vm469, %v4248, 0.0
        %4333 = vadd.xlane.f32.xlu0 %v4332
        %v4334 = vpop.xlane.xlu0 %4333
        %v4335 = vsel %vm469, %v4249, 0.0
        %4336 = vadd.xlane.f32.xlu0 %v4335
        %v4337 = vpop.xlane.xlu0 %4336
        %v4338 = vsel %vm469, %v4250, 0.0
        %4339 = vadd.xlane.f32.xlu0 %v4338
        %v4340 = vpop.xlane.xlu0 %4339
        %v4341 = vsel %vm469, %v4251, 0.0
        %4342 = vadd.xlane.f32.xlu0 %v4341
        %v4343 = vpop.xlane.xlu0 %4342
        %v4344 = vsel %vm469, %v4252, 0.0
        %4345 = vadd.xlane.f32.xlu0 %v4344
        %v4346 = vpop.xlane.xlu0 %4345
        %v4347 = vsel %vm469, %v4253, 0.0
        %4348 = vadd.xlane.f32.xlu0 %v4347
        %v4349 = vpop.xlane.xlu0 %4348
        %v4350 = vsel %vm3221, 1, 0
        %vm4351 = vcmp.eq.s32.totalorder %v4350, 1
        %v4352 = vsel %vm4351, %v3181, %v4256
        %v4353 = vsel %vm4351, %v3182, %v4259
        %v4354 = vsel %vm4351, %v3183, %v4262
        %v4355 = vsel %vm4351, %v3184, %v4265
        %v4356 = vsel %vm4351, %v3185, %v4268
        %v4357 = vsel %vm4351, %v3186, %v4271
        %v4358 = vsel %vm4351, %v3187, %v4274
        %v4359 = vsel %vm4351, %v3188, %v4277
        %v4360 = vsel %vm4351, %v3189, %v4280
        %v4361 = vsel %vm4351, %v3190, %v4283
        %v4362 = vsel %vm4351, %v3191, %v4286
        %v4363 = vsel %vm4351, %v3192, %v4289
        %v4364 = vsel %vm4351, %v3193, %v4292
        %v4365 = vsel %vm4351, %v3194, %v4295
        %v4366 = vsel %vm4351, %v3195, %v4298
        %v4367 = vsel %vm4351, %v3196, %v4301
        %v4368 = vsel %vm4351, %v3197, %v4304
        %v4369 = vsel %vm4351, %v3198, %v4307
        %v4370 = vsel %vm4351, %v3199, %v4310
        %v4371 = vsel %vm4351, %v3200, %v4313
        %v4372 = vsel %vm4351, %v3201, %v4316
        %v4373 = vsel %vm4351, %v3202, %v4319
        %v4374 = vsel %vm4351, %v3203, %v4322
        %v4375 = vsel %vm4351, %v3204, %v4325
        %v4376 = vsel %vm4351, %v3205, %v4328
        %v4377 = vsel %vm4351, %v3206, %v4331
        %v4378 = vsel %vm4351, %v3207, %v4334
        %v4379 = vsel %vm4351, %v3208, %v4337
        %v4380 = vsel %vm4351, %v3209, %v4340
        %v4381 = vsel %vm4351, %v3210, %v4343
        %v4382 = vsel %vm4351, %v3211, %v4346
        %v4383 = vsel %vm4351, %v3212, %v4349
        %v4384 = vsel %vm4351, %v3213, %v4221
        %v4386 = vlaneseq
        %v4387 = vshrl.u32 %v4386, 7
        %v4388 = vsub.s32 0, %v4387
        %v4389 = vrot.slane %v4384, %v4388
        %v4390 = vlaneseq
        %v4391 = vshrl.u32 %v4390, 7
        %v4392 = vsub.s32 1, %v4391
        %v4393 = vrot.slane %v4384, %v4392
        %v4394 = vlaneseq
        %v4395 = vshrl.u32 %v4394, 7
        %v4396 = vsub.s32 2, %v4395
        %v4397 = vrot.slane %v4384, %v4396
        %v4398 = vlaneseq
        %v4399 = vshrl.u32 %v4398, 7
        %v4400 = vsub.s32 3, %v4399
        %v4401 = vrot.slane %v4384, %v4400
        %v4402 = vlaneseq
        %v4403 = vshrl.u32 %v4402, 7
        %v4404 = vsub.s32 4, %v4403
        %v4405 = vrot.slane %v4384, %v4404
        %v4406 = vlaneseq
        %v4407 = vshrl.u32 %v4406, 7
        %v4408 = vsub.s32 5, %v4407
        %v4409 = vrot.slane %v4384, %v4408
        %v4410 = vlaneseq
        %v4411 = vshrl.u32 %v4410, 7
        %v4412 = vsub.s32 6, %v4411
        %v4413 = vrot.slane %v4384, %v4412
        %v4414 = vlaneseq
        %v4415 = vshrl.u32 %v4414, 7
        %v4416 = vsub.s32 7, %v4415
        %v4417 = vrot.slane %v4384, %v4416
        %v4426 = vmul.f32 %v4352, %v4389
        %v4427 = vmul.f32 %v4353, %v4389
        %v4428 = vmul.f32 %v4354, %v4389
        %v4429 = vmul.f32 %v4355, %v4389
        %v4430 = vmul.f32 %v4356, %v4393
        %v4431 = vmul.f32 %v4357, %v4393
        %v4432 = vmul.f32 %v4358, %v4393
        %v4433 = vmul.f32 %v4359, %v4393
        %v4434 = vmul.f32 %v4360, %v4397
        %v4435 = vmul.f32 %v4361, %v4397
        %v4436 = vmul.f32 %v4362, %v4397
        %v4437 = vmul.f32 %v4363, %v4397
        %v4438 = vmul.f32 %v4364, %v4401
        %v4439 = vmul.f32 %v4365, %v4401
        %v4440 = vmul.f32 %v4366, %v4401
        %v4441 = vmul.f32 %v4367, %v4401
        %v4442 = vmul.f32 %v4368, %v4405
        %v4443 = vmul.f32 %v4369, %v4405
        %v4444 = vmul.f32 %v4370, %v4405
        %v4445 = vmul.f32 %v4371, %v4405
        %v4446 = vmul.f32 %v4372, %v4409
        %v4447 = vmul.f32 %v4373, %v4409
        %v4448 = vmul.f32 %v4374, %v4409
        %v4449 = vmul.f32 %v4375, %v4409
        %v4450 = vmul.f32 %v4376, %v4413
        %v4451 = vmul.f32 %v4377, %v4413
        %v4452 = vmul.f32 %v4378, %v4413
        %v4453 = vmul.f32 %v4379, %v4413
        %v4454 = vmul.f32 %v4380, %v4417
        %v4455 = vmul.f32 %v4381, %v4417
        %v4456 = vmul.f32 %v4382, %v4417
        %v4457 = vmul.f32 %v4383, %v4417
        %4490 = vset.pattern.permute.xlu0 0
        %4491 = vperm.xlu0 %4490, %v4426
        %v4492 = vpop.permute.xlu0 %4491
        %4493 = vset.pattern.permute.xlu0 0
        %4494 = vperm.xlu0 %4493, %v4427
        %v4495 = vpop.permute.xlu0 %4494
        %4496 = vset.pattern.permute.xlu0 0
        %4497 = vperm.xlu0 %4496, %v4428
        %v4498 = vpop.permute.xlu0 %4497
        %4499 = vset.pattern.permute.xlu0 0
        %4500 = vperm.xlu0 %4499, %v4429
        %v4501 = vpop.permute.xlu0 %4500
        %4502 = vset.pattern.permute.xlu0 0
        %4503 = vperm.xlu0 %4502, %v4430
        %v4504 = vpop.permute.xlu0 %4503
        %4505 = vset.pattern.permute.xlu0 0
        %4506 = vperm.xlu0 %4505, %v4431
        %v4507 = vpop.permute.xlu0 %4506
        %4508 = vset.pattern.permute.xlu0 0
        %4509 = vperm.xlu0 %4508, %v4432
        %v4510 = vpop.permute.xlu0 %4509
        %4511 = vset.pattern.permute.xlu0 0
        %4512 = vperm.xlu0 %4511, %v4433
        %v4513 = vpop.permute.xlu0 %4512
        %4514 = vset.pattern.permute.xlu0 0
        %4515 = vperm.xlu0 %4514, %v4434
        %v4516 = vpop.permute.xlu0 %4515
        %4517 = vset.pattern.permute.xlu0 0
        %4518 = vperm.xlu0 %4517, %v4435
        %v4519 = vpop.permute.xlu0 %4518
        %4520 = vset.pattern.permute.xlu0 0
        %4521 = vperm.xlu0 %4520, %v4436
        %v4522 = vpop.permute.xlu0 %4521
        %4523 = vset.pattern.permute.xlu0 0
        %4524 = vperm.xlu0 %4523, %v4437
        %v4525 = vpop.permute.xlu0 %4524
        %4526 = vset.pattern.permute.xlu0 0
        %4527 = vperm.xlu0 %4526, %v4438
        %v4528 = vpop.permute.xlu0 %4527
        %4529 = vset.pattern.permute.xlu0 0
        %4530 = vperm.xlu0 %4529, %v4439
        %v4531 = vpop.permute.xlu0 %4530
        %4532 = vset.pattern.permute.xlu0 0
        %4533 = vperm.xlu0 %4532, %v4440
        %v4534 = vpop.permute.xlu0 %4533
        %4535 = vset.pattern.permute.xlu0 0
        %4536 = vperm.xlu0 %4535, %v4441
        %v4537 = vpop.permute.xlu0 %4536
        %4538 = vset.pattern.permute.xlu0 0
        %4539 = vperm.xlu0 %4538, %v4442
        %v4540 = vpop.permute.xlu0 %4539
        %4541 = vset.pattern.permute.xlu0 0
        %4542 = vperm.xlu0 %4541, %v4443
        %v4543 = vpop.permute.xlu0 %4542
        %4544 = vset.pattern.permute.xlu0 0
        %4545 = vperm.xlu0 %4544, %v4444
        %v4546 = vpop.permute.xlu0 %4545
        %4547 = vset.pattern.permute.xlu0 0
        %4548 = vperm.xlu0 %4547, %v4445
        %v4549 = vpop.permute.xlu0 %4548
        %4550 = vset.pattern.permute.xlu0 0
        %4551 = vperm.xlu0 %4550, %v4446
        %v4552 = vpop.permute.xlu0 %4551
        %4553 = vset.pattern.permute.xlu0 0
        %4554 = vperm.xlu0 %4553, %v4447
        %v4555 = vpop.permute.xlu0 %4554
        %4556 = vset.pattern.permute.xlu0 0
        %4557 = vperm.xlu0 %4556, %v4448
        %v4558 = vpop.permute.xlu0 %4557
        %4559 = vset.pattern.permute.xlu0 0
        %4560 = vperm.xlu0 %4559, %v4449
        %v4561 = vpop.permute.xlu0 %4560
        %4562 = vset.pattern.permute.xlu0 0
        %4563 = vperm.xlu0 %4562, %v4450
        %v4564 = vpop.permute.xlu0 %4563
        %4565 = vset.pattern.permute.xlu0 0
        %4566 = vperm.xlu0 %4565, %v4451
        %v4567 = vpop.permute.xlu0 %4566
        %4568 = vset.pattern.permute.xlu0 0
        %4569 = vperm.xlu0 %4568, %v4452
        %v4570 = vpop.permute.xlu0 %4569
        %4571 = vset.pattern.permute.xlu0 0
        %4572 = vperm.xlu0 %4571, %v4453
        %v4573 = vpop.permute.xlu0 %4572
        %4574 = vset.pattern.permute.xlu0 0
        %4575 = vperm.xlu0 %4574, %v4454
        %v4576 = vpop.permute.xlu0 %4575
        %4577 = vset.pattern.permute.xlu0 0
        %4578 = vperm.xlu0 %4577, %v4455
        %v4579 = vpop.permute.xlu0 %4578
        %4580 = vset.pattern.permute.xlu0 0
        %4581 = vperm.xlu0 %4580, %v4456
        %v4582 = vpop.permute.xlu0 %4581
        %4583 = vset.pattern.permute.xlu0 0
        %4584 = vperm.xlu0 %4583, %v4457
        %v4585 = vpop.permute.xlu0 %4584
        %v4586 = vlaneseq
        %v4587 = vshrl.u32 %v4586, 7
        %v4588 = vsub.s32 %v695, %v4587
        %v4589 = vrot.slane %v4492, %v4588
        %v4590 = vlaneseq
        %v4591 = vshrl.u32 %v4590, 7
        %v4592 = vsub.s32 %v700, %v4591
        %v4593 = vrot.slane %v4495, %v4592
        %v4594 = vsel %vm705, %v4593, %v4589
        %v4595 = vlaneseq
        %v4596 = vshrl.u32 %v4595, 7
        %v4597 = vsub.s32 %v707, %v4596
        %v4598 = vrot.slane %v4498, %v4597
        %v4599 = vsel %vm712, %v4598, %v4594
        %v4600 = vlaneseq
        %v4601 = vshrl.u32 %v4600, 7
        %v4602 = vsub.s32 %v714, %v4601
        %v4603 = vrot.slane %v4501, %v4602
        %v4604 = vsel %vm719, %v4603, %v4599
        %v4605 = vlaneseq
        %v4606 = vshrl.u32 %v4605, 7
        %v4607 = vsub.s32 %v695, %v4606
        %v4608 = vrot.slane %v4504, %v4607
        %v4609 = vlaneseq
        %v4610 = vshrl.u32 %v4609, 7
        %v4611 = vsub.s32 %v700, %v4610
        %v4612 = vrot.slane %v4507, %v4611
        %v4613 = vsel %vm705, %v4612, %v4608
        %v4614 = vlaneseq
        %v4615 = vshrl.u32 %v4614, 7
        %v4616 = vsub.s32 %v707, %v4615
        %v4617 = vrot.slane %v4510, %v4616
        %v4618 = vsel %vm712, %v4617, %v4613
        %v4619 = vlaneseq
        %v4620 = vshrl.u32 %v4619, 7
        %v4621 = vsub.s32 %v714, %v4620
        %v4622 = vrot.slane %v4513, %v4621
        %v4623 = vsel %vm719, %v4622, %v4618
        %v4624 = vlaneseq
        %v4625 = vshrl.u32 %v4624, 7
        %v4626 = vsub.s32 %v695, %v4625
        %v4627 = vrot.slane %v4516, %v4626
        %v4628 = vlaneseq
        %v4629 = vshrl.u32 %v4628, 7
        %v4630 = vsub.s32 %v700, %v4629
        %v4631 = vrot.slane %v4519, %v4630
        %v4632 = vsel %vm705, %v4631, %v4627
        %v4633 = vlaneseq
        %v4634 = vshrl.u32 %v4633, 7
        %v4635 = vsub.s32 %v707, %v4634
        %v4636 = vrot.slane %v4522, %v4635
        %v4637 = vsel %vm712, %v4636, %v4632
        %v4638 = vlaneseq
        %v4639 = vshrl.u32 %v4638, 7
        %v4640 = vsub.s32 %v714, %v4639
        %v4641 = vrot.slane %v4525, %v4640
        %v4642 = vsel %vm719, %v4641, %v4637
        %v4643 = vlaneseq
        %v4644 = vshrl.u32 %v4643, 7
        %v4645 = vsub.s32 %v695, %v4644
        %v4646 = vrot.slane %v4528, %v4645
        %v4647 = vlaneseq
        %v4648 = vshrl.u32 %v4647, 7
        %v4649 = vsub.s32 %v700, %v4648
        %v4650 = vrot.slane %v4531, %v4649
        %v4651 = vsel %vm705, %v4650, %v4646
        %v4652 = vlaneseq
        %v4653 = vshrl.u32 %v4652, 7
        %v4654 = vsub.s32 %v707, %v4653
        %v4655 = vrot.slane %v4534, %v4654
        %v4656 = vsel %vm712, %v4655, %v4651
        %v4657 = vlaneseq
        %v4658 = vshrl.u32 %v4657, 7
        %v4659 = vsub.s32 %v714, %v4658
        %v4660 = vrot.slane %v4537, %v4659
        %v4661 = vsel %vm719, %v4660, %v4656
        %v4662 = vlaneseq
        %v4663 = vshrl.u32 %v4662, 7
        %v4664 = vsub.s32 %v695, %v4663
        %v4665 = vrot.slane %v4540, %v4664
        %v4666 = vlaneseq
        %v4667 = vshrl.u32 %v4666, 7
        %v4668 = vsub.s32 %v700, %v4667
        %v4669 = vrot.slane %v4543, %v4668
        %v4670 = vsel %vm705, %v4669, %v4665
        %v4671 = vlaneseq
        %v4672 = vshrl.u32 %v4671, 7
        %v4673 = vsub.s32 %v707, %v4672
        %v4674 = vrot.slane %v4546, %v4673
        %v4675 = vsel %vm712, %v4674, %v4670
        %v4676 = vlaneseq
        %v4677 = vshrl.u32 %v4676, 7
        %v4678 = vsub.s32 %v714, %v4677
        %v4679 = vrot.slane %v4549, %v4678
        %v4680 = vsel %vm719, %v4679, %v4675
        %v4681 = vlaneseq
        %v4682 = vshrl.u32 %v4681, 7
        %v4683 = vsub.s32 %v695, %v4682
        %v4684 = vrot.slane %v4552, %v4683
        %v4685 = vlaneseq
        %v4686 = vshrl.u32 %v4685, 7
        %v4687 = vsub.s32 %v700, %v4686
        %v4688 = vrot.slane %v4555, %v4687
        %v4689 = vsel %vm705, %v4688, %v4684
        %v4690 = vlaneseq
        %v4691 = vshrl.u32 %v4690, 7
        %v4692 = vsub.s32 %v707, %v4691
        %v4693 = vrot.slane %v4558, %v4692
        %v4694 = vsel %vm712, %v4693, %v4689
        %v4695 = vlaneseq
        %v4696 = vshrl.u32 %v4695, 7
        %v4697 = vsub.s32 %v714, %v4696
        %v4698 = vrot.slane %v4561, %v4697
        %v4699 = vsel %vm719, %v4698, %v4694
        %v4700 = vlaneseq
        %v4701 = vshrl.u32 %v4700, 7
        %v4702 = vsub.s32 %v695, %v4701
        %v4703 = vrot.slane %v4564, %v4702
        %v4704 = vlaneseq
        %v4705 = vshrl.u32 %v4704, 7
        %v4706 = vsub.s32 %v700, %v4705
        %v4707 = vrot.slane %v4567, %v4706
        %v4708 = vsel %vm705, %v4707, %v4703
        %v4709 = vlaneseq
        %v4710 = vshrl.u32 %v4709, 7
        %v4711 = vsub.s32 %v707, %v4710
        %v4712 = vrot.slane %v4570, %v4711
        %v4713 = vsel %vm712, %v4712, %v4708
        %v4714 = vlaneseq
        %v4715 = vshrl.u32 %v4714, 7
        %v4716 = vsub.s32 %v714, %v4715
        %v4717 = vrot.slane %v4573, %v4716
        %v4718 = vsel %vm719, %v4717, %v4713
        %v4719 = vlaneseq
        %v4720 = vshrl.u32 %v4719, 7
        %v4721 = vsub.s32 %v695, %v4720
        %v4722 = vrot.slane %v4576, %v4721
        %v4723 = vlaneseq
        %v4724 = vshrl.u32 %v4723, 7
        %v4725 = vsub.s32 %v700, %v4724
        %v4726 = vrot.slane %v4579, %v4725
        %v4727 = vsel %vm705, %v4726, %v4722
        %v4728 = vlaneseq
        %v4729 = vshrl.u32 %v4728, 7
        %v4730 = vsub.s32 %v707, %v4729
        %v4731 = vrot.slane %v4582, %v4730
        %v4732 = vsel %vm712, %v4731, %v4727
        %v4733 = vlaneseq
        %v4734 = vshrl.u32 %v4733, 7
        %v4735 = vsub.s32 %v714, %v4734
        %v4736 = vrot.slane %v4585, %v4735
        %v4737 = vsel %vm719, %v4736, %v4732
        %v4738 = vsel %vm854, %v4623, %v4604
        %v4739 = vsel %vm855, %v4642, %v4738
        %v4740 = vsel %vm857, %v4661, %v4739
        %v4741 = vsel %vm859, %v4680, %v4740
        %v4742 = vsel %vm861, %v4699, %v4741
        %v4743 = vsel %vm863, %v4718, %v4742
        %v4744 = vsel %vm865, %v4737, %v4743
        %vm4746 = vcmp.ne.f32.partialorder %v280, %v4744
        %v4747 = vsel %vm4746, 1, 0
        %v4748 = vcvt.s32.f32 %v4747
        %v4749 = vmul.f32 %v4748, %v277
        %v4750 = vsel %vm469, %v4749, 0.0
        %4751 = vadd.xlane.f32.xlu0 %v4750
        %v4752 = vpop.xlane.xlu0 %4751
        %v4753 = vld [vmem:[%s5] sm:$0xff]
        %vm4754 = vcmp.le.f32.partialorder %v4752, %v4753
        %v4755 = vsel %vm282, 1, 0
        %v4756 = vlaneseq
        %v4757 = vshrl.u32 %v4756, 7
        %v4758 = vsub.s32 0, %v4757
        %v4759 = vrot.slane %v4755, %v4758
        %vm4760 = vcmp.eq.s32.totalorder %v4759, 1
        %vm4761 = vmand %vm4754, %vm4760
        %v4762 = vsel %vm4761, %v4752, %v4753
        %v4763 = vld [vmem:[#allocation3] sm:$0xff]
        %v4764 = vsel %vm4761, 1, 0
        %4765 = vset.pattern.permute.xlu0 0
        %4766 = vperm.xlu0 %4765, %v4764
        %v4767 = vpop.permute.xlu0 %4766
        %vm4768 = vcmp.eq.s32.totalorder %v4767, 1
        %v4769 = vsel %vm4768, %v4744, %v4763
        %vm4770 = vcmask 7168
        %4771 = vst.msk [vmem:[%s5] sm:$0xff] %vm4770, %v4762
        %4772 = vst.msk [vmem:[#allocation3] sm:$0xff] %vm469, %v4769
        %vm4773 = vcmp.ne.f32.partialorder %v280, %v4769
        %v4774 = vsel %vm4773, 1, 0
        %v4775 = vcvt.s32.f32 %v4774
        %v4776 = vsel %vm469, %v4775, 0.0
        %4777 = vadd.xlane.f32.xlu0 %v4776
        %v4778 = vpop.xlane.xlu0 %4777
        %v4779 = vsub.f32 4.0, %v4778
        %v4780 = vmax.f32 %v4779, 0.0
        %vm4781 = vmxor %vm4773, 1
        %v4782 = vsel %vm4781, 1, 0
        %v4783 = vcvt.s32.f32 %v4782
        %v4784 = vmul.f32 %v274, %v4783
        %vm4785 = vcmp.eq.f32.partialorder %v4784, 0.0
        %v4786 = vand.u32 2147483647, %v4784
        %v4787 = vsel %vm4785, inf, %v4786
        %v4788 = vcvt.s32.f32 %v695
        %v4789 = vsel %vm469, %v4787, inf
        %4790 = vmin.xlane.f32.xlu0 %v4789
        %v4791 = vpop.xlane.xlu0 %4790
        %vm4792 = vcmp.ge.f32.partialorder %v4780, 0.0
        %v4793 = vsel %vm4792, %v4791, 0.0
        %v4794 = vadd.f32 %v4793, 0.0
        %vm4795 = vcmp.eq.f32.partialorder %v4787, %v4791
        %v4796 = vsel %vm4795, %v4788, 32.0
        %v4797 = vsel %vm469, %v4796, inf
        %4798 = vmin.xlane.f32.xlu0 %v4797
        %v4799 = vpop.xlane.xlu0 %4798
        %vm4800 = vcmp.eq.f32.partialorder %v4788, %v4799
        %v4801 = vsel %vm4800, inf, %v4787
        %v4802 = vsel %vm469, %v4801, inf
        %4803 = vmin.xlane.f32.xlu0 %v4802
        %v4804 = vpop.xlane.xlu0 %4803
        %vm4805 = vcmp.ge.f32.partialorder %v4780, 1.0
        %v4806 = vsel %vm4805, %v4804, 0.0
        %v4807 = vadd.f32 %v4794, %v4806
        %vm4808 = vcmp.eq.f32.partialorder %v4801, %v4804
        %v4809 = vsel %vm4808, %v4788, 32.0
        %v4810 = vsel %vm469, %v4809, inf
        %4811 = vmin.xlane.f32.xlu0 %v4810
        %v4812 = vpop.xlane.xlu0 %4811
        %vm4813 = vcmp.eq.f32.partialorder %v4788, %v4812
        %v4814 = vsel %vm4813, inf, %v4801
        %v4815 = vsel %vm469, %v4814, inf
        %4816 = vmin.xlane.f32.xlu0 %v4815
        %v4817 = vpop.xlane.xlu0 %4816
        %vm4818 = vcmp.ge.f32.partialorder %v4780, 2.0
        %v4819 = vsel %vm4818, %v4817, 0.0
        %v4820 = vadd.f32 %v4807, %v4819
        %vm4821 = vcmp.eq.f32.partialorder %v4814, %v4817
        %v4822 = vsel %vm4821, %v4788, 32.0
        %v4823 = vsel %vm469, %v4822, inf
        %4824 = vmin.xlane.f32.xlu0 %v4823
        %v4825 = vpop.xlane.xlu0 %4824
        %vm4826 = vcmp.eq.f32.partialorder %v4788, %v4825
        %v4827 = vsel %vm4826, inf, %v4814
        %v4828 = vsel %vm469, %v4827, inf
        %4829 = vmin.xlane.f32.xlu0 %v4828
        %v4830 = vpop.xlane.xlu0 %4829
        %vm4831 = vcmp.ge.f32.partialorder %v4780, 3.0
        %v4832 = vsel %vm4831, %v4830, 0.0
        %v4833 = vadd.f32 %v4820, %v4832
        %vm4834 = vcmp.eq.f32.partialorder %v4827, %v4830
        %v4835 = vsel %vm4834, %v4788, 32.0
        %v4836 = vsel %vm469, %v4835, inf
        %4837 = vmin.xlane.f32.xlu0 %v4836
        %v4838 = vpop.xlane.xlu0 %4837
        %vm4839 = vcmp.eq.f32.partialorder %v4788, %v4838
        %v4840 = vsel %vm4839, inf, %v4827
        %v4841 = vsel %vm469, %v4840, inf
        %4842 = vmin.xlane.f32.xlu0 %v4841
        %v4843 = vpop.xlane.xlu0 %4842
        %vm4844 = vcmp.ge.f32.partialorder %v4780, 4.0
        %v4845 = vsel %vm4844, %v4843, 0.0
        %v4846 = vadd.f32 %v4833, %v4845
        %v4847 = vrot.slane %v4780, 4
        %v4848 = vadd.f32 %v4780, %v4847
        %v4849 = vrot.slane %v4848, 2
        %v4850 = vadd.f32 %v4848, %v4849
        %v4851 = vrot.slane %v4850, 1
        %v4852 = vadd.f32 %v4850, %v4851
        %vm4853 = vcmp.eq.f32.partialorder %v4852, 0.0
        %v4854 = vsel %vm4853, 1, 0
        %vm4855 = vcmp.eq.s32.totalorder %v4854, 1
        %v4856 = vsel %vm4855, 0.0, %v4846
        %vm4857 = vcmp.le.f32.partialorder %v4762, %v4856
        %v4858 = vsel %vm4857, 1, 0
        %v4859 = vcvt.s32.f32 %v4858
        %v4860 = vld [vmem:[%s6] sm:$0xff]
        %v4861 = vsel %vm4760, %v4859, 0.0
        %v4862 = vadd.f32 %v4860, %v4861
        %4863 = vst.msk [vmem:[%s6] sm:$0xff] %vm4770, %v4862
        %v4864 = vsel %vm4770, %v4859, inf
        %v4865 = vrot.slane %v4864, 4
        %v4866 = vmin.f32 %v4864, %v4865
        %v4867 = vrot.slane %v4866, 2
        %v4868 = vmin.f32 %v4866, %v4867
        %v4869 = vrot.slane %v4868, 1
        %v4870 = vmin.f32 %v4868, %v4869
        %vm4871 = vcmp.ge.f32.partialorder %v4870, 1.0
        %v4872 = vld [vmem:[#allocation2] sm:$0x1]
        %v4873 = vsel %vm4871, 1.0, 0.0
        %v4874 = vmax.f32 %v4872, %v4873
        %vm4875 = vcmask 0
        %4876 = vst.msk [vmem:[#allocation2] sm:$0x1] %vm4875, %v4874
        // Predicated region
        $region41: #{mrrd_forward.1} parent=35 // pred_check
          %p4877 = pneg %p126
        $region42: #{mrrd_forward.1} parent=35 // pred_check_branch
          %4879 = sbr.rel (%p4877) target = $region44
        $region43: #{mrrd_forward.1} parent=35 // pred_region
          %s4881 = ssub.s32 128, 128
          %4882 = vsyncadd [#allocation4], %s4881
          %s4884 = sshll.u32 [#allocation3], 4
          %s4885 = int_to_ptr.vmem [resolvable:$true] %s4884
          %4887 = dma.vmem_to_hbm [thread:$0]  %s4885, 128, %s4, [#allocation4]
        $region44: #{mrrd_forward.1} parent=35 // pred_fallthru
          _
        // Predicated region
        $region45: #{mrrd_forward.1} parent=35 // pred_check
          %p4888 = pneg %p147
        $region46: #{mrrd_forward.1} parent=35 // pred_check_branch
          %4890 = sbr.rel (%p4888) target = $region48
        $region47: #{mrrd_forward.1} parent=35 // pred_region
          _
        $region48: #{mrrd_forward.1} parent=35 // pred_fallthru
          _
        // Predicated region
        $region49: #{mrrd_forward.1} parent=35 // pred_check
          %p4891 = pneg %p168
        $region50: #{mrrd_forward.1} parent=35 // pred_check_branch
          %4893 = sbr.rel (%p4891) target = $region52
        $region51: #{mrrd_forward.1} parent=35 // pred_region
          _
        $region52: #{mrrd_forward.1} parent=35 // pred_fallthru
          _
        // Predicated region
        $region53: #{mrrd_forward.1} parent=35 // pred_check
          %p4894 = pneg %p126
        $region54: #{mrrd_forward.1} parent=35 // pred_check_branch
          %4896 = sbr.rel (%p4894) target = $region56
        $region55: #{mrrd_forward.1} parent=35 // pred_region
          %4897 = dma.done [#allocation4], 128
        $region56: #{mrrd_forward.1} parent=35 // pred_fallthru
          _
        // Predicated region
        $region57: #{mrrd_forward.1} parent=35 // pred_check
          %p4898 = pneg %p147
        $region58: #{mrrd_forward.1} parent=35 // pred_check_branch
          %4900 = sbr.rel (%p4898) target = $region60
        $region59: #{mrrd_forward.1} parent=35 // pred_region
          _
        $region60: #{mrrd_forward.1} parent=35 // pred_fallthru
          _
        // Predicated region
        $region61: #{mrrd_forward.1} parent=35 // pred_check
          %p4901 = pneg %p168
        $region62: #{mrrd_forward.1} parent=35 // pred_check_branch
          %4903 = sbr.rel (%p4901) target = $region64
        $region63: #{mrrd_forward.1} parent=35 // pred_region
          _
        $region64: #{mrrd_forward.1} parent=35 // pred_fallthru
          _
      $region36: #{mrrd_forward.1} parent=5 // pred_fallthru
        _
      %p4904 = scmp.le.s32.totalorder 2, %s14
      // Predicated region
      $region65: #{mrrd_forward.1} parent=5 // pred_check
        %p4905 = pneg %p4904
      $region66: #{mrrd_forward.1} parent=5 // pred_check_branch
        %4907 = sbr.rel (%p4905) target = $region68
      $region67: #{mrrd_forward.1} parent=5 // pred_region
        %s4908 = ssub.s32 %s14, 2
      $region68: #{mrrd_forward.1} parent=5 // pred_fallthru
        _
    $region6: #{mrrd_forward.1} parent=1 // loop_footer
      %s18 = sadd.s32 1, %s14
    $region7: #{mrrd_forward.1} parent=1 // loop_footer_branch
      %13 = sbr.rel target = $region3
    $region8: #{mrrd_forward.1} parent=1 // loop_exit
      _
    %4909 = vsyncpa [#allocation4], 1
    %s4910 = scalar_lea.sflag [#allocation4], 1
    %4911 = vsyncpa %s4910, 1

</llo_original>
